<compile_context>
chip_gen: v5e
topology: v5e:2x2
jax: 0.10.0
libtpu: 0.0.40
codegen_flags: <defaults>
</compile_context>

<pallas_src>
import functools

import jax
import jax.numpy as jnp
from jax.experimental import pallas as pl
from jax.experimental.pallas import tpu as pltpu


# ----------------------------- model config --------------------------------

VOCAB = 50
HIDDEN = 32
NUM_HEADS = 4
HEAD_DIM = HIDDEN // NUM_HEADS
INTERMEDIATE = 64
NUM_LAYERS = 2
MAX_POS = 64
PAD_ID, CLS_ID, SEP_ID = 1, 0, 2   # roberta tokenizer convention
LN_EPS = 1e-5


# ----------------------------- fused Pallas kernel --------------------------


def _fused_roberta_kernel(
    emb_ref, mask2d_ref, sel_ref,
    emb_g_ref, emb_b_ref,
    wq_ref, bq_ref, wk_ref, bk_ref, wv_ref, bv_ref,
    wo_ref, bo_ref, ln1g_ref, ln1b_ref,
    wi_ref, bi_ref, wf_ref, bf_ref, ln2g_ref, ln2b_ref,
    topw_ref, topb_ref,
    out_ref,
    *, num_layers, num_heads, scale, eps):
    """Whole RoBERTa-encoder forward + CLS head in one kernel invocation."""
    f32 = jnp.float32

    def layernorm(x, g, b):
        mean = jnp.mean(x, axis=-1, keepdims=True)
        var = jnp.mean(jnp.square(x - mean), axis=-1, keepdims=True)
        return (x - mean) * jax.lax.rsqrt(var + eps) * g + b

    # embeddings -> LayerNorm (no residual)
    h = layernorm(emb_ref[...].astype(f32),
                  emb_g_ref[...].astype(f32),
                  emb_b_ref[...].astype(f32))

    # block-diagonal additive attention bias: 0 for valid in-batch keys,
    # -1e4 for cross-batch or padded keys (exp underflows to exactly 0).
    mask2d = mask2d_ref[...].astype(f32)                  # (B*S, B*S)

    for l in range(num_layers):
        # --- self attention (all batches at once; heads via weight slabs) ---
        attn = jnp.zeros(h.shape, f32)
        for hh in range(num_heads):
            idx = l * num_heads + hh
            qh = jnp.dot(h, wq_ref[idx].astype(f32),
                         preferred_element_type=f32) + bq_ref[idx].astype(f32)
            kh = jnp.dot(h, wk_ref[idx].astype(f32),
                         preferred_element_type=f32) + bk_ref[idx].astype(f32)
            vh = jnp.dot(h, wv_ref[idx].astype(f32),
                         preferred_element_type=f32) + bv_ref[idx].astype(f32)

            s = jnp.dot(qh, kh.T, preferred_element_type=f32) * scale + mask2d
            m = jnp.max(s, axis=-1, keepdims=True)
            p = jnp.exp(s - m)
            denom = jnp.sum(p, axis=-1, keepdims=True)
            p = p * pl.reciprocal(denom, approx=True)      # EUP, not VPU divide
            ctx = jnp.dot(p, vh, preferred_element_type=f32)          # (B*S, d)
            attn = attn + jnp.dot(ctx, wo_ref[idx].astype(f32),
                                  preferred_element_type=f32)         # (B*S, H)
        attn = attn + bo_ref[l].astype(f32)

        # --- add + LayerNorm (fused) ---
        h = layernorm(attn + h, ln1g_ref[l].astype(f32), ln1b_ref[l].astype(f32))

        # --- feed forward ---
        inter = jnp.dot(h, wi_ref[l].astype(f32),
                        preferred_element_type=f32) + bi_ref[l].astype(f32)
        # TODO(synk): HF roberta uses exact (erf) GELU; tanh approximation is
        # used here for guaranteed Mosaic lowering.
        inter = jax.nn.gelu(inter, approximate=True)
        ffn = jnp.dot(inter, wf_ref[l].astype(f32),
                      preferred_element_type=f32) + bf_ref[l].astype(f32)
        h = layernorm(ffn + h, ln2g_ref[l].astype(f32), ln2b_ref[l].astype(f32))

    # --- CLS selection (one-hot matmul) + top linear head ---
    cls = jnp.dot(sel_ref[...].astype(f32), h, preferred_element_type=f32)  # (B, H)
    out = jnp.dot(cls, topw_ref[...].astype(f32),
                  preferred_element_type=f32) + topb_ref[...].astype(f32)   # (B, 1)
    out_ref[...] = out.astype(out_ref.dtype)


def _full_spec(shape):
    nd = len(shape)
    return pl.BlockSpec(tuple(shape), lambda i, _nd=nd: (0,) * _nd)


# ----------------------------- parameters -----------------------------------


def init_params(key):
    def nrm(k, shape):
        return 0.02 * jax.random.normal(k, shape, dtype=jnp.float32)

    keys = iter(jax.random.split(key, 8 + NUM_LAYERS * 16))
    p = {
        "word_emb": nrm(next(keys), (VOCAB, HIDDEN)),
        "pos_emb": nrm(next(keys), (MAX_POS, HIDDEN)),
        "type_emb": nrm(next(keys), (1, HIDDEN)),
        "emb_ln_g": jnp.ones((1, HIDDEN), jnp.float32),
        "emb_ln_b": jnp.zeros((1, HIDDEN), jnp.float32),
        "top_w": nrm(next(keys), (HIDDEN, 1)),
        "top_b": jnp.zeros((1, 1), jnp.float32),
    }

    wq_h, bq_h, wk_h, bk_h, wv_h, bv_h, wo_h = [], [], [], [], [], [], []
    bo, ln1_g, ln1_b, wi, bi, wf, bf, ln2_g, ln2_b = [], [], [], [], [], [], [], [], []

    for _ in range(NUM_LAYERS):
        wq = nrm(next(keys), (HIDDEN, HIDDEN)); bq = jnp.zeros((HIDDEN,), jnp.float32)
        wk = nrm(next(keys), (HIDDEN, HIDDEN)); bk = jnp.zeros((HIDDEN,), jnp.float32)
        wv = nrm(next(keys), (HIDDEN, HIDDEN)); bv = jnp.zeros((HIDDEN,), jnp.float32)
        wo = nrm(next(keys), (HIDDEN, HIDDEN))

        # per-head weight slabs: wq/wk/wv -> (NH, H, D); wo -> (NH, D, H)
        wq_h.append(jnp.transpose(wq.reshape(HIDDEN, NUM_HEADS, HEAD_DIM), (1, 0, 2)))
        wk_h.append(jnp.transpose(wk.reshape(HIDDEN, NUM_HEADS, HEAD_DIM), (1, 0, 2)))
        wv_h.append(jnp.transpose(wv.reshape(HIDDEN, NUM_HEADS, HEAD_DIM), (1, 0, 2)))
        bq_h.append(bq.reshape(NUM_HEADS, 1, HEAD_DIM))
        bk_h.append(bk.reshape(NUM_HEADS, 1, HEAD_DIM))
        bv_h.append(bv.reshape(NUM_HEADS, 1, HEAD_DIM))
        wo_h.append(wo.reshape(NUM_HEADS, HEAD_DIM, HIDDEN))

        bo.append(jnp.zeros((1, HIDDEN), jnp.float32))
        ln1_g.append(jnp.ones((1, HIDDEN), jnp.float32))
        ln1_b.append(jnp.zeros((1, HIDDEN), jnp.float32))
        wi.append(nrm(next(keys), (HIDDEN, INTERMEDIATE)))
        bi.append(jnp.zeros((1, INTERMEDIATE), jnp.float32))
        wf.append(nrm(next(keys), (INTERMEDIATE, HIDDEN)))
        bf.append(jnp.zeros((1, HIDDEN), jnp.float32))
        ln2_g.append(jnp.ones((1, HIDDEN), jnp.float32))
        ln2_b.append(jnp.zeros((1, HIDDEN), jnp.float32))

    p.update({
        "wq_h": jnp.concatenate(wq_h, axis=0),   # (L*NH, H, D)
        "bq_h": jnp.concatenate(bq_h, axis=0),   # (L*NH, 1, D)
        "wk_h": jnp.concatenate(wk_h, axis=0),
        "bk_h": jnp.concatenate(bk_h, axis=0),
        "wv_h": jnp.concatenate(wv_h, axis=0),
        "bv_h": jnp.concatenate(bv_h, axis=0),
        "wo_h": jnp.concatenate(wo_h, axis=0),   # (L*NH, D, H)
        "bo": jnp.stack(bo, axis=0),             # (L, 1, H)
        "ln1_g": jnp.stack(ln1_g, axis=0),
        "ln1_b": jnp.stack(ln1_b, axis=0),
        "wi": jnp.stack(wi, axis=0),             # (L, H, I)
        "bi": jnp.stack(bi, axis=0),
        "wf": jnp.stack(wf, axis=0),             # (L, I, H)
        "bf": jnp.stack(bf, axis=0),
        "ln2_g": jnp.stack(ln2_g, axis=0),
        "ln2_b": jnp.stack(ln2_b, axis=0),
    })
    return p


# ----------------------------- forward ---------------------------------------


def roberta_forward(params, input_ids, attention_mask):
    """Equivalent of MyRobertaModel.forward: encoder -> take [:,0,:] -> Linear(H,1)."""
    B, S = input_ids.shape
    assert S + 2 <= MAX_POS, "position ids would exceed the position table"

    # roberta position ids: cumsum over non-pad tokens, offset by padding_idx (=1)
    is_tok = (input_ids != PAD_ID).astype(jnp.int32)
    position_ids = jnp.cumsum(is_tok, axis=1) * is_tok + PAD_ID

    # embedding gather stays in plain JAX (table lookup glue)
    emb = (params["word_emb"][input_ids]
           + params["pos_emb"][position_ids]
           + params["type_emb"][0][None, None, :])
    emb2d = emb.reshape(B * S, HIDDEN).astype(jnp.float32)

    # block-diagonal additive attention bias over flattened tokens:
    # 0 if (same batch AND key not padded) else -10000.
    tok_batch = jnp.repeat(jnp.arange(B), S)
    same_batch = tok_batch[:, None] == tok_batch[None, :]
    key_valid = attention_mask.reshape(B * S).astype(bool)
    mask2d = jnp.where(same_batch & key_valid[None, :], 0.0, -10000.0).astype(jnp.float32)

    # one-hot selector for the CLS row of each batch element
    sel = jax.nn.one_hot(jnp.arange(B) * S, B * S, dtype=jnp.float32)

    kernel = functools.partial(
        _fused_roberta_kernel,
        num_layers=NUM_LAYERS, num_heads=NUM_HEADS,
        scale=1.0 / (HEAD_DIM ** 0.5), eps=LN_EPS)

    inputs = [
        emb2d, mask2d, sel,
        params["emb_ln_g"], params["emb_ln_b"],
        params["wq_h"], params["bq_h"], params["wk_h"], params["bk_h"],
        params["wv_h"], params["bv_h"],
        params["wo_h"], params["bo"], params["ln1_g"], params["ln1_b"],
        params["wi"], params["bi"], params["wf"], params["bf"],
        params["ln2_g"], params["ln2_b"],
        params["top_w"], params["top_b"],
    ]

    return pl.pallas_call(
        kernel,
        out_shape=jax.ShapeDtypeStruct((B, 1), jnp.float32),
        grid=(1,),
        in_specs=[_full_spec(x.shape) for x in inputs],
        out_specs=pl.BlockSpec((B, 1), lambda i: (0, 0)),
        compiler_params=pltpu.CompilerParams(dimension_semantics=("arbitrary",)),
    )(*inputs)


# ----------------------------- main -----------------------------------------

if __name__ == "__main__":
    B, S = 2, 8
    key = jax.random.PRNGKey(0)
    k_tok, k_param = jax.random.split(key)

    # deterministic small inputs: cls + random tokens + sep, second sample padded
    rand_tok = jax.random.randint(k_tok, (B, S), 3, VOCAB, dtype=jnp.int32)
    lens = jnp.array([8, 5], dtype=jnp.int32)
    pos = jnp.arange(S, dtype=jnp.int32)[None, :]
    attention_mask = (pos < lens[:, None]).astype(jnp.int32)
    input_ids = jnp.where(attention_mask == 1, rand_tok, PAD_ID)
    input_ids = input_ids.at[:, 0].set(CLS_ID)
    input_ids = input_ids.at[jnp.arange(B), lens - 1].set(SEP_ID)

    params = init_params(k_param)

    fwd = jax.jit(roberta_forward)
    out = fwd(params, input_ids, attention_mask)
    out = jax.block_until_ready(out)
    assert out.shape == (B, 1) and out.dtype == jnp.float32
    assert bool(jnp.isfinite(out).all())
    print("KERNEL_OK")
</pallas_src>

<mosaic_0001>
module attributes {stable_mosaic.version = 11 : i64} {
  func.func @_fused_roberta_kernel(%arg0: i32, %arg1: memref<16x32xf32, #tpu.memory_space<vmem>>, %arg2: memref<16x16xf32, #tpu.memory_space<vmem>>, %arg3: memref<2x16xf32, #tpu.memory_space<vmem>>, %arg4: memref<1x32xf32, #tpu.memory_space<vmem>>, %arg5: memref<1x32xf32, #tpu.memory_space<vmem>>, %arg6: memref<8x32x8xf32, #tpu.memory_space<vmem>>, %arg7: memref<8x1x8xf32, #tpu.memory_space<vmem>>, %arg8: memref<8x32x8xf32, #tpu.memory_space<vmem>>, %arg9: memref<8x1x8xf32, #tpu.memory_space<vmem>>, %arg10: memref<8x32x8xf32, #tpu.memory_space<vmem>>, %arg11: memref<8x1x8xf32, #tpu.memory_space<vmem>>, %arg12: memref<8x8x32xf32, #tpu.memory_space<vmem>>, %arg13: memref<2x1x32xf32, #tpu.memory_space<vmem>>, %arg14: memref<2x1x32xf32, #tpu.memory_space<vmem>>, %arg15: memref<2x1x32xf32, #tpu.memory_space<vmem>>, %arg16: memref<2x32x64xf32, #tpu.memory_space<vmem>>, %arg17: memref<2x1x64xf32, #tpu.memory_space<vmem>>, %arg18: memref<2x64x32xf32, #tpu.memory_space<vmem>>, %arg19: memref<2x1x32xf32, #tpu.memory_space<vmem>>, %arg20: memref<2x1x32xf32, #tpu.memory_space<vmem>>, %arg21: memref<2x1x32xf32, #tpu.memory_space<vmem>>, %arg22: memref<32x1xf32, #tpu.memory_space<vmem>>, %arg23: memref<1x1xf32, #tpu.memory_space<vmem>>, %arg24: memref<2x1xf32, #tpu.memory_space<vmem>>) attributes {dimension_semantics = [#tpu.dimension_semantics<arbitrary>], iteration_bounds = array<i64: 1>, scalar_prefetch = 0 : i64, scratch_operands = 0 : i64, tpu.core_type = #tpu.core_type<tc>, window_params = [{pipeline_mode = #tpu.pipeline_mode<synchronous>, transform_indices = @transform_0, window_bounds = array<i64: 16, 32>}, {pipeline_mode = #tpu.pipeline_mode<synchronous>, transform_indices = @transform_1, window_bounds = array<i64: 16, 16>}, {pipeline_mode = #tpu.pipeline_mode<synchronous>, transform_indices = @transform_2, window_bounds = array<i64: 2, 16>}, {pipeline_mode = #tpu.pipeline_mode<synchronous>, transform_indices = @transform_3, window_bounds = array<i64: 1, 32>}, {pipeline_mode = #tpu.pipeline_mode<synchronous>, transform_indices = @transform_4, window_bounds = array<i64: 1, 32>}, {pipeline_mode = #tpu.pipeline_mode<synchronous>, transform_indices = @transform_5, window_bounds = array<i64: 8, 32, 8>}, {pipeline_mode = #tpu.pipeline_mode<synchronous>, transform_indices = @transform_6, window_bounds = array<i64: 8, 1, 8>}, {pipeline_mode = #tpu.pipeline_mode<synchronous>, transform_indices = @transform_7, window_bounds = array<i64: 8, 32, 8>}, {pipeline_mode = #tpu.pipeline_mode<synchronous>, transform_indices = @transform_8, window_bounds = array<i64: 8, 1, 8>}, {pipeline_mode = #tpu.pipeline_mode<synchronous>, transform_indices = @transform_9, window_bounds = array<i64: 8, 32, 8>}, {pipeline_mode = #tpu.pipeline_mode<synchronous>, transform_indices = @transform_10, window_bounds = array<i64: 8, 1, 8>}, {pipeline_mode = #tpu.pipeline_mode<synchronous>, transform_indices = @transform_11, window_bounds = array<i64: 8, 8, 32>}, {pipeline_mode = #tpu.pipeline_mode<synchronous>, transform_indices = @transform_12, window_bounds = array<i64: 2, 1, 32>}, {pipeline_mode = #tpu.pipeline_mode<synchronous>, transform_indices = @transform_13, window_bounds = array<i64: 2, 1, 32>}, {pipeline_mode = #tpu.pipeline_mode<synchronous>, transform_indices = @transform_14, window_bounds = array<i64: 2, 1, 32>}, {pipeline_mode = #tpu.pipeline_mode<synchronous>, transform_indices = @transform_15, window_bounds = array<i64: 2, 32, 64>}, {pipeline_mode = #tpu.pipeline_mode<synchronous>, transform_indices = @transform_16, window_bounds = array<i64: 2, 1, 64>}, {pipeline_mode = #tpu.pipeline_mode<synchronous>, transform_indices = @transform_17, window_bounds = array<i64: 2, 64, 32>}, {pipeline_mode = #tpu.pipeline_mode<synchronous>, transform_indices = @transform_18, window_bounds = array<i64: 2, 1, 32>}, {pipeline_mode = #tpu.pipeline_mode<synchronous>, transform_indices = @transform_19, window_bounds = array<i64: 2, 1, 32>}, {pipeline_mode = #tpu.pipeline_mode<synchronous>, transform_indices = @transform_20, window_bounds = array<i64: 2, 1, 32>}, {pipeline_mode = #tpu.pipeline_mode<synchronous>, transform_indices = @transform_21, window_bounds = array<i64: 32, 1>}, {pipeline_mode = #tpu.pipeline_mode<synchronous>, transform_indices = @transform_22, window_bounds = array<i64: 1, 1>}, {pipeline_mode = #tpu.pipeline_mode<synchronous>, transform_indices = @transform_23, window_bounds = array<i64: 2, 1>}]} {
    %c0 = arith.constant 0 : index
    %c0_0 = arith.constant 0 : index
    %0 = vector.load %arg1[%c0, %c0_0] : memref<16x32xf32, #tpu.memory_space<vmem>>, vector<16x32xf32>
    %c0_1 = arith.constant 0 : index
    %c0_2 = arith.constant 0 : index
    %1 = vector.load %arg4[%c0_1, %c0_2] : memref<1x32xf32, #tpu.memory_space<vmem>>, vector<1x32xf32>
    %c0_3 = arith.constant 0 : index
    %c0_4 = arith.constant 0 : index
    %2 = vector.load %arg5[%c0_3, %c0_4] : memref<1x32xf32, #tpu.memory_space<vmem>>, vector<1x32xf32>
    %cst = arith.constant dense<0.000000e+00> : vector<16xf32>
    %3 = vector.multi_reduction <add>, %0, %cst [1] : vector<16x32xf32> to vector<16xf32>
    %4 = vector.shape_cast %3 : vector<16xf32> to vector<16x1xf32>
    %cst_5 = arith.constant 3.200000e+01 : f32
    %5 = vector.broadcast %cst_5 : f32 to vector<16x1xf32>
    %6 = arith.divf %4, %5 : vector<16x1xf32>
    %7 = vector.broadcast %6 : vector<16x1xf32> to vector<16x32xf32>
    %8 = arith.subf %0, %7 : vector<16x32xf32>
    %9 = arith.mulf %8, %8 : vector<16x32xf32>
    %cst_6 = arith.constant dense<0.000000e+00> : vector<16xf32>
    %10 = vector.multi_reduction <add>, %9, %cst_6 [1] : vector<16x32xf32> to vector<16xf32>
    %11 = vector.shape_cast %10 : vector<16xf32> to vector<16x1xf32>
    %cst_7 = arith.constant 3.200000e+01 : f32
    %12 = vector.broadcast %cst_7 : f32 to vector<16x1xf32>
    %13 = arith.divf %11, %12 : vector<16x1xf32>
    %14 = vector.broadcast %6 : vector<16x1xf32> to vector<16x32xf32>
    %15 = arith.subf %0, %14 : vector<16x32xf32>
    %cst_8 = arith.constant 9.99999974E-6 : f32
    %16 = vector.broadcast %cst_8 : f32 to vector<16x1xf32>
    %17 = arith.addf %13, %16 : vector<16x1xf32>
    %18 = math.rsqrt %17 : vector<16x1xf32>
    %19 = vector.broadcast %18 : vector<16x1xf32> to vector<16x32xf32>
    %20 = arith.mulf %15, %19 : vector<16x32xf32>
    %21 = vector.broadcast %1 : vector<1x32xf32> to vector<16x32xf32>
    %22 = arith.mulf %20, %21 : vector<16x32xf32>
    %23 = vector.broadcast %2 : vector<1x32xf32> to vector<16x32xf32>
    %24 = arith.addf %22, %23 : vector<16x32xf32>
    %c0_9 = arith.constant 0 : index
    %c0_10 = arith.constant 0 : index
    %25 = vector.load %arg2[%c0_9, %c0_10] : memref<16x16xf32, #tpu.memory_space<vmem>>, vector<16x16xf32>
    %cst_11 = arith.constant 0.000000e+00 : f32
    %26 = vector.broadcast %cst_11 : f32 to vector<16x32xf32>
    %c0_12 = arith.constant 0 : index
    %c0_13 = arith.constant 0 : index
    %c0_14 = arith.constant 0 : index
    %27 = vector.load %arg6[%c0_12, %c0_13, %c0_14] : memref<8x32x8xf32, #tpu.memory_space<vmem>>, vector<1x32x8xf32>
    %28 = vector.shape_cast %27 : vector<1x32x8xf32> to vector<32x8xf32>
    %cst_15 = arith.constant dense<0.000000e+00> : vector<16x8xf32>
    %29 = tpu.matmul %24, %28, %cst_15 {dimension_numbers = #tpu.dot_dimension_numbers<[1], [0], [0], [1], [0, 0, 1, 1], [], []>} : vector<16x32xf32>, vector<32x8xf32>, vector<16x8xf32> -> vector<16x8xf32>
    %c0_16 = arith.constant 0 : index
    %c0_17 = arith.constant 0 : index
    %c0_18 = arith.constant 0 : index
    %30 = vector.load %arg7[%c0_16, %c0_17, %c0_18] : memref<8x1x8xf32, #tpu.memory_space<vmem>>, vector<1x1x8xf32>
    %31 = vector.shape_cast %30 : vector<1x1x8xf32> to vector<1x8xf32>
    %32 = vector.broadcast %31 : vector<1x8xf32> to vector<16x8xf32>
    %33 = arith.addf %29, %32 : vector<16x8xf32>
    %c0_19 = arith.constant 0 : index
    %c0_20 = arith.constant 0 : index
    %c0_21 = arith.constant 0 : index
    %34 = vector.load %arg8[%c0_19, %c0_20, %c0_21] : memref<8x32x8xf32, #tpu.memory_space<vmem>>, vector<1x32x8xf32>
    %35 = vector.shape_cast %34 : vector<1x32x8xf32> to vector<32x8xf32>
    %cst_22 = arith.constant dense<0.000000e+00> : vector<16x8xf32>
    %36 = tpu.matmul %24, %35, %cst_22 {dimension_numbers = #tpu.dot_dimension_numbers<[1], [0], [0], [1], [0, 0, 1, 1], [], []>} : vector<16x32xf32>, vector<32x8xf32>, vector<16x8xf32> -> vector<16x8xf32>
    %c0_23 = arith.constant 0 : index
    %c0_24 = arith.constant 0 : index
    %c0_25 = arith.constant 0 : index
    %37 = vector.load %arg9[%c0_23, %c0_24, %c0_25] : memref<8x1x8xf32, #tpu.memory_space<vmem>>, vector<1x1x8xf32>
    %38 = vector.shape_cast %37 : vector<1x1x8xf32> to vector<1x8xf32>
    %39 = vector.broadcast %38 : vector<1x8xf32> to vector<16x8xf32>
    %40 = arith.addf %36, %39 : vector<16x8xf32>
    %c0_26 = arith.constant 0 : index
    %c0_27 = arith.constant 0 : index
    %c0_28 = arith.constant 0 : index
    %41 = vector.load %arg10[%c0_26, %c0_27, %c0_28] : memref<8x32x8xf32, #tpu.memory_space<vmem>>, vector<1x32x8xf32>
    %42 = vector.shape_cast %41 : vector<1x32x8xf32> to vector<32x8xf32>
    %cst_29 = arith.constant dense<0.000000e+00> : vector<16x8xf32>
    %43 = tpu.matmul %24, %42, %cst_29 {dimension_numbers = #tpu.dot_dimension_numbers<[1], [0], [0], [1], [0, 0, 1, 1], [], []>} : vector<16x32xf32>, vector<32x8xf32>, vector<16x8xf32> -> vector<16x8xf32>
    %c0_30 = arith.constant 0 : index
    %c0_31 = arith.constant 0 : index
    %c0_32 = arith.constant 0 : index
    %44 = vector.load %arg11[%c0_30, %c0_31, %c0_32] : memref<8x1x8xf32, #tpu.memory_space<vmem>>, vector<1x1x8xf32>
    %45 = vector.shape_cast %44 : vector<1x1x8xf32> to vector<1x8xf32>
    %46 = vector.broadcast %45 : vector<1x8xf32> to vector<16x8xf32>
    %47 = arith.addf %43, %46 : vector<16x8xf32>
    %48 = tpu.transpose %40, [1, 0] : vector<16x8xf32> -> vector<8x16xf32>
    %cst_33 = arith.constant dense<0.000000e+00> : vector<16x16xf32>
    %49 = tpu.matmul %33, %48, %cst_33 {dimension_numbers = #tpu.dot_dimension_numbers<[1], [0], [0], [1], [0, 0, 1, 1], [], []>} : vector<16x8xf32>, vector<8x16xf32>, vector<16x16xf32> -> vector<16x16xf32>
    %cst_34 = arith.constant 0.353553385 : f32
    %50 = vector.broadcast %cst_34 : f32 to vector<16x16xf32>
    %51 = arith.mulf %49, %50 : vector<16x16xf32>
    %52 = arith.addf %51, %25 : vector<16x16xf32>
    %cst_35 = arith.constant dense<0xFF800000> : vector<16xf32>
    %53 = vector.multi_reduction <maximumf>, %52, %cst_35 [1] : vector<16x16xf32> to vector<16xf32>
    %54 = vector.shape_cast %53 : vector<16xf32> to vector<16x1xf32>
    %55 = vector.broadcast %54 : vector<16x1xf32> to vector<16x16xf32>
    %56 = arith.subf %52, %55 : vector<16x16xf32>
    %57 = math.exp %56 : vector<16x16xf32>
    %cst_36 = arith.constant dense<0.000000e+00> : vector<16xf32>
    %58 = vector.multi_reduction <add>, %57, %cst_36 [1] : vector<16x16xf32> to vector<16xf32>
    %59 = vector.shape_cast %58 : vector<16xf32> to vector<16x1xf32>
    %60 = tpu.reciprocal %59 {approx = true} : vector<16x1xf32> -> vector<16x1xf32>
    %61 = vector.broadcast %60 : vector<16x1xf32> to vector<16x16xf32>
    %62 = arith.mulf %57, %61 : vector<16x16xf32>
    %cst_37 = arith.constant dense<0.000000e+00> : vector<16x8xf32>
    %63 = tpu.matmul %62, %47, %cst_37 {dimension_numbers = #tpu.dot_dimension_numbers<[1], [0], [0], [1], [0, 0, 1, 1], [], []>} : vector<16x16xf32>, vector<16x8xf32>, vector<16x8xf32> -> vector<16x8xf32>
    %c0_38 = arith.constant 0 : index
    %c0_39 = arith.constant 0 : index
    %c0_40 = arith.constant 0 : index
    %64 = vector.load %arg12[%c0_38, %c0_39, %c0_40] : memref<8x8x32xf32, #tpu.memory_space<vmem>>, vector<1x8x32xf32>
    %65 = vector.shape_cast %64 : vector<1x8x32xf32> to vector<8x32xf32>
    %cst_41 = arith.constant dense<0.000000e+00> : vector<16x32xf32>
    %66 = tpu.matmul %63, %65, %cst_41 {dimension_numbers = #tpu.dot_dimension_numbers<[1], [0], [0], [1], [0, 0, 1, 1], [], []>} : vector<16x8xf32>, vector<8x32xf32>, vector<16x32xf32> -> vector<16x32xf32>
    %67 = arith.addf %26, %66 : vector<16x32xf32>
    %c1 = arith.constant 1 : index
    %c0_42 = arith.constant 0 : index
    %c0_43 = arith.constant 0 : index
    %68 = vector.load %arg6[%c1, %c0_42, %c0_43] : memref<8x32x8xf32, #tpu.memory_space<vmem>>, vector<1x32x8xf32>
    %69 = vector.shape_cast %68 : vector<1x32x8xf32> to vector<32x8xf32>
    %cst_44 = arith.constant dense<0.000000e+00> : vector<16x8xf32>
    %70 = tpu.matmul %24, %69, %cst_44 {dimension_numbers = #tpu.dot_dimension_numbers<[1], [0], [0], [1], [0, 0, 1, 1], [], []>} : vector<16x32xf32>, vector<32x8xf32>, vector<16x8xf32> -> vector<16x8xf32>
    %c1_45 = arith.constant 1 : index
    %c0_46 = arith.constant 0 : index
    %c0_47 = arith.constant 0 : index
    %71 = vector.load %arg7[%c1_45, %c0_46, %c0_47] : memref<8x1x8xf32, #tpu.memory_space<vmem>>, vector<1x1x8xf32>
    %72 = vector.shape_cast %71 : vector<1x1x8xf32> to vector<1x8xf32>
    %73 = vector.broadcast %72 : vector<1x8xf32> to vector<16x8xf32>
    %74 = arith.addf %70, %73 : vector<16x8xf32>
    %c1_48 = arith.constant 1 : index
    %c0_49 = arith.constant 0 : index
    %c0_50 = arith.constant 0 : index
    %75 = vector.load %arg8[%c1_48, %c0_49, %c0_50] : memref<8x32x8xf32, #tpu.memory_space<vmem>>, vector<1x32x8xf32>
    %76 = vector.shape_cast %75 : vector<1x32x8xf32> to vector<32x8xf32>
    %cst_51 = arith.constant dense<0.000000e+00> : vector<16x8xf32>
    %77 = tpu.matmul %24, %76, %cst_51 {dimension_numbers = #tpu.dot_dimension_numbers<[1], [0], [0], [1], [0, 0, 1, 1], [], []>} : vector<16x32xf32>, vector<32x8xf32>, vector<16x8xf32> -> vector<16x8xf32>
    %c1_52 = arith.constant 1 : index
    %c0_53 = arith.constant 0 : index
    %c0_54 = arith.constant 0 : index
    %78 = vector.load %arg9[%c1_52, %c0_53, %c0_54] : memref<8x1x8xf32, #tpu.memory_space<vmem>>, vector<1x1x8xf32>
    %79 = vector.shape_cast %78 : vector<1x1x8xf32> to vector<1x8xf32>
    %80 = vector.broadcast %79 : vector<1x8xf32> to vector<16x8xf32>
    %81 = arith.addf %77, %80 : vector<16x8xf32>
    %c1_55 = arith.constant 1 : index
    %c0_56 = arith.constant 0 : index
    %c0_57 = arith.constant 0 : index
    %82 = vector.load %arg10[%c1_55, %c0_56, %c0_57] : memref<8x32x8xf32, #tpu.memory_space<vmem>>, vector<1x32x8xf32>
    %83 = vector.shape_cast %82 : vector<1x32x8xf32> to vector<32x8xf32>
    %cst_58 = arith.constant dense<0.000000e+00> : vector<16x8xf32>
    %84 = tpu.matmul %24, %83, %cst_58 {dimension_numbers = #tpu.dot_dimension_numbers<[1], [0], [0], [1], [0, 0, 1, 1], [], []>} : vector<16x32xf32>, vector<32x8xf32>, vector<16x8xf32> -> vector<16x8xf32>
    %c1_59 = arith.constant 1 : index
    %c0_60 = arith.constant 0 : index
    %c0_61 = arith.constant 0 : index
    %85 = vector.load %arg11[%c1_59, %c0_60, %c0_61] : memref<8x1x8xf32, #tpu.memory_space<vmem>>, vector<1x1x8xf32>
    %86 = vector.shape_cast %85 : vector<1x1x8xf32> to vector<1x8xf32>
    %87 = vector.broadcast %86 : vector<1x8xf32> to vector<16x8xf32>
    %88 = arith.addf %84, %87 : vector<16x8xf32>
    %89 = tpu.transpose %81, [1, 0] : vector<16x8xf32> -> vector<8x16xf32>
    %cst_62 = arith.constant dense<0.000000e+00> : vector<16x16xf32>
    %90 = tpu.matmul %74, %89, %cst_62 {dimension_numbers = #tpu.dot_dimension_numbers<[1], [0], [0], [1], [0, 0, 1, 1], [], []>} : vector<16x8xf32>, vector<8x16xf32>, vector<16x16xf32> -> vector<16x16xf32>
    %cst_63 = arith.constant 0.353553385 : f32
    %91 = vector.broadcast %cst_63 : f32 to vector<16x16xf32>
    %92 = arith.mulf %90, %91 : vector<16x16xf32>
    %93 = arith.addf %92, %25 : vector<16x16xf32>
    %cst_64 = arith.constant dense<0xFF800000> : vector<16xf32>
    %94 = vector.multi_reduction <maximumf>, %93, %cst_64 [1] : vector<16x16xf32> to vector<16xf32>
    %95 = vector.shape_cast %94 : vector<16xf32> to vector<16x1xf32>
    %96 = vector.broadcast %95 : vector<16x1xf32> to vector<16x16xf32>
    %97 = arith.subf %93, %96 : vector<16x16xf32>
    %98 = math.exp %97 : vector<16x16xf32>
    %cst_65 = arith.constant dense<0.000000e+00> : vector<16xf32>
    %99 = vector.multi_reduction <add>, %98, %cst_65 [1] : vector<16x16xf32> to vector<16xf32>
    %100 = vector.shape_cast %99 : vector<16xf32> to vector<16x1xf32>
    %101 = tpu.reciprocal %100 {approx = true} : vector<16x1xf32> -> vector<16x1xf32>
    %102 = vector.broadcast %101 : vector<16x1xf32> to vector<16x16xf32>
    %103 = arith.mulf %98, %102 : vector<16x16xf32>
    %cst_66 = arith.constant dense<0.000000e+00> : vector<16x8xf32>
    %104 = tpu.matmul %103, %88, %cst_66 {dimension_numbers = #tpu.dot_dimension_numbers<[1], [0], [0], [1], [0, 0, 1, 1], [], []>} : vector<16x16xf32>, vector<16x8xf32>, vector<16x8xf32> -> vector<16x8xf32>
    %c1_67 = arith.constant 1 : index
    %c0_68 = arith.constant 0 : index
    %c0_69 = arith.constant 0 : index
    %105 = vector.load %arg12[%c1_67, %c0_68, %c0_69] : memref<8x8x32xf32, #tpu.memory_space<vmem>>, vector<1x8x32xf32>
    %106 = vector.shape_cast %105 : vector<1x8x32xf32> to vector<8x32xf32>
    %cst_70 = arith.constant dense<0.000000e+00> : vector<16x32xf32>
    %107 = tpu.matmul %104, %106, %cst_70 {dimension_numbers = #tpu.dot_dimension_numbers<[1], [0], [0], [1], [0, 0, 1, 1], [], []>} : vector<16x8xf32>, vector<8x32xf32>, vector<16x32xf32> -> vector<16x32xf32>
    %108 = arith.addf %67, %107 : vector<16x32xf32>
    %c2 = arith.constant 2 : index
    %c0_71 = arith.constant 0 : index
    %c0_72 = arith.constant 0 : index
    %109 = vector.load %arg6[%c2, %c0_71, %c0_72] : memref<8x32x8xf32, #tpu.memory_space<vmem>>, vector<1x32x8xf32>
    %110 = vector.shape_cast %109 : vector<1x32x8xf32> to vector<32x8xf32>
    %cst_73 = arith.constant dense<0.000000e+00> : vector<16x8xf32>
    %111 = tpu.matmul %24, %110, %cst_73 {dimension_numbers = #tpu.dot_dimension_numbers<[1], [0], [0], [1], [0, 0, 1, 1], [], []>} : vector<16x32xf32>, vector<32x8xf32>, vector<16x8xf32> -> vector<16x8xf32>
    %c2_74 = arith.constant 2 : index
    %c0_75 = arith.constant 0 : index
    %c0_76 = arith.constant 0 : index
    %112 = vector.load %arg7[%c2_74, %c0_75, %c0_76] : memref<8x1x8xf32, #tpu.memory_space<vmem>>, vector<1x1x8xf32>
    %113 = vector.shape_cast %112 : vector<1x1x8xf32> to vector<1x8xf32>
    %114 = vector.broadcast %113 : vector<1x8xf32> to vector<16x8xf32>
    %115 = arith.addf %111, %114 : vector<16x8xf32>
    %c2_77 = arith.constant 2 : index
    %c0_78 = arith.constant 0 : index
    %c0_79 = arith.constant 0 : index
    %116 = vector.load %arg8[%c2_77, %c0_78, %c0_79] : memref<8x32x8xf32, #tpu.memory_space<vmem>>, vector<1x32x8xf32>
    %117 = vector.shape_cast %116 : vector<1x32x8xf32> to vector<32x8xf32>
    %cst_80 = arith.constant dense<0.000000e+00> : vector<16x8xf32>
    %118 = tpu.matmul %24, %117, %cst_80 {dimension_numbers = #tpu.dot_dimension_numbers<[1], [0], [0], [1], [0, 0, 1, 1], [], []>} : vector<16x32xf32>, vector<32x8xf32>, vector<16x8xf32> -> vector<16x8xf32>
    %c2_81 = arith.constant 2 : index
    %c0_82 = arith.constant 0 : index
    %c0_83 = arith.constant 0 : index
    %119 = vector.load %arg9[%c2_81, %c0_82, %c0_83] : memref<8x1x8xf32, #tpu.memory_space<vmem>>, vector<1x1x8xf32>
    %120 = vector.shape_cast %119 : vector<1x1x8xf32> to vector<1x8xf32>
    %121 = vector.broadcast %120 : vector<1x8xf32> to vector<16x8xf32>
    %122 = arith.addf %118, %121 : vector<16x8xf32>
    %c2_84 = arith.constant 2 : index
    %c0_85 = arith.constant 0 : index
    %c0_86 = arith.constant 0 : index
    %123 = vector.load %arg10[%c2_84, %c0_85, %c0_86] : memref<8x32x8xf32, #tpu.memory_space<vmem>>, vector<1x32x8xf32>
    %124 = vector.shape_cast %123 : vector<1x32x8xf32> to vector<32x8xf32>
    %cst_87 = arith.constant dense<0.000000e+00> : vector<16x8xf32>
    %125 = tpu.matmul %24, %124, %cst_87 {dimension_numbers = #tpu.dot_dimension_numbers<[1], [0], [0], [1], [0, 0, 1, 1], [], []>} : vector<16x32xf32>, vector<32x8xf32>, vector<16x8xf32> -> vector<16x8xf32>
    %c2_88 = arith.constant 2 : index
    %c0_89 = arith.constant 0 : index
    %c0_90 = arith.constant 0 : index
    %126 = vector.load %arg11[%c2_88, %c0_89, %c0_90] : memref<8x1x8xf32, #tpu.memory_space<vmem>>, vector<1x1x8xf32>
    %127 = vector.shape_cast %126 : vector<1x1x8xf32> to vector<1x8xf32>
    %128 = vector.broadcast %127 : vector<1x8xf32> to vector<16x8xf32>
    %129 = arith.addf %125, %128 : vector<16x8xf32>
    %130 = tpu.transpose %122, [1, 0] : vector<16x8xf32> -> vector<8x16xf32>
    %cst_91 = arith.constant dense<0.000000e+00> : vector<16x16xf32>
    %131 = tpu.matmul %115, %130, %cst_91 {dimension_numbers = #tpu.dot_dimension_numbers<[1], [0], [0], [1], [0, 0, 1, 1], [], []>} : vector<16x8xf32>, vector<8x16xf32>, vector<16x16xf32> -> vector<16x16xf32>
    %cst_92 = arith.constant 0.353553385 : f32
    %132 = vector.broadcast %cst_92 : f32 to vector<16x16xf32>
    %133 = arith.mulf %131, %132 : vector<16x16xf32>
    %134 = arith.addf %133, %25 : vector<16x16xf32>
    %cst_93 = arith.constant dense<0xFF800000> : vector<16xf32>
    %135 = vector.multi_reduction <maximumf>, %134, %cst_93 [1] : vector<16x16xf32> to vector<16xf32>
    %136 = vector.shape_cast %135 : vector<16xf32> to vector<16x1xf32>
    %137 = vector.broadcast %136 : vector<16x1xf32> to vector<16x16xf32>
    %138 = arith.subf %134, %137 : vector<16x16xf32>
    %139 = math.exp %138 : vector<16x16xf32>
    %cst_94 = arith.constant dense<0.000000e+00> : vector<16xf32>
    %140 = vector.multi_reduction <add>, %139, %cst_94 [1] : vector<16x16xf32> to vector<16xf32>
    %141 = vector.shape_cast %140 : vector<16xf32> to vector<16x1xf32>
    %142 = tpu.reciprocal %141 {approx = true} : vector<16x1xf32> -> vector<16x1xf32>
    %143 = vector.broadcast %142 : vector<16x1xf32> to vector<16x16xf32>
    %144 = arith.mulf %139, %143 : vector<16x16xf32>
    %cst_95 = arith.constant dense<0.000000e+00> : vector<16x8xf32>
    %145 = tpu.matmul %144, %129, %cst_95 {dimension_numbers = #tpu.dot_dimension_numbers<[1], [0], [0], [1], [0, 0, 1, 1], [], []>} : vector<16x16xf32>, vector<16x8xf32>, vector<16x8xf32> -> vector<16x8xf32>
    %c2_96 = arith.constant 2 : index
    %c0_97 = arith.constant 0 : index
    %c0_98 = arith.constant 0 : index
    %146 = vector.load %arg12[%c2_96, %c0_97, %c0_98] : memref<8x8x32xf32, #tpu.memory_space<vmem>>, vector<1x8x32xf32>
    %147 = vector.shape_cast %146 : vector<1x8x32xf32> to vector<8x32xf32>
    %cst_99 = arith.constant dense<0.000000e+00> : vector<16x32xf32>
    %148 = tpu.matmul %145, %147, %cst_99 {dimension_numbers = #tpu.dot_dimension_numbers<[1], [0], [0], [1], [0, 0, 1, 1], [], []>} : vector<16x8xf32>, vector<8x32xf32>, vector<16x32xf32> -> vector<16x32xf32>
    %149 = arith.addf %108, %148 : vector<16x32xf32>
    %c3 = arith.constant 3 : index
    %c0_100 = arith.constant 0 : index
    %c0_101 = arith.constant 0 : index
    %150 = vector.load %arg6[%c3, %c0_100, %c0_101] : memref<8x32x8xf32, #tpu.memory_space<vmem>>, vector<1x32x8xf32>
    %151 = vector.shape_cast %150 : vector<1x32x8xf32> to vector<32x8xf32>
    %cst_102 = arith.constant dense<0.000000e+00> : vector<16x8xf32>
    %152 = tpu.matmul %24, %151, %cst_102 {dimension_numbers = #tpu.dot_dimension_numbers<[1], [0], [0], [1], [0, 0, 1, 1], [], []>} : vector<16x32xf32>, vector<32x8xf32>, vector<16x8xf32> -> vector<16x8xf32>
    %c3_103 = arith.constant 3 : index
    %c0_104 = arith.constant 0 : index
    %c0_105 = arith.constant 0 : index
    %153 = vector.load %arg7[%c3_103, %c0_104, %c0_105] : memref<8x1x8xf32, #tpu.memory_space<vmem>>, vector<1x1x8xf32>
    %154 = vector.shape_cast %153 : vector<1x1x8xf32> to vector<1x8xf32>
    %155 = vector.broadcast %154 : vector<1x8xf32> to vector<16x8xf32>
    %156 = arith.addf %152, %155 : vector<16x8xf32>
    %c3_106 = arith.constant 3 : index
    %c0_107 = arith.constant 0 : index
    %c0_108 = arith.constant 0 : index
    %157 = vector.load %arg8[%c3_106, %c0_107, %c0_108] : memref<8x32x8xf32, #tpu.memory_space<vmem>>, vector<1x32x8xf32>
    %158 = vector.shape_cast %157 : vector<1x32x8xf32> to vector<32x8xf32>
    %cst_109 = arith.constant dense<0.000000e+00> : vector<16x8xf32>
    %159 = tpu.matmul %24, %158, %cst_109 {dimension_numbers = #tpu.dot_dimension_numbers<[1], [0], [0], [1], [0, 0, 1, 1], [], []>} : vector<16x32xf32>, vector<32x8xf32>, vector<16x8xf32> -> vector<16x8xf32>
    %c3_110 = arith.constant 3 : index
    %c0_111 = arith.constant 0 : index
    %c0_112 = arith.constant 0 : index
    %160 = vector.load %arg9[%c3_110, %c0_111, %c0_112] : memref<8x1x8xf32, #tpu.memory_space<vmem>>, vector<1x1x8xf32>
    %161 = vector.shape_cast %160 : vector<1x1x8xf32> to vector<1x8xf32>
    %162 = vector.broadcast %161 : vector<1x8xf32> to vector<16x8xf32>
    %163 = arith.addf %159, %162 : vector<16x8xf32>
    %c3_113 = arith.constant 3 : index
    %c0_114 = arith.constant 0 : index
    %c0_115 = arith.constant 0 : index
    %164 = vector.load %arg10[%c3_113, %c0_114, %c0_115] : memref<8x32x8xf32, #tpu.memory_space<vmem>>, vector<1x32x8xf32>
    %165 = vector.shape_cast %164 : vector<1x32x8xf32> to vector<32x8xf32>
    %cst_116 = arith.constant dense<0.000000e+00> : vector<16x8xf32>
    %166 = tpu.matmul %24, %165, %cst_116 {dimension_numbers = #tpu.dot_dimension_numbers<[1], [0], [0], [1], [0, 0, 1, 1], [], []>} : vector<16x32xf32>, vector<32x8xf32>, vector<16x8xf32> -> vector<16x8xf32>
    %c3_117 = arith.constant 3 : index
    %c0_118 = arith.constant 0 : index
    %c0_119 = arith.constant 0 : index
    %167 = vector.load %arg11[%c3_117, %c0_118, %c0_119] : memref<8x1x8xf32, #tpu.memory_space<vmem>>, vector<1x1x8xf32>
    %168 = vector.shape_cast %167 : vector<1x1x8xf32> to vector<1x8xf32>
    %169 = vector.broadcast %168 : vector<1x8xf32> to vector<16x8xf32>
    %170 = arith.addf %166, %169 : vector<16x8xf32>
    %171 = tpu.transpose %163, [1, 0] : vector<16x8xf32> -> vector<8x16xf32>
    %cst_120 = arith.constant dense<0.000000e+00> : vector<16x16xf32>
    %172 = tpu.matmul %156, %171, %cst_120 {dimension_numbers = #tpu.dot_dimension_numbers<[1], [0], [0], [1], [0, 0, 1, 1], [], []>} : vector<16x8xf32>, vector<8x16xf32>, vector<16x16xf32> -> vector<16x16xf32>
    %cst_121 = arith.constant 0.353553385 : f32
    %173 = vector.broadcast %cst_121 : f32 to vector<16x16xf32>
    %174 = arith.mulf %172, %173 : vector<16x16xf32>
    %175 = arith.addf %174, %25 : vector<16x16xf32>
    %cst_122 = arith.constant dense<0xFF800000> : vector<16xf32>
    %176 = vector.multi_reduction <maximumf>, %175, %cst_122 [1] : vector<16x16xf32> to vector<16xf32>
    %177 = vector.shape_cast %176 : vector<16xf32> to vector<16x1xf32>
    %178 = vector.broadcast %177 : vector<16x1xf32> to vector<16x16xf32>
    %179 = arith.subf %175, %178 : vector<16x16xf32>
    %180 = math.exp %179 : vector<16x16xf32>
    %cst_123 = arith.constant dense<0.000000e+00> : vector<16xf32>
    %181 = vector.multi_reduction <add>, %180, %cst_123 [1] : vector<16x16xf32> to vector<16xf32>
    %182 = vector.shape_cast %181 : vector<16xf32> to vector<16x1xf32>
    %183 = tpu.reciprocal %182 {approx = true} : vector<16x1xf32> -> vector<16x1xf32>
    %184 = vector.broadcast %183 : vector<16x1xf32> to vector<16x16xf32>
    %185 = arith.mulf %180, %184 : vector<16x16xf32>
    %cst_124 = arith.constant dense<0.000000e+00> : vector<16x8xf32>
    %186 = tpu.matmul %185, %170, %cst_124 {dimension_numbers = #tpu.dot_dimension_numbers<[1], [0], [0], [1], [0, 0, 1, 1], [], []>} : vector<16x16xf32>, vector<16x8xf32>, vector<16x8xf32> -> vector<16x8xf32>
    %c3_125 = arith.constant 3 : index
    %c0_126 = arith.constant 0 : index
    %c0_127 = arith.constant 0 : index
    %187 = vector.load %arg12[%c3_125, %c0_126, %c0_127] : memref<8x8x32xf32, #tpu.memory_space<vmem>>, vector<1x8x32xf32>
    %188 = vector.shape_cast %187 : vector<1x8x32xf32> to vector<8x32xf32>
    %cst_128 = arith.constant dense<0.000000e+00> : vector<16x32xf32>
    %189 = tpu.matmul %186, %188, %cst_128 {dimension_numbers = #tpu.dot_dimension_numbers<[1], [0], [0], [1], [0, 0, 1, 1], [], []>} : vector<16x8xf32>, vector<8x32xf32>, vector<16x32xf32> -> vector<16x32xf32>
    %190 = arith.addf %149, %189 : vector<16x32xf32>
    %c0_129 = arith.constant 0 : index
    %c0_130 = arith.constant 0 : index
    %c0_131 = arith.constant 0 : index
    %191 = vector.load %arg13[%c0_129, %c0_130, %c0_131] : memref<2x1x32xf32, #tpu.memory_space<vmem>>, vector<1x1x32xf32>
    %192 = vector.shape_cast %191 : vector<1x1x32xf32> to vector<1x32xf32>
    %193 = vector.broadcast %192 : vector<1x32xf32> to vector<16x32xf32>
    %194 = arith.addf %190, %193 : vector<16x32xf32>
    %195 = arith.addf %194, %24 : vector<16x32xf32>
    %c0_132 = arith.constant 0 : index
    %c0_133 = arith.constant 0 : index
    %c0_134 = arith.constant 0 : index
    %196 = vector.load %arg14[%c0_132, %c0_133, %c0_134] : memref<2x1x32xf32, #tpu.memory_space<vmem>>, vector<1x1x32xf32>
    %197 = vector.shape_cast %196 : vector<1x1x32xf32> to vector<1x32xf32>
    %c0_135 = arith.constant 0 : index
    %c0_136 = arith.constant 0 : index
    %c0_137 = arith.constant 0 : index
    %198 = vector.load %arg15[%c0_135, %c0_136, %c0_137] : memref<2x1x32xf32, #tpu.memory_space<vmem>>, vector<1x1x32xf32>
    %199 = vector.shape_cast %198 : vector<1x1x32xf32> to vector<1x32xf32>
    %cst_138 = arith.constant dense<0.000000e+00> : vector<16xf32>
    %200 = vector.multi_reduction <add>, %195, %cst_138 [1] : vector<16x32xf32> to vector<16xf32>
    %201 = vector.shape_cast %200 : vector<16xf32> to vector<16x1xf32>
    %cst_139 = arith.constant 3.200000e+01 : f32
    %202 = vector.broadcast %cst_139 : f32 to vector<16x1xf32>
    %203 = arith.divf %201, %202 : vector<16x1xf32>
    %204 = vector.broadcast %203 : vector<16x1xf32> to vector<16x32xf32>
    %205 = arith.subf %195, %204 : vector<16x32xf32>
    %206 = arith.mulf %205, %205 : vector<16x32xf32>
    %cst_140 = arith.constant dense<0.000000e+00> : vector<16xf32>
    %207 = vector.multi_reduction <add>, %206, %cst_140 [1] : vector<16x32xf32> to vector<16xf32>
    %208 = vector.shape_cast %207 : vector<16xf32> to vector<16x1xf32>
    %cst_141 = arith.constant 3.200000e+01 : f32
    %209 = vector.broadcast %cst_141 : f32 to vector<16x1xf32>
    %210 = arith.divf %208, %209 : vector<16x1xf32>
    %211 = vector.broadcast %203 : vector<16x1xf32> to vector<16x32xf32>
    %212 = arith.subf %195, %211 : vector<16x32xf32>
    %cst_142 = arith.constant 9.99999974E-6 : f32
    %213 = vector.broadcast %cst_142 : f32 to vector<16x1xf32>
    %214 = arith.addf %210, %213 : vector<16x1xf32>
    %215 = math.rsqrt %214 : vector<16x1xf32>
    %216 = vector.broadcast %215 : vector<16x1xf32> to vector<16x32xf32>
    %217 = arith.mulf %212, %216 : vector<16x32xf32>
    %218 = vector.broadcast %197 : vector<1x32xf32> to vector<16x32xf32>
    %219 = arith.mulf %217, %218 : vector<16x32xf32>
    %220 = vector.broadcast %199 : vector<1x32xf32> to vector<16x32xf32>
    %221 = arith.addf %219, %220 : vector<16x32xf32>
    %c0_143 = arith.constant 0 : index
    %c0_144 = arith.constant 0 : index
    %c0_145 = arith.constant 0 : index
    %222 = vector.load %arg16[%c0_143, %c0_144, %c0_145] : memref<2x32x64xf32, #tpu.memory_space<vmem>>, vector<1x32x64xf32>
    %223 = vector.shape_cast %222 : vector<1x32x64xf32> to vector<32x64xf32>
    %cst_146 = arith.constant dense<0.000000e+00> : vector<16x64xf32>
    %224 = tpu.matmul %221, %223, %cst_146 {dimension_numbers = #tpu.dot_dimension_numbers<[1], [0], [0], [1], [0, 0, 1, 1], [], []>} : vector<16x32xf32>, vector<32x64xf32>, vector<16x64xf32> -> vector<16x64xf32>
    %c0_147 = arith.constant 0 : index
    %c0_148 = arith.constant 0 : index
    %c0_149 = arith.constant 0 : index
    %225 = vector.load %arg17[%c0_147, %c0_148, %c0_149] : memref<2x1x64xf32, #tpu.memory_space<vmem>>, vector<1x1x64xf32>
    %226 = vector.shape_cast %225 : vector<1x1x64xf32> to vector<1x64xf32>
    %227 = vector.broadcast %226 : vector<1x64xf32> to vector<16x64xf32>
    %228 = arith.addf %224, %227 : vector<16x64xf32>
    %229 = arith.mulf %228, %228 : vector<16x64xf32>
    %230 = arith.mulf %228, %229 : vector<16x64xf32>
    %cst_150 = arith.constant 4.471500e-02 : f32
    %231 = vector.broadcast %cst_150 : f32 to vector<16x64xf32>
    %232 = arith.mulf %231, %230 : vector<16x64xf32>
    %233 = arith.addf %228, %232 : vector<16x64xf32>
    %cst_151 = arith.constant 0.797884583 : f32
    %234 = vector.broadcast %cst_151 : f32 to vector<16x64xf32>
    %235 = arith.mulf %234, %233 : vector<16x64xf32>
    %236 = math.tanh %235 : vector<16x64xf32>
    %cst_152 = arith.constant 1.000000e+00 : f32
    %237 = vector.broadcast %cst_152 : f32 to vector<16x64xf32>
    %238 = arith.addf %237, %236 : vector<16x64xf32>
    %cst_153 = arith.constant 5.000000e-01 : f32
    %239 = vector.broadcast %cst_153 : f32 to vector<16x64xf32>
    %240 = arith.mulf %239, %238 : vector<16x64xf32>
    %241 = arith.mulf %228, %240 : vector<16x64xf32>
    %c0_154 = arith.constant 0 : index
    %c0_155 = arith.constant 0 : index
    %c0_156 = arith.constant 0 : index
    %242 = vector.load %arg18[%c0_154, %c0_155, %c0_156] : memref<2x64x32xf32, #tpu.memory_space<vmem>>, vector<1x64x32xf32>
    %243 = vector.shape_cast %242 : vector<1x64x32xf32> to vector<64x32xf32>
    %cst_157 = arith.constant dense<0.000000e+00> : vector<16x32xf32>
    %244 = tpu.matmul %241, %243, %cst_157 {dimension_numbers = #tpu.dot_dimension_numbers<[1], [0], [0], [1], [0, 0, 1, 1], [], []>} : vector<16x64xf32>, vector<64x32xf32>, vector<16x32xf32> -> vector<16x32xf32>
    %c0_158 = arith.constant 0 : index
    %c0_159 = arith.constant 0 : index
    %c0_160 = arith.constant 0 : index
    %245 = vector.load %arg19[%c0_158, %c0_159, %c0_160] : memref<2x1x32xf32, #tpu.memory_space<vmem>>, vector<1x1x32xf32>
    %246 = vector.shape_cast %245 : vector<1x1x32xf32> to vector<1x32xf32>
    %247 = vector.broadcast %246 : vector<1x32xf32> to vector<16x32xf32>
    %248 = arith.addf %244, %247 : vector<16x32xf32>
    %249 = arith.addf %248, %221 : vector<16x32xf32>
    %c0_161 = arith.constant 0 : index
    %c0_162 = arith.constant 0 : index
    %c0_163 = arith.constant 0 : index
    %250 = vector.load %arg20[%c0_161, %c0_162, %c0_163] : memref<2x1x32xf32, #tpu.memory_space<vmem>>, vector<1x1x32xf32>
    %251 = vector.shape_cast %250 : vector<1x1x32xf32> to vector<1x32xf32>
    %c0_164 = arith.constant 0 : index
    %c0_165 = arith.constant 0 : index
    %c0_166 = arith.constant 0 : index
    %252 = vector.load %arg21[%c0_164, %c0_165, %c0_166] : memref<2x1x32xf32, #tpu.memory_space<vmem>>, vector<1x1x32xf32>
    %253 = vector.shape_cast %252 : vector<1x1x32xf32> to vector<1x32xf32>
    %cst_167 = arith.constant dense<0.000000e+00> : vector<16xf32>
    %254 = vector.multi_reduction <add>, %249, %cst_167 [1] : vector<16x32xf32> to vector<16xf32>
    %255 = vector.shape_cast %254 : vector<16xf32> to vector<16x1xf32>
    %cst_168 = arith.constant 3.200000e+01 : f32
    %256 = vector.broadcast %cst_168 : f32 to vector<16x1xf32>
    %257 = arith.divf %255, %256 : vector<16x1xf32>
    %258 = vector.broadcast %257 : vector<16x1xf32> to vector<16x32xf32>
    %259 = arith.subf %249, %258 : vector<16x32xf32>
    %260 = arith.mulf %259, %259 : vector<16x32xf32>
    %cst_169 = arith.constant dense<0.000000e+00> : vector<16xf32>
    %261 = vector.multi_reduction <add>, %260, %cst_169 [1] : vector<16x32xf32> to vector<16xf32>
    %262 = vector.shape_cast %261 : vector<16xf32> to vector<16x1xf32>
    %cst_170 = arith.constant 3.200000e+01 : f32
    %263 = vector.broadcast %cst_170 : f32 to vector<16x1xf32>
    %264 = arith.divf %262, %263 : vector<16x1xf32>
    %265 = vector.broadcast %257 : vector<16x1xf32> to vector<16x32xf32>
    %266 = arith.subf %249, %265 : vector<16x32xf32>
    %cst_171 = arith.constant 9.99999974E-6 : f32
    %267 = vector.broadcast %cst_171 : f32 to vector<16x1xf32>
    %268 = arith.addf %264, %267 : vector<16x1xf32>
    %269 = math.rsqrt %268 : vector<16x1xf32>
    %270 = vector.broadcast %269 : vector<16x1xf32> to vector<16x32xf32>
    %271 = arith.mulf %266, %270 : vector<16x32xf32>
    %272 = vector.broadcast %251 : vector<1x32xf32> to vector<16x32xf32>
    %273 = arith.mulf %271, %272 : vector<16x32xf32>
    %274 = vector.broadcast %253 : vector<1x32xf32> to vector<16x32xf32>
    %275 = arith.addf %273, %274 : vector<16x32xf32>
    %cst_172 = arith.constant 0.000000e+00 : f32
    %276 = vector.broadcast %cst_172 : f32 to vector<16x32xf32>
    %c4 = arith.constant 4 : index
    %c0_173 = arith.constant 0 : index
    %c0_174 = arith.constant 0 : index
    %277 = vector.load %arg6[%c4, %c0_173, %c0_174] : memref<8x32x8xf32, #tpu.memory_space<vmem>>, vector<1x32x8xf32>
    %278 = vector.shape_cast %277 : vector<1x32x8xf32> to vector<32x8xf32>
    %cst_175 = arith.constant dense<0.000000e+00> : vector<16x8xf32>
    %279 = tpu.matmul %275, %278, %cst_175 {dimension_numbers = #tpu.dot_dimension_numbers<[1], [0], [0], [1], [0, 0, 1, 1], [], []>} : vector<16x32xf32>, vector<32x8xf32>, vector<16x8xf32> -> vector<16x8xf32>
    %c4_176 = arith.constant 4 : index
    %c0_177 = arith.constant 0 : index
    %c0_178 = arith.constant 0 : index
    %280 = vector.load %arg7[%c4_176, %c0_177, %c0_178] : memref<8x1x8xf32, #tpu.memory_space<vmem>>, vector<1x1x8xf32>
    %281 = vector.shape_cast %280 : vector<1x1x8xf32> to vector<1x8xf32>
    %282 = vector.broadcast %281 : vector<1x8xf32> to vector<16x8xf32>
    %283 = arith.addf %279, %282 : vector<16x8xf32>
    %c4_179 = arith.constant 4 : index
    %c0_180 = arith.constant 0 : index
    %c0_181 = arith.constant 0 : index
    %284 = vector.load %arg8[%c4_179, %c0_180, %c0_181] : memref<8x32x8xf32, #tpu.memory_space<vmem>>, vector<1x32x8xf32>
    %285 = vector.shape_cast %284 : vector<1x32x8xf32> to vector<32x8xf32>
    %cst_182 = arith.constant dense<0.000000e+00> : vector<16x8xf32>
    %286 = tpu.matmul %275, %285, %cst_182 {dimension_numbers = #tpu.dot_dimension_numbers<[1], [0], [0], [1], [0, 0, 1, 1], [], []>} : vector<16x32xf32>, vector<32x8xf32>, vector<16x8xf32> -> vector<16x8xf32>
    %c4_183 = arith.constant 4 : index
    %c0_184 = arith.constant 0 : index
    %c0_185 = arith.constant 0 : index
    %287 = vector.load %arg9[%c4_183, %c0_184, %c0_185] : memref<8x1x8xf32, #tpu.memory_space<vmem>>, vector<1x1x8xf32>
    %288 = vector.shape_cast %287 : vector<1x1x8xf32> to vector<1x8xf32>
    %289 = vector.broadcast %288 : vector<1x8xf32> to vector<16x8xf32>
    %290 = arith.addf %286, %289 : vector<16x8xf32>
    %c4_186 = arith.constant 4 : index
    %c0_187 = arith.constant 0 : index
    %c0_188 = arith.constant 0 : index
    %291 = vector.load %arg10[%c4_186, %c0_187, %c0_188] : memref<8x32x8xf32, #tpu.memory_space<vmem>>, vector<1x32x8xf32>
    %292 = vector.shape_cast %291 : vector<1x32x8xf32> to vector<32x8xf32>
    %cst_189 = arith.constant dense<0.000000e+00> : vector<16x8xf32>
    %293 = tpu.matmul %275, %292, %cst_189 {dimension_numbers = #tpu.dot_dimension_numbers<[1], [0], [0], [1], [0, 0, 1, 1], [], []>} : vector<16x32xf32>, vector<32x8xf32>, vector<16x8xf32> -> vector<16x8xf32>
    %c4_190 = arith.constant 4 : index
    %c0_191 = arith.constant 0 : index
    %c0_192 = arith.constant 0 : index
    %294 = vector.load %arg11[%c4_190, %c0_191, %c0_192] : memref<8x1x8xf32, #tpu.memory_space<vmem>>, vector<1x1x8xf32>
    %295 = vector.shape_cast %294 : vector<1x1x8xf32> to vector<1x8xf32>
    %296 = vector.broadcast %295 : vector<1x8xf32> to vector<16x8xf32>
    %297 = arith.addf %293, %296 : vector<16x8xf32>
    %298 = tpu.transpose %290, [1, 0] : vector<16x8xf32> -> vector<8x16xf32>
    %cst_193 = arith.constant dense<0.000000e+00> : vector<16x16xf32>
    %299 = tpu.matmul %283, %298, %cst_193 {dimension_numbers = #tpu.dot_dimension_numbers<[1], [0], [0], [1], [0, 0, 1, 1], [], []>} : vector<16x8xf32>, vector<8x16xf32>, vector<16x16xf32> -> vector<16x16xf32>
    %cst_194 = arith.constant 0.353553385 : f32
    %300 = vector.broadcast %cst_194 : f32 to vector<16x16xf32>
    %301 = arith.mulf %299, %300 : vector<16x16xf32>
    %302 = arith.addf %301, %25 : vector<16x16xf32>
    %cst_195 = arith.constant dense<0xFF800000> : vector<16xf32>
    %303 = vector.multi_reduction <maximumf>, %302, %cst_195 [1] : vector<16x16xf32> to vector<16xf32>
    %304 = vector.shape_cast %303 : vector<16xf32> to vector<16x1xf32>
    %305 = vector.broadcast %304 : vector<16x1xf32> to vector<16x16xf32>
    %306 = arith.subf %302, %305 : vector<16x16xf32>
    %307 = math.exp %306 : vector<16x16xf32>
    %cst_196 = arith.constant dense<0.000000e+00> : vector<16xf32>
    %308 = vector.multi_reduction <add>, %307, %cst_196 [1] : vector<16x16xf32> to vector<16xf32>
    %309 = vector.shape_cast %308 : vector<16xf32> to vector<16x1xf32>
    %310 = tpu.reciprocal %309 {approx = true} : vector<16x1xf32> -> vector<16x1xf32>
    %311 = vector.broadcast %310 : vector<16x1xf32> to vector<16x16xf32>
    %312 = arith.mulf %307, %311 : vector<16x16xf32>
    %cst_197 = arith.constant dense<0.000000e+00> : vector<16x8xf32>
    %313 = tpu.matmul %312, %297, %cst_197 {dimension_numbers = #tpu.dot_dimension_numbers<[1], [0], [0], [1], [0, 0, 1, 1], [], []>} : vector<16x16xf32>, vector<16x8xf32>, vector<16x8xf32> -> vector<16x8xf32>
    %c4_198 = arith.constant 4 : index
    %c0_199 = arith.constant 0 : index
    %c0_200 = arith.constant 0 : index
    %314 = vector.load %arg12[%c4_198, %c0_199, %c0_200] : memref<8x8x32xf32, #tpu.memory_space<vmem>>, vector<1x8x32xf32>
    %315 = vector.shape_cast %314 : vector<1x8x32xf32> to vector<8x32xf32>
    %cst_201 = arith.constant dense<0.000000e+00> : vector<16x32xf32>
    %316 = tpu.matmul %313, %315, %cst_201 {dimension_numbers = #tpu.dot_dimension_numbers<[1], [0], [0], [1], [0, 0, 1, 1], [], []>} : vector<16x8xf32>, vector<8x32xf32>, vector<16x32xf32> -> vector<16x32xf32>
    %317 = arith.addf %276, %316 : vector<16x32xf32>
    %c5 = arith.constant 5 : index
    %c0_202 = arith.constant 0 : index
    %c0_203 = arith.constant 0 : index
    %318 = vector.load %arg6[%c5, %c0_202, %c0_203] : memref<8x32x8xf32, #tpu.memory_space<vmem>>, vector<1x32x8xf32>
    %319 = vector.shape_cast %318 : vector<1x32x8xf32> to vector<32x8xf32>
    %cst_204 = arith.constant dense<0.000000e+00> : vector<16x8xf32>
    %320 = tpu.matmul %275, %319, %cst_204 {dimension_numbers = #tpu.dot_dimension_numbers<[1], [0], [0], [1], [0, 0, 1, 1], [], []>} : vector<16x32xf32>, vector<32x8xf32>, vector<16x8xf32> -> vector<16x8xf32>
    %c5_205 = arith.constant 5 : index
    %c0_206 = arith.constant 0 : index
    %c0_207 = arith.constant 0 : index
    %321 = vector.load %arg7[%c5_205, %c0_206, %c0_207] : memref<8x1x8xf32, #tpu.memory_space<vmem>>, vector<1x1x8xf32>
    %322 = vector.shape_cast %321 : vector<1x1x8xf32> to vector<1x8xf32>
    %323 = vector.broadcast %322 : vector<1x8xf32> to vector<16x8xf32>
    %324 = arith.addf %320, %323 : vector<16x8xf32>
    %c5_208 = arith.constant 5 : index
    %c0_209 = arith.constant 0 : index
    %c0_210 = arith.constant 0 : index
    %325 = vector.load %arg8[%c5_208, %c0_209, %c0_210] : memref<8x32x8xf32, #tpu.memory_space<vmem>>, vector<1x32x8xf32>
    %326 = vector.shape_cast %325 : vector<1x32x8xf32> to vector<32x8xf32>
    %cst_211 = arith.constant dense<0.000000e+00> : vector<16x8xf32>
    %327 = tpu.matmul %275, %326, %cst_211 {dimension_numbers = #tpu.dot_dimension_numbers<[1], [0], [0], [1], [0, 0, 1, 1], [], []>} : vector<16x32xf32>, vector<32x8xf32>, vector<16x8xf32> -> vector<16x8xf32>
    %c5_212 = arith.constant 5 : index
    %c0_213 = arith.constant 0 : index
    %c0_214 = arith.constant 0 : index
    %328 = vector.load %arg9[%c5_212, %c0_213, %c0_214] : memref<8x1x8xf32, #tpu.memory_space<vmem>>, vector<1x1x8xf32>
    %329 = vector.shape_cast %328 : vector<1x1x8xf32> to vector<1x8xf32>
    %330 = vector.broadcast %329 : vector<1x8xf32> to vector<16x8xf32>
    %331 = arith.addf %327, %330 : vector<16x8xf32>
    %c5_215 = arith.constant 5 : index
    %c0_216 = arith.constant 0 : index
    %c0_217 = arith.constant 0 : index
    %332 = vector.load %arg10[%c5_215, %c0_216, %c0_217] : memref<8x32x8xf32, #tpu.memory_space<vmem>>, vector<1x32x8xf32>
    %333 = vector.shape_cast %332 : vector<1x32x8xf32> to vector<32x8xf32>
    %cst_218 = arith.constant dense<0.000000e+00> : vector<16x8xf32>
    %334 = tpu.matmul %275, %333, %cst_218 {dimension_numbers = #tpu.dot_dimension_numbers<[1], [0], [0], [1], [0, 0, 1, 1], [], []>} : vector<16x32xf32>, vector<32x8xf32>, vector<16x8xf32> -> vector<16x8xf32>
    %c5_219 = arith.constant 5 : index
    %c0_220 = arith.constant 0 : index
    %c0_221 = arith.constant 0 : index
    %335 = vector.load %arg11[%c5_219, %c0_220, %c0_221] : memref<8x1x8xf32, #tpu.memory_space<vmem>>, vector<1x1x8xf32>
    %336 = vector.shape_cast %335 : vector<1x1x8xf32> to vector<1x8xf32>
    %337 = vector.broadcast %336 : vector<1x8xf32> to vector<16x8xf32>
    %338 = arith.addf %334, %337 : vector<16x8xf32>
    %339 = tpu.transpose %331, [1, 0] : vector<16x8xf32> -> vector<8x16xf32>
    %cst_222 = arith.constant dense<0.000000e+00> : vector<16x16xf32>
    %340 = tpu.matmul %324, %339, %cst_222 {dimension_numbers = #tpu.dot_dimension_numbers<[1], [0], [0], [1], [0, 0, 1, 1], [], []>} : vector<16x8xf32>, vector<8x16xf32>, vector<16x16xf32> -> vector<16x16xf32>
    %cst_223 = arith.constant 0.353553385 : f32
    %341 = vector.broadcast %cst_223 : f32 to vector<16x16xf32>
    %342 = arith.mulf %340, %341 : vector<16x16xf32>
    %343 = arith.addf %342, %25 : vector<16x16xf32>
    %cst_224 = arith.constant dense<0xFF800000> : vector<16xf32>
    %344 = vector.multi_reduction <maximumf>, %343, %cst_224 [1] : vector<16x16xf32> to vector<16xf32>
    %345 = vector.shape_cast %344 : vector<16xf32> to vector<16x1xf32>
    %346 = vector.broadcast %345 : vector<16x1xf32> to vector<16x16xf32>
    %347 = arith.subf %343, %346 : vector<16x16xf32>
    %348 = math.exp %347 : vector<16x16xf32>
    %cst_225 = arith.constant dense<0.000000e+00> : vector<16xf32>
    %349 = vector.multi_reduction <add>, %348, %cst_225 [1] : vector<16x16xf32> to vector<16xf32>
    %350 = vector.shape_cast %349 : vector<16xf32> to vector<16x1xf32>
    %351 = tpu.reciprocal %350 {approx = true} : vector<16x1xf32> -> vector<16x1xf32>
    %352 = vector.broadcast %351 : vector<16x1xf32> to vector<16x16xf32>
    %353 = arith.mulf %348, %352 : vector<16x16xf32>
    %cst_226 = arith.constant dense<0.000000e+00> : vector<16x8xf32>
    %354 = tpu.matmul %353, %338, %cst_226 {dimension_numbers = #tpu.dot_dimension_numbers<[1], [0], [0], [1], [0, 0, 1, 1], [], []>} : vector<16x16xf32>, vector<16x8xf32>, vector<16x8xf32> -> vector<16x8xf32>
    %c5_227 = arith.constant 5 : index
    %c0_228 = arith.constant 0 : index
    %c0_229 = arith.constant 0 : index
    %355 = vector.load %arg12[%c5_227, %c0_228, %c0_229] : memref<8x8x32xf32, #tpu.memory_space<vmem>>, vector<1x8x32xf32>
    %356 = vector.shape_cast %355 : vector<1x8x32xf32> to vector<8x32xf32>
    %cst_230 = arith.constant dense<0.000000e+00> : vector<16x32xf32>
    %357 = tpu.matmul %354, %356, %cst_230 {dimension_numbers = #tpu.dot_dimension_numbers<[1], [0], [0], [1], [0, 0, 1, 1], [], []>} : vector<16x8xf32>, vector<8x32xf32>, vector<16x32xf32> -> vector<16x32xf32>
    %358 = arith.addf %317, %357 : vector<16x32xf32>
    %c6 = arith.constant 6 : index
    %c0_231 = arith.constant 0 : index
    %c0_232 = arith.constant 0 : index
    %359 = vector.load %arg6[%c6, %c0_231, %c0_232] : memref<8x32x8xf32, #tpu.memory_space<vmem>>, vector<1x32x8xf32>
    %360 = vector.shape_cast %359 : vector<1x32x8xf32> to vector<32x8xf32>
    %cst_233 = arith.constant dense<0.000000e+00> : vector<16x8xf32>
    %361 = tpu.matmul %275, %360, %cst_233 {dimension_numbers = #tpu.dot_dimension_numbers<[1], [0], [0], [1], [0, 0, 1, 1], [], []>} : vector<16x32xf32>, vector<32x8xf32>, vector<16x8xf32> -> vector<16x8xf32>
    %c6_234 = arith.constant 6 : index
    %c0_235 = arith.constant 0 : index
    %c0_236 = arith.constant 0 : index
    %362 = vector.load %arg7[%c6_234, %c0_235, %c0_236] : memref<8x1x8xf32, #tpu.memory_space<vmem>>, vector<1x1x8xf32>
    %363 = vector.shape_cast %362 : vector<1x1x8xf32> to vector<1x8xf32>
    %364 = vector.broadcast %363 : vector<1x8xf32> to vector<16x8xf32>
    %365 = arith.addf %361, %364 : vector<16x8xf32>
    %c6_237 = arith.constant 6 : index
    %c0_238 = arith.constant 0 : index
    %c0_239 = arith.constant 0 : index
    %366 = vector.load %arg8[%c6_237, %c0_238, %c0_239] : memref<8x32x8xf32, #tpu.memory_space<vmem>>, vector<1x32x8xf32>
    %367 = vector.shape_cast %366 : vector<1x32x8xf32> to vector<32x8xf32>
    %cst_240 = arith.constant dense<0.000000e+00> : vector<16x8xf32>
    %368 = tpu.matmul %275, %367, %cst_240 {dimension_numbers = #tpu.dot_dimension_numbers<[1], [0], [0], [1], [0, 0, 1, 1], [], []>} : vector<16x32xf32>, vector<32x8xf32>, vector<16x8xf32> -> vector<16x8xf32>
    %c6_241 = arith.constant 6 : index
    %c0_242 = arith.constant 0 : index
    %c0_243 = arith.constant 0 : index
    %369 = vector.load %arg9[%c6_241, %c0_242, %c0_243] : memref<8x1x8xf32, #tpu.memory_space<vmem>>, vector<1x1x8xf32>
    %370 = vector.shape_cast %369 : vector<1x1x8xf32> to vector<1x8xf32>
    %371 = vector.broadcast %370 : vector<1x8xf32> to vector<16x8xf32>
    %372 = arith.addf %368, %371 : vector<16x8xf32>
    %c6_244 = arith.constant 6 : index
    %c0_245 = arith.constant 0 : index
    %c0_246 = arith.constant 0 : index
    %373 = vector.load %arg10[%c6_244, %c0_245, %c0_246] : memref<8x32x8xf32, #tpu.memory_space<vmem>>, vector<1x32x8xf32>
    %374 = vector.shape_cast %373 : vector<1x32x8xf32> to vector<32x8xf32>
    %cst_247 = arith.constant dense<0.000000e+00> : vector<16x8xf32>
    %375 = tpu.matmul %275, %374, %cst_247 {dimension_numbers = #tpu.dot_dimension_numbers<[1], [0], [0], [1], [0, 0, 1, 1], [], []>} : vector<16x32xf32>, vector<32x8xf32>, vector<16x8xf32> -> vector<16x8xf32>
    %c6_248 = arith.constant 6 : index
    %c0_249 = arith.constant 0 : index
    %c0_250 = arith.constant 0 : index
    %376 = vector.load %arg11[%c6_248, %c0_249, %c0_250] : memref<8x1x8xf32, #tpu.memory_space<vmem>>, vector<1x1x8xf32>
    %377 = vector.shape_cast %376 : vector<1x1x8xf32> to vector<1x8xf32>
    %378 = vector.broadcast %377 : vector<1x8xf32> to vector<16x8xf32>
    %379 = arith.addf %375, %378 : vector<16x8xf32>
    %380 = tpu.transpose %372, [1, 0] : vector<16x8xf32> -> vector<8x16xf32>
    %cst_251 = arith.constant dense<0.000000e+00> : vector<16x16xf32>
    %381 = tpu.matmul %365, %380, %cst_251 {dimension_numbers = #tpu.dot_dimension_numbers<[1], [0], [0], [1], [0, 0, 1, 1], [], []>} : vector<16x8xf32>, vector<8x16xf32>, vector<16x16xf32> -> vector<16x16xf32>
    %cst_252 = arith.constant 0.353553385 : f32
    %382 = vector.broadcast %cst_252 : f32 to vector<16x16xf32>
    %383 = arith.mulf %381, %382 : vector<16x16xf32>
    %384 = arith.addf %383, %25 : vector<16x16xf32>
    %cst_253 = arith.constant dense<0xFF800000> : vector<16xf32>
    %385 = vector.multi_reduction <maximumf>, %384, %cst_253 [1] : vector<16x16xf32> to vector<16xf32>
    %386 = vector.shape_cast %385 : vector<16xf32> to vector<16x1xf32>
    %387 = vector.broadcast %386 : vector<16x1xf32> to vector<16x16xf32>
    %388 = arith.subf %384, %387 : vector<16x16xf32>
    %389 = math.exp %388 : vector<16x16xf32>
    %cst_254 = arith.constant dense<0.000000e+00> : vector<16xf32>
    %390 = vector.multi_reduction <add>, %389, %cst_254 [1] : vector<16x16xf32> to vector<16xf32>
    %391 = vector.shape_cast %390 : vector<16xf32> to vector<16x1xf32>
    %392 = tpu.reciprocal %391 {approx = true} : vector<16x1xf32> -> vector<16x1xf32>
    %393 = vector.broadcast %392 : vector<16x1xf32> to vector<16x16xf32>
    %394 = arith.mulf %389, %393 : vector<16x16xf32>
    %cst_255 = arith.constant dense<0.000000e+00> : vector<16x8xf32>
    %395 = tpu.matmul %394, %379, %cst_255 {dimension_numbers = #tpu.dot_dimension_numbers<[1], [0], [0], [1], [0, 0, 1, 1], [], []>} : vector<16x16xf32>, vector<16x8xf32>, vector<16x8xf32> -> vector<16x8xf32>
    %c6_256 = arith.constant 6 : index
    %c0_257 = arith.constant 0 : index
    %c0_258 = arith.constant 0 : index
    %396 = vector.load %arg12[%c6_256, %c0_257, %c0_258] : memref<8x8x32xf32, #tpu.memory_space<vmem>>, vector<1x8x32xf32>
    %397 = vector.shape_cast %396 : vector<1x8x32xf32> to vector<8x32xf32>
    %cst_259 = arith.constant dense<0.000000e+00> : vector<16x32xf32>
    %398 = tpu.matmul %395, %397, %cst_259 {dimension_numbers = #tpu.dot_dimension_numbers<[1], [0], [0], [1], [0, 0, 1, 1], [], []>} : vector<16x8xf32>, vector<8x32xf32>, vector<16x32xf32> -> vector<16x32xf32>
    %399 = arith.addf %358, %398 : vector<16x32xf32>
    %c7 = arith.constant 7 : index
    %c0_260 = arith.constant 0 : index
    %c0_261 = arith.constant 0 : index
    %400 = vector.load %arg6[%c7, %c0_260, %c0_261] : memref<8x32x8xf32, #tpu.memory_space<vmem>>, vector<1x32x8xf32>
    %401 = vector.shape_cast %400 : vector<1x32x8xf32> to vector<32x8xf32>
    %cst_262 = arith.constant dense<0.000000e+00> : vector<16x8xf32>
    %402 = tpu.matmul %275, %401, %cst_262 {dimension_numbers = #tpu.dot_dimension_numbers<[1], [0], [0], [1], [0, 0, 1, 1], [], []>} : vector<16x32xf32>, vector<32x8xf32>, vector<16x8xf32> -> vector<16x8xf32>
    %c7_263 = arith.constant 7 : index
    %c0_264 = arith.constant 0 : index
    %c0_265 = arith.constant 0 : index
    %403 = vector.load %arg7[%c7_263, %c0_264, %c0_265] : memref<8x1x8xf32, #tpu.memory_space<vmem>>, vector<1x1x8xf32>
    %404 = vector.shape_cast %403 : vector<1x1x8xf32> to vector<1x8xf32>
    %405 = vector.broadcast %404 : vector<1x8xf32> to vector<16x8xf32>
    %406 = arith.addf %402, %405 : vector<16x8xf32>
    %c7_266 = arith.constant 7 : index
    %c0_267 = arith.constant 0 : index
    %c0_268 = arith.constant 0 : index
    %407 = vector.load %arg8[%c7_266, %c0_267, %c0_268] : memref<8x32x8xf32, #tpu.memory_space<vmem>>, vector<1x32x8xf32>
    %408 = vector.shape_cast %407 : vector<1x32x8xf32> to vector<32x8xf32>
    %cst_269 = arith.constant dense<0.000000e+00> : vector<16x8xf32>
    %409 = tpu.matmul %275, %408, %cst_269 {dimension_numbers = #tpu.dot_dimension_numbers<[1], [0], [0], [1], [0, 0, 1, 1], [], []>} : vector<16x32xf32>, vector<32x8xf32>, vector<16x8xf32> -> vector<16x8xf32>
    %c7_270 = arith.constant 7 : index
    %c0_271 = arith.constant 0 : index
    %c0_272 = arith.constant 0 : index
    %410 = vector.load %arg9[%c7_270, %c0_271, %c0_272] : memref<8x1x8xf32, #tpu.memory_space<vmem>>, vector<1x1x8xf32>
    %411 = vector.shape_cast %410 : vector<1x1x8xf32> to vector<1x8xf32>
    %412 = vector.broadcast %411 : vector<1x8xf32> to vector<16x8xf32>
    %413 = arith.addf %409, %412 : vector<16x8xf32>
    %c7_273 = arith.constant 7 : index
    %c0_274 = arith.constant 0 : index
    %c0_275 = arith.constant 0 : index
    %414 = vector.load %arg10[%c7_273, %c0_274, %c0_275] : memref<8x32x8xf32, #tpu.memory_space<vmem>>, vector<1x32x8xf32>
    %415 = vector.shape_cast %414 : vector<1x32x8xf32> to vector<32x8xf32>
    %cst_276 = arith.constant dense<0.000000e+00> : vector<16x8xf32>
    %416 = tpu.matmul %275, %415, %cst_276 {dimension_numbers = #tpu.dot_dimension_numbers<[1], [0], [0], [1], [0, 0, 1, 1], [], []>} : vector<16x32xf32>, vector<32x8xf32>, vector<16x8xf32> -> vector<16x8xf32>
    %c7_277 = arith.constant 7 : index
    %c0_278 = arith.constant 0 : index
    %c0_279 = arith.constant 0 : index
    %417 = vector.load %arg11[%c7_277, %c0_278, %c0_279] : memref<8x1x8xf32, #tpu.memory_space<vmem>>, vector<1x1x8xf32>
    %418 = vector.shape_cast %417 : vector<1x1x8xf32> to vector<1x8xf32>
    %419 = vector.broadcast %418 : vector<1x8xf32> to vector<16x8xf32>
    %420 = arith.addf %416, %419 : vector<16x8xf32>
    %421 = tpu.transpose %413, [1, 0] : vector<16x8xf32> -> vector<8x16xf32>
    %cst_280 = arith.constant dense<0.000000e+00> : vector<16x16xf32>
    %422 = tpu.matmul %406, %421, %cst_280 {dimension_numbers = #tpu.dot_dimension_numbers<[1], [0], [0], [1], [0, 0, 1, 1], [], []>} : vector<16x8xf32>, vector<8x16xf32>, vector<16x16xf32> -> vector<16x16xf32>
    %cst_281 = arith.constant 0.353553385 : f32
    %423 = vector.broadcast %cst_281 : f32 to vector<16x16xf32>
    %424 = arith.mulf %422, %423 : vector<16x16xf32>
    %425 = arith.addf %424, %25 : vector<16x16xf32>
    %cst_282 = arith.constant dense<0xFF800000> : vector<16xf32>
    %426 = vector.multi_reduction <maximumf>, %425, %cst_282 [1] : vector<16x16xf32> to vector<16xf32>
    %427 = vector.shape_cast %426 : vector<16xf32> to vector<16x1xf32>
    %428 = vector.broadcast %427 : vector<16x1xf32> to vector<16x16xf32>
    %429 = arith.subf %425, %428 : vector<16x16xf32>
    %430 = math.exp %429 : vector<16x16xf32>
    %cst_283 = arith.constant dense<0.000000e+00> : vector<16xf32>
    %431 = vector.multi_reduction <add>, %430, %cst_283 [1] : vector<16x16xf32> to vector<16xf32>
    %432 = vector.shape_cast %431 : vector<16xf32> to vector<16x1xf32>
    %433 = tpu.reciprocal %432 {approx = true} : vector<16x1xf32> -> vector<16x1xf32>
    %434 = vector.broadcast %433 : vector<16x1xf32> to vector<16x16xf32>
    %435 = arith.mulf %430, %434 : vector<16x16xf32>
    %cst_284 = arith.constant dense<0.000000e+00> : vector<16x8xf32>
    %436 = tpu.matmul %435, %420, %cst_284 {dimension_numbers = #tpu.dot_dimension_numbers<[1], [0], [0], [1], [0, 0, 1, 1], [], []>} : vector<16x16xf32>, vector<16x8xf32>, vector<16x8xf32> -> vector<16x8xf32>
    %c7_285 = arith.constant 7 : index
    %c0_286 = arith.constant 0 : index
    %c0_287 = arith.constant 0 : index
    %437 = vector.load %arg12[%c7_285, %c0_286, %c0_287] : memref<8x8x32xf32, #tpu.memory_space<vmem>>, vector<1x8x32xf32>
    %438 = vector.shape_cast %437 : vector<1x8x32xf32> to vector<8x32xf32>
    %cst_288 = arith.constant dense<0.000000e+00> : vector<16x32xf32>
    %439 = tpu.matmul %436, %438, %cst_288 {dimension_numbers = #tpu.dot_dimension_numbers<[1], [0], [0], [1], [0, 0, 1, 1], [], []>} : vector<16x8xf32>, vector<8x32xf32>, vector<16x32xf32> -> vector<16x32xf32>
    %440 = arith.addf %399, %439 : vector<16x32xf32>
    %c1_289 = arith.constant 1 : index
    %c0_290 = arith.constant 0 : index
    %c0_291 = arith.constant 0 : index
    %441 = vector.load %arg13[%c1_289, %c0_290, %c0_291] : memref<2x1x32xf32, #tpu.memory_space<vmem>>, vector<1x1x32xf32>
    %442 = vector.shape_cast %441 : vector<1x1x32xf32> to vector<1x32xf32>
    %443 = vector.broadcast %442 : vector<1x32xf32> to vector<16x32xf32>
    %444 = arith.addf %440, %443 : vector<16x32xf32>
    %445 = arith.addf %444, %275 : vector<16x32xf32>
    %c1_292 = arith.constant 1 : index
    %c0_293 = arith.constant 0 : index
    %c0_294 = arith.constant 0 : index
    %446 = vector.load %arg14[%c1_292, %c0_293, %c0_294] : memref<2x1x32xf32, #tpu.memory_space<vmem>>, vector<1x1x32xf32>
    %447 = vector.shape_cast %446 : vector<1x1x32xf32> to vector<1x32xf32>
    %c1_295 = arith.constant 1 : index
    %c0_296 = arith.constant 0 : index
    %c0_297 = arith.constant 0 : index
    %448 = vector.load %arg15[%c1_295, %c0_296, %c0_297] : memref<2x1x32xf32, #tpu.memory_space<vmem>>, vector<1x1x32xf32>
    %449 = vector.shape_cast %448 : vector<1x1x32xf32> to vector<1x32xf32>
    %cst_298 = arith.constant dense<0.000000e+00> : vector<16xf32>
    %450 = vector.multi_reduction <add>, %445, %cst_298 [1] : vector<16x32xf32> to vector<16xf32>
    %451 = vector.shape_cast %450 : vector<16xf32> to vector<16x1xf32>
    %cst_299 = arith.constant 3.200000e+01 : f32
    %452 = vector.broadcast %cst_299 : f32 to vector<16x1xf32>
    %453 = arith.divf %451, %452 : vector<16x1xf32>
    %454 = vector.broadcast %453 : vector<16x1xf32> to vector<16x32xf32>
    %455 = arith.subf %445, %454 : vector<16x32xf32>
    %456 = arith.mulf %455, %455 : vector<16x32xf32>
    %cst_300 = arith.constant dense<0.000000e+00> : vector<16xf32>
    %457 = vector.multi_reduction <add>, %456, %cst_300 [1] : vector<16x32xf32> to vector<16xf32>
    %458 = vector.shape_cast %457 : vector<16xf32> to vector<16x1xf32>
    %cst_301 = arith.constant 3.200000e+01 : f32
    %459 = vector.broadcast %cst_301 : f32 to vector<16x1xf32>
    %460 = arith.divf %458, %459 : vector<16x1xf32>
    %461 = vector.broadcast %453 : vector<16x1xf32> to vector<16x32xf32>
    %462 = arith.subf %445, %461 : vector<16x32xf32>
    %cst_302 = arith.constant 9.99999974E-6 : f32
    %463 = vector.broadcast %cst_302 : f32 to vector<16x1xf32>
    %464 = arith.addf %460, %463 : vector<16x1xf32>
    %465 = math.rsqrt %464 : vector<16x1xf32>
    %466 = vector.broadcast %465 : vector<16x1xf32> to vector<16x32xf32>
    %467 = arith.mulf %462, %466 : vector<16x32xf32>
    %468 = vector.broadcast %447 : vector<1x32xf32> to vector<16x32xf32>
    %469 = arith.mulf %467, %468 : vector<16x32xf32>
    %470 = vector.broadcast %449 : vector<1x32xf32> to vector<16x32xf32>
    %471 = arith.addf %469, %470 : vector<16x32xf32>
    %c1_303 = arith.constant 1 : index
    %c0_304 = arith.constant 0 : index
    %c0_305 = arith.constant 0 : index
    %472 = vector.load %arg16[%c1_303, %c0_304, %c0_305] : memref<2x32x64xf32, #tpu.memory_space<vmem>>, vector<1x32x64xf32>
    %473 = vector.shape_cast %472 : vector<1x32x64xf32> to vector<32x64xf32>
    %cst_306 = arith.constant dense<0.000000e+00> : vector<16x64xf32>
    %474 = tpu.matmul %471, %473, %cst_306 {dimension_numbers = #tpu.dot_dimension_numbers<[1], [0], [0], [1], [0, 0, 1, 1], [], []>} : vector<16x32xf32>, vector<32x64xf32>, vector<16x64xf32> -> vector<16x64xf32>
    %c1_307 = arith.constant 1 : index
    %c0_308 = arith.constant 0 : index
    %c0_309 = arith.constant 0 : index
    %475 = vector.load %arg17[%c1_307, %c0_308, %c0_309] : memref<2x1x64xf32, #tpu.memory_space<vmem>>, vector<1x1x64xf32>
    %476 = vector.shape_cast %475 : vector<1x1x64xf32> to vector<1x64xf32>
    %477 = vector.broadcast %476 : vector<1x64xf32> to vector<16x64xf32>
    %478 = arith.addf %474, %477 : vector<16x64xf32>
    %479 = arith.mulf %478, %478 : vector<16x64xf32>
    %480 = arith.mulf %478, %479 : vector<16x64xf32>
    %cst_310 = arith.constant 4.471500e-02 : f32
    %481 = vector.broadcast %cst_310 : f32 to vector<16x64xf32>
    %482 = arith.mulf %481, %480 : vector<16x64xf32>
    %483 = arith.addf %478, %482 : vector<16x64xf32>
    %cst_311 = arith.constant 0.797884583 : f32
    %484 = vector.broadcast %cst_311 : f32 to vector<16x64xf32>
    %485 = arith.mulf %484, %483 : vector<16x64xf32>
    %486 = math.tanh %485 : vector<16x64xf32>
    %cst_312 = arith.constant 1.000000e+00 : f32
    %487 = vector.broadcast %cst_312 : f32 to vector<16x64xf32>
    %488 = arith.addf %487, %486 : vector<16x64xf32>
    %cst_313 = arith.constant 5.000000e-01 : f32
    %489 = vector.broadcast %cst_313 : f32 to vector<16x64xf32>
    %490 = arith.mulf %489, %488 : vector<16x64xf32>
    %491 = arith.mulf %478, %490 : vector<16x64xf32>
    %c1_314 = arith.constant 1 : index
    %c0_315 = arith.constant 0 : index
    %c0_316 = arith.constant 0 : index
    %492 = vector.load %arg18[%c1_314, %c0_315, %c0_316] : memref<2x64x32xf32, #tpu.memory_space<vmem>>, vector<1x64x32xf32>
    %493 = vector.shape_cast %492 : vector<1x64x32xf32> to vector<64x32xf32>
    %cst_317 = arith.constant dense<0.000000e+00> : vector<16x32xf32>
    %494 = tpu.matmul %491, %493, %cst_317 {dimension_numbers = #tpu.dot_dimension_numbers<[1], [0], [0], [1], [0, 0, 1, 1], [], []>} : vector<16x64xf32>, vector<64x32xf32>, vector<16x32xf32> -> vector<16x32xf32>
    %c1_318 = arith.constant 1 : index
    %c0_319 = arith.constant 0 : index
    %c0_320 = arith.constant 0 : index
    %495 = vector.load %arg19[%c1_318, %c0_319, %c0_320] : memref<2x1x32xf32, #tpu.memory_space<vmem>>, vector<1x1x32xf32>
    %496 = vector.shape_cast %495 : vector<1x1x32xf32> to vector<1x32xf32>
    %497 = vector.broadcast %496 : vector<1x32xf32> to vector<16x32xf32>
    %498 = arith.addf %494, %497 : vector<16x32xf32>
    %499 = arith.addf %498, %471 : vector<16x32xf32>
    %c1_321 = arith.constant 1 : index
    %c0_322 = arith.constant 0 : index
    %c0_323 = arith.constant 0 : index
    %500 = vector.load %arg20[%c1_321, %c0_322, %c0_323] : memref<2x1x32xf32, #tpu.memory_space<vmem>>, vector<1x1x32xf32>
    %501 = vector.shape_cast %500 : vector<1x1x32xf32> to vector<1x32xf32>
    %c1_324 = arith.constant 1 : index
    %c0_325 = arith.constant 0 : index
    %c0_326 = arith.constant 0 : index
    %502 = vector.load %arg21[%c1_324, %c0_325, %c0_326] : memref<2x1x32xf32, #tpu.memory_space<vmem>>, vector<1x1x32xf32>
    %503 = vector.shape_cast %502 : vector<1x1x32xf32> to vector<1x32xf32>
    %cst_327 = arith.constant dense<0.000000e+00> : vector<16xf32>
    %504 = vector.multi_reduction <add>, %499, %cst_327 [1] : vector<16x32xf32> to vector<16xf32>
    %505 = vector.shape_cast %504 : vector<16xf32> to vector<16x1xf32>
    %cst_328 = arith.constant 3.200000e+01 : f32
    %506 = vector.broadcast %cst_328 : f32 to vector<16x1xf32>
    %507 = arith.divf %505, %506 : vector<16x1xf32>
    %508 = vector.broadcast %507 : vector<16x1xf32> to vector<16x32xf32>
    %509 = arith.subf %499, %508 : vector<16x32xf32>
    %510 = arith.mulf %509, %509 : vector<16x32xf32>
    %cst_329 = arith.constant dense<0.000000e+00> : vector<16xf32>
    %511 = vector.multi_reduction <add>, %510, %cst_329 [1] : vector<16x32xf32> to vector<16xf32>
    %512 = vector.shape_cast %511 : vector<16xf32> to vector<16x1xf32>
    %cst_330 = arith.constant 3.200000e+01 : f32
    %513 = vector.broadcast %cst_330 : f32 to vector<16x1xf32>
    %514 = arith.divf %512, %513 : vector<16x1xf32>
    %515 = vector.broadcast %507 : vector<16x1xf32> to vector<16x32xf32>
    %516 = arith.subf %499, %515 : vector<16x32xf32>
    %cst_331 = arith.constant 9.99999974E-6 : f32
    %517 = vector.broadcast %cst_331 : f32 to vector<16x1xf32>
    %518 = arith.addf %514, %517 : vector<16x1xf32>
    %519 = math.rsqrt %518 : vector<16x1xf32>
    %520 = vector.broadcast %519 : vector<16x1xf32> to vector<16x32xf32>
    %521 = arith.mulf %516, %520 : vector<16x32xf32>
    %522 = vector.broadcast %501 : vector<1x32xf32> to vector<16x32xf32>
    %523 = arith.mulf %521, %522 : vector<16x32xf32>
    %524 = vector.broadcast %503 : vector<1x32xf32> to vector<16x32xf32>
    %525 = arith.addf %523, %524 : vector<16x32xf32>
    %c0_332 = arith.constant 0 : index
    %c0_333 = arith.constant 0 : index
    %526 = vector.load %arg3[%c0_332, %c0_333] : memref<2x16xf32, #tpu.memory_space<vmem>>, vector<2x16xf32>
    %cst_334 = arith.constant dense<0.000000e+00> : vector<2x32xf32>
    %527 = tpu.matmul %526, %525, %cst_334 {dimension_numbers = #tpu.dot_dimension_numbers<[1], [0], [0], [1], [0, 0, 1, 1], [], []>} : vector<2x16xf32>, vector<16x32xf32>, vector<2x32xf32> -> vector<2x32xf32>
    %c0_335 = arith.constant 0 : index
    %c0_336 = arith.constant 0 : index
    %528 = vector.load %arg22[%c0_335, %c0_336] : memref<32x1xf32, #tpu.memory_space<vmem>>, vector<32x1xf32>
    %cst_337 = arith.constant dense<0.000000e+00> : vector<2x1xf32>
    %529 = tpu.matmul %527, %528, %cst_337 {dimension_numbers = #tpu.dot_dimension_numbers<[1], [0], [0], [1], [0, 0, 1, 1], [], []>} : vector<2x32xf32>, vector<32x1xf32>, vector<2x1xf32> -> vector<2x1xf32>
    %c0_338 = arith.constant 0 : index
    %c0_339 = arith.constant 0 : index
    %530 = vector.load %arg23[%c0_338, %c0_339] : memref<1x1xf32, #tpu.memory_space<vmem>>, vector<1x1xf32>
    %531 = vector.broadcast %530 : vector<1x1xf32> to vector<2x1xf32>
    %532 = arith.addf %529, %531 : vector<2x1xf32>
    %c0_340 = arith.constant 0 : index
    %c0_341 = arith.constant 0 : index
    %533 = vector.load %arg24[%c0_340, %c0_341] : memref<2x1xf32, #tpu.memory_space<vmem>>, vector<2x1xf32>
    tpu.vector_store %arg24[%c0_340, %c0_341], %532 {strides = array<i32>} : memref<2x1xf32, #tpu.memory_space<vmem>>, vector<2x1xf32>,
    return
  }
  func.func @transform_0(%arg0: i32) -> (i32, i32) {
    %c0_i32 = arith.constant 0 : i32
    %c0_i32_0 = arith.constant 0 : i32
    %c0_i32_1 = arith.constant 0 : i32
    return %c0_i32, %c0_i32_0 : i32, i32
  }
  func.func @transform_1(%arg0: i32) -> (i32, i32) {
    %c0_i32 = arith.constant 0 : i32
    %c0_i32_0 = arith.constant 0 : i32
    %c0_i32_1 = arith.constant 0 : i32
    return %c0_i32, %c0_i32_0 : i32, i32
  }
  func.func @transform_2(%arg0: i32) -> (i32, i32) {
    %c0_i32 = arith.constant 0 : i32
    %c0_i32_0 = arith.constant 0 : i32
    %c0_i32_1 = arith.constant 0 : i32
    return %c0_i32, %c0_i32_0 : i32, i32
  }
  func.func @transform_3(%arg0: i32) -> (i32, i32) {
    %c0_i32 = arith.constant 0 : i32
    %c0_i32_0 = arith.constant 0 : i32
    %c0_i32_1 = arith.constant 0 : i32
    return %c0_i32, %c0_i32_0 : i32, i32
  }
  func.func @transform_4(%arg0: i32) -> (i32, i32) {
    %c0_i32 = arith.constant 0 : i32
    %c0_i32_0 = arith.constant 0 : i32
    %c0_i32_1 = arith.constant 0 : i32
    return %c0_i32, %c0_i32_0 : i32, i32
  }
  func.func @transform_5(%arg0: i32) -> (i32, i32, i32) {
    %c0_i32 = arith.constant 0 : i32
    %c0_i32_0 = arith.constant 0 : i32
    %c0_i32_1 = arith.constant 0 : i32
    %c0_i32_2 = arith.constant 0 : i32
    return %c0_i32, %c0_i32_0, %c0_i32_1 : i32, i32, i32
  }
  func.func @transform_6(%arg0: i32) -> (i32, i32, i32) {
    %c0_i32 = arith.constant 0 : i32
    %c0_i32_0 = arith.constant 0 : i32
    %c0_i32_1 = arith.constant 0 : i32
    %c0_i32_2 = arith.constant 0 : i32
    return %c0_i32, %c0_i32_0, %c0_i32_1 : i32, i32, i32
  }
  func.func @transform_7(%arg0: i32) -> (i32, i32, i32) {
    %c0_i32 = arith.constant 0 : i32
    %c0_i32_0 = arith.constant 0 : i32
    %c0_i32_1 = arith.constant 0 : i32
    %c0_i32_2 = arith.constant 0 : i32
    return %c0_i32, %c0_i32_0, %c0_i32_1 : i32, i32, i32
  }
  func.func @transform_8(%arg0: i32) -> (i32, i32, i32) {
    %c0_i32 = arith.constant 0 : i32
    %c0_i32_0 = arith.constant 0 : i32
    %c0_i32_1 = arith.constant 0 : i32
    %c0_i32_2 = arith.constant 0 : i32
    return %c0_i32, %c0_i32_0, %c0_i32_1 : i32, i32, i32
  }
  func.func @transform_9(%arg0: i32) -> (i32, i32, i32) {
    %c0_i32 = arith.constant 0 : i32
    %c0_i32_0 = arith.constant 0 : i32
    %c0_i32_1 = arith.constant 0 : i32
    %c0_i32_2 = arith.constant 0 : i32
    return %c0_i32, %c0_i32_0, %c0_i32_1 : i32, i32, i32
  }
  func.func @transform_10(%arg0: i32) -> (i32, i32, i32) {
    %c0_i32 = arith.constant 0 : i32
    %c0_i32_0 = arith.constant 0 : i32
    %c0_i32_1 = arith.constant 0 : i32
    %c0_i32_2 = arith.constant 0 : i32
    return %c0_i32, %c0_i32_0, %c0_i32_1 : i32, i32, i32
  }
  func.func @transform_11(%arg0: i32) -> (i32, i32, i32) {
    %c0_i32 = arith.constant 0 : i32
    %c0_i32_0 = arith.constant 0 : i32
    %c0_i32_1 = arith.constant 0 : i32
    %c0_i32_2 = arith.constant 0 : i32
    return %c0_i32, %c0_i32_0, %c0_i32_1 : i32, i32, i32
  }
  func.func @transform_12(%arg0: i32) -> (i32, i32, i32) {
    %c0_i32 = arith.constant 0 : i32
    %c0_i32_0 = arith.constant 0 : i32
    %c0_i32_1 = arith.constant 0 : i32
    %c0_i32_2 = arith.constant 0 : i32
    return %c0_i32, %c0_i32_0, %c0_i32_1 : i32, i32, i32
  }
  func.func @transform_13(%arg0: i32) -> (i32, i32, i32) {
    %c0_i32 = arith.constant 0 : i32
    %c0_i32_0 = arith.constant 0 : i32
    %c0_i32_1 = arith.constant 0 : i32
    %c0_i32_2 = arith.constant 0 : i32
    return %c0_i32, %c0_i32_0, %c0_i32_1 : i32, i32, i32
  }
  func.func @transform_14(%arg0: i32) -> (i32, i32, i32) {
    %c0_i32 = arith.constant 0 : i32
    %c0_i32_0 = arith.constant 0 : i32
    %c0_i32_1 = arith.constant 0 : i32
    %c0_i32_2 = arith.constant 0 : i32
    return %c0_i32, %c0_i32_0, %c0_i32_1 : i32, i32, i32
  }
  func.func @transform_15(%arg0: i32) -> (i32, i32, i32) {
    %c0_i32 = arith.constant 0 : i32
    %c0_i32_0 = arith.constant 0 : i32
    %c0_i32_1 = arith.constant 0 : i32
    %c0_i32_2 = arith.constant 0 : i32
    return %c0_i32, %c0_i32_0, %c0_i32_1 : i32, i32, i32
  }
  func.func @transform_16(%arg0: i32) -> (i32, i32, i32) {
    %c0_i32 = arith.constant 0 : i32
    %c0_i32_0 = arith.constant 0 : i32
    %c0_i32_1 = arith.constant 0 : i32
    %c0_i32_2 = arith.constant 0 : i32
    return %c0_i32, %c0_i32_0, %c0_i32_1 : i32, i32, i32
  }
  func.func @transform_17(%arg0: i32) -> (i32, i32, i32) {
    %c0_i32 = arith.constant 0 : i32
    %c0_i32_0 = arith.constant 0 : i32
    %c0_i32_1 = arith.constant 0 : i32
    %c0_i32_2 = arith.constant 0 : i32
    return %c0_i32, %c0_i32_0, %c0_i32_1 : i32, i32, i32
  }
  func.func @transform_18(%arg0: i32) -> (i32, i32, i32) {
    %c0_i32 = arith.constant 0 : i32
    %c0_i32_0 = arith.constant 0 : i32
    %c0_i32_1 = arith.constant 0 : i32
    %c0_i32_2 = arith.constant 0 : i32
    return %c0_i32, %c0_i32_0, %c0_i32_1 : i32, i32, i32
  }
  func.func @transform_19(%arg0: i32) -> (i32, i32, i32) {
    %c0_i32 = arith.constant 0 : i32
    %c0_i32_0 = arith.constant 0 : i32
    %c0_i32_1 = arith.constant 0 : i32
    %c0_i32_2 = arith.constant 0 : i32
    return %c0_i32, %c0_i32_0, %c0_i32_1 : i32, i32, i32
  }
  func.func @transform_20(%arg0: i32) -> (i32, i32, i32) {
    %c0_i32 = arith.constant 0 : i32
    %c0_i32_0 = arith.constant 0 : i32
    %c0_i32_1 = arith.constant 0 : i32
    %c0_i32_2 = arith.constant 0 : i32
    return %c0_i32, %c0_i32_0, %c0_i32_1 : i32, i32, i32
  }
  func.func @transform_21(%arg0: i32) -> (i32, i32) {
    %c0_i32 = arith.constant 0 : i32
    %c0_i32_0 = arith.constant 0 : i32
    %c0_i32_1 = arith.constant 0 : i32
    return %c0_i32, %c0_i32_0 : i32, i32
  }
  func.func @transform_22(%arg0: i32) -> (i32, i32) {
    %c0_i32 = arith.constant 0 : i32
    %c0_i32_0 = arith.constant 0 : i32
    %c0_i32_1 = arith.constant 0 : i32
    return %c0_i32, %c0_i32_0 : i32, i32
  }
  func.func @transform_23(%arg0: i32) -> (i32, i32) {
    %c0_i32 = arith.constant 0 : i32
    %c0_i32_0 = arith.constant 0 : i32
    %c0_i32_1 = arith.constant 0 : i32
    return %c0_i32, %c0_i32_0 : i32, i32
  }
}

</mosaic_0001>

<llo_original>
// kernel: eq.22
$region0: #{eq.22}
  %s0 = inlined_call_operand.vmem [shape: s32[2,8], index: 0, kind: input, shape index: {}]
  %s1 = inlined_call_operand.vmem [shape: s32[16], index: 1, kind: output, shape index: {}]
  $region1: #{eq.22} parent=0
    #allocation0 [shape = 'u8[4096]{0}', space=vmem, size = 0x1000, scoped, tag = 'scoped mem for output reshape']
    #allocation1 [shape = 'u8[4096]{0}', space=vmem, size = 0x1000, scoped, tag = 'scoped mem for input reshape']
    %s3 = ssub.s32 4, 1
    %v4 = vld [vmem:[%s0] sm:%s3]
    %5 = vst [vmem:[#allocation1] sm:%s3] %v4
    %v6 = vld [vmem:[#allocation1] sm:$0x1]
    %vm7 = vcmask 64512
    %8 = vst.msk [vmem:[#allocation0] sm:$0x1] %vm7, %v6
    %s9 = scalar_lea.vmem [#allocation1], 1
    %v10 = vld [vmem:[%s9] sm:$0x1]
    %11 = vrot.lane.b32.xlu0 %v10, 8
    %v12 = vpop.permute.xlu0 %11
    %vm13 = vcmask 130112
    %14 = vst.msk [vmem:[#allocation0] sm:$0x1] %vm13, %v12
    %s16 = ssub.s32 2, 1
    %v17 = vld [vmem:[#allocation0] sm:%s16]
    %s19 = ssub.s32 2, 1
    %20 = vst [vmem:[%s1] sm:%s19] %v17

// kernel: roberta_forward.1
$region0: #{roberta_forward.1}
  #allocation0 [shape = 'u32[]', space=smem, size = 0x4, offset = 0x4, fixed_abs, tag = 'smem constant byte address 0x4 - core index']
  #allocation1 [shape = 'u32[72,128]{1,0:T(1,128)}', space=vmem, size = 0x9000, scoped, tag = 'internal scratch']
  #allocation2 [shape = 'f32[1,1]{1,0:T(1,128)S(1)}', space=vmem, size = 0x200, scoped, tag = 'scoped memory for roberta_forward.1']
  %s0 = inlined_call_operand.vmem [shape: f32[16,32], index: 0, kind: input, shape index: {}]
  %s1 = inlined_call_operand.vmem [shape: f32[16,16], index: 1, kind: input, shape index: {}]
  %s2 = inlined_call_operand.vmem [shape: f32[2,16], index: 2, kind: input, shape index: {}]
  %s3 = inlined_call_operand.vmem [shape: f32[1,32], index: 3, kind: input, shape index: {}]
  %s4 = inlined_call_operand.vmem [shape: f32[1,32], index: 4, kind: input, shape index: {}]
  %s5 = inlined_call_operand.vmem [shape: f32[8,32,8], index: 5, kind: input, shape index: {}]
  %s6 = inlined_call_operand.vmem [shape: f32[8,1,8], index: 6, kind: input, shape index: {}]
  %s7 = inlined_call_operand.vmem [shape: f32[8,32,8], index: 7, kind: input, shape index: {}]
  %s8 = inlined_call_operand.vmem [shape: f32[8,1,8], index: 8, kind: input, shape index: {}]
  %s9 = inlined_call_operand.vmem [shape: f32[8,32,8], index: 9, kind: input, shape index: {}]
  %s10 = inlined_call_operand.vmem [shape: f32[8,1,8], index: 10, kind: input, shape index: {}]
  %s11 = inlined_call_operand.vmem [shape: f32[8,8,32], index: 11, kind: input, shape index: {}]
  %s12 = inlined_call_operand.vmem [shape: f32[2,1,32], index: 12, kind: input, shape index: {}]
  %s13 = inlined_call_operand.vmem [shape: f32[2,1,32], index: 13, kind: input, shape index: {}]
  %s14 = inlined_call_operand.vmem [shape: f32[2,1,32], index: 14, kind: input, shape index: {}]
  %s15 = inlined_call_operand.vmem [shape: f32[2,32,64], index: 15, kind: input, shape index: {}]
  %s16 = inlined_call_operand.vmem [shape: f32[2,1,64], index: 16, kind: input, shape index: {}]
  %s17 = inlined_call_operand.vmem [shape: f32[2,64,32], index: 17, kind: input, shape index: {}]
  %s18 = inlined_call_operand.vmem [shape: f32[2,1,32], index: 18, kind: input, shape index: {}]
  %s19 = inlined_call_operand.vmem [shape: f32[2,1,32], index: 19, kind: input, shape index: {}]
  %s20 = inlined_call_operand.vmem [shape: f32[2,1,32], index: 20, kind: input, shape index: {}]
  %s21 = inlined_call_operand.vmem [shape: f32[32,1], index: 21, kind: input, shape index: {}]
  %s22 = inlined_call_operand.<no memory space> [shape: f32[1,1], index: 22, kind: input, shape index: {}]
  %s23 = inlined_call_operand.vmem [shape: f32[2,1], index: 23, kind: output, shape index: {}]
  %s24 = sld [smem:[#allocation0]]
  $region102: #{roberta_forward.1} parent=0
    _
  %s26 = ssub.s32 1, %s24
  %s27 = scalar_select 0, %s26, %s24
  %v28 = vstv %s22
  %29 = vst [vmem:[#allocation2] sm:$0x1] %v28
  // Predicated region
  $region2: #{roberta_forward.1} parent=0 // pred_check
    _
  $region3: #{roberta_forward.1} parent=0 // pred_check_branch
    %31 = sbr.rel (0) target = $region5
  $region4: #{roberta_forward.1} parent=0 // pred_region
    _
  $region5: #{roberta_forward.1} parent=0 // pred_fallthru
    _
  // Predicated region
  $region6: #{roberta_forward.1} parent=0 // pred_check
    _
  $region7: #{roberta_forward.1} parent=0 // pred_check_branch
    %33 = sbr.rel (0) target = $region9
  $region8: #{roberta_forward.1} parent=0 // pred_region
    _
  $region9: #{roberta_forward.1} parent=0 // pred_fallthru
    _
  // Predicated region
  $region10: #{roberta_forward.1} parent=0 // pred_check
    _
  $region11: #{roberta_forward.1} parent=0 // pred_check_branch
    %35 = sbr.rel (0) target = $region13
  $region12: #{roberta_forward.1} parent=0 // pred_region
    _
  $region13: #{roberta_forward.1} parent=0 // pred_fallthru
    _
  // Predicated region
  $region14: #{roberta_forward.1} parent=0 // pred_check
    _
  $region15: #{roberta_forward.1} parent=0 // pred_check_branch
    %37 = sbr.rel (0) target = $region17
  $region16: #{roberta_forward.1} parent=0 // pred_region
    _
  $region17: #{roberta_forward.1} parent=0 // pred_fallthru
    _
  // Predicated region
  $region18: #{roberta_forward.1} parent=0 // pred_check
    _
  $region19: #{roberta_forward.1} parent=0 // pred_check_branch
    %39 = sbr.rel (0) target = $region21
  $region20: #{roberta_forward.1} parent=0 // pred_region
    _
  $region21: #{roberta_forward.1} parent=0 // pred_fallthru
    _
  // Predicated region
  $region22: #{roberta_forward.1} parent=0 // pred_check
    _
  $region23: #{roberta_forward.1} parent=0 // pred_check_branch
    %41 = sbr.rel (0) target = $region25
  $region24: #{roberta_forward.1} parent=0 // pred_region
    _
  $region25: #{roberta_forward.1} parent=0 // pred_fallthru
    _
  // Predicated region
  $region26: #{roberta_forward.1} parent=0 // pred_check
    _
  $region27: #{roberta_forward.1} parent=0 // pred_check_branch
    %43 = sbr.rel (0) target = $region29
  $region28: #{roberta_forward.1} parent=0 // pred_region
    _
  $region29: #{roberta_forward.1} parent=0 // pred_fallthru
    _
  // Predicated region
  $region30: #{roberta_forward.1} parent=0 // pred_check
    _
  $region31: #{roberta_forward.1} parent=0 // pred_check_branch
    %45 = sbr.rel (0) target = $region33
  $region32: #{roberta_forward.1} parent=0 // pred_region
    _
  $region33: #{roberta_forward.1} parent=0 // pred_fallthru
    _
  // Predicated region
  $region34: #{roberta_forward.1} parent=0 // pred_check
    _
  $region35: #{roberta_forward.1} parent=0 // pred_check_branch
    %47 = sbr.rel (0) target = $region37
  $region36: #{roberta_forward.1} parent=0 // pred_region
    _
  $region37: #{roberta_forward.1} parent=0 // pred_fallthru
    _
  // Predicated region
  $region38: #{roberta_forward.1} parent=0 // pred_check
    _
  $region39: #{roberta_forward.1} parent=0 // pred_check_branch
    %49 = sbr.rel (0) target = $region41
  $region40: #{roberta_forward.1} parent=0 // pred_region
    _
  $region41: #{roberta_forward.1} parent=0 // pred_fallthru
    _
  // Predicated region
  $region42: #{roberta_forward.1} parent=0 // pred_check
    _
  $region43: #{roberta_forward.1} parent=0 // pred_check_branch
    %51 = sbr.rel (0) target = $region45
  $region44: #{roberta_forward.1} parent=0 // pred_region
    _
  $region45: #{roberta_forward.1} parent=0 // pred_fallthru
    _
  // Predicated region
  $region46: #{roberta_forward.1} parent=0 // pred_check
    _
  $region47: #{roberta_forward.1} parent=0 // pred_check_branch
    %53 = sbr.rel (0) target = $region49
  $region48: #{roberta_forward.1} parent=0 // pred_region
    _
  $region49: #{roberta_forward.1} parent=0 // pred_fallthru
    _
  // Predicated region
  $region50: #{roberta_forward.1} parent=0 // pred_check
    _
  $region51: #{roberta_forward.1} parent=0 // pred_check_branch
    %55 = sbr.rel (0) target = $region53
  $region52: #{roberta_forward.1} parent=0 // pred_region
    _
  $region53: #{roberta_forward.1} parent=0 // pred_fallthru
    _
  // Predicated region
  $region54: #{roberta_forward.1} parent=0 // pred_check
    _
  $region55: #{roberta_forward.1} parent=0 // pred_check_branch
    %57 = sbr.rel (0) target = $region57
  $region56: #{roberta_forward.1} parent=0 // pred_region
    _
  $region57: #{roberta_forward.1} parent=0 // pred_fallthru
    _
  // Predicated region
  $region58: #{roberta_forward.1} parent=0 // pred_check
    _
  $region59: #{roberta_forward.1} parent=0 // pred_check_branch
    %59 = sbr.rel (0) target = $region61
  $region60: #{roberta_forward.1} parent=0 // pred_region
    _
  $region61: #{roberta_forward.1} parent=0 // pred_fallthru
    _
  // Predicated region
  $region62: #{roberta_forward.1} parent=0 // pred_check
    _
  $region63: #{roberta_forward.1} parent=0 // pred_check_branch
    %61 = sbr.rel (0) target = $region65
  $region64: #{roberta_forward.1} parent=0 // pred_region
    _
  $region65: #{roberta_forward.1} parent=0 // pred_fallthru
    _
  // Predicated region
  $region66: #{roberta_forward.1} parent=0 // pred_check
    _
  $region67: #{roberta_forward.1} parent=0 // pred_check_branch
    %63 = sbr.rel (0) target = $region69
  $region68: #{roberta_forward.1} parent=0 // pred_region
    _
  $region69: #{roberta_forward.1} parent=0 // pred_fallthru
    _
  // Predicated region
  $region70: #{roberta_forward.1} parent=0 // pred_check
    _
  $region71: #{roberta_forward.1} parent=0 // pred_check_branch
    %65 = sbr.rel (0) target = $region73
  $region72: #{roberta_forward.1} parent=0 // pred_region
    _
  $region73: #{roberta_forward.1} parent=0 // pred_fallthru
    _
  // Predicated region
  $region74: #{roberta_forward.1} parent=0 // pred_check
    _
  $region75: #{roberta_forward.1} parent=0 // pred_check_branch
    %67 = sbr.rel (0) target = $region77
  $region76: #{roberta_forward.1} parent=0 // pred_region
    _
  $region77: #{roberta_forward.1} parent=0 // pred_fallthru
    _
  // Predicated region
  $region78: #{roberta_forward.1} parent=0 // pred_check
    _
  $region79: #{roberta_forward.1} parent=0 // pred_check_branch
    %69 = sbr.rel (0) target = $region81
  $region80: #{roberta_forward.1} parent=0 // pred_region
    _
  $region81: #{roberta_forward.1} parent=0 // pred_fallthru
    _
  // Predicated region
  $region82: #{roberta_forward.1} parent=0 // pred_check
    _
  $region83: #{roberta_forward.1} parent=0 // pred_check_branch
    %71 = sbr.rel (0) target = $region85
  $region84: #{roberta_forward.1} parent=0 // pred_region
    _
  $region85: #{roberta_forward.1} parent=0 // pred_fallthru
    _
  // Predicated region
  $region86: #{roberta_forward.1} parent=0 // pred_check
    _
  $region87: #{roberta_forward.1} parent=0 // pred_check_branch
    %73 = sbr.rel (0) target = $region89
  $region88: #{roberta_forward.1} parent=0 // pred_region
    _
  $region89: #{roberta_forward.1} parent=0 // pred_fallthru
    _
  // Predicated region
  $region90: #{roberta_forward.1} parent=0 // pred_check
    _
  $region91: #{roberta_forward.1} parent=0 // pred_check_branch
    %75 = sbr.rel (0) target = $region93
  $region92: #{roberta_forward.1} parent=0 // pred_region
    _
  $region93: #{roberta_forward.1} parent=0 // pred_fallthru
    _
  %v76 = vld [vmem:[%s0] sm:$0xff]
  %v77 = vld [vmem:[%s0 + $0x8] sm:$0xff]
  %v78 = vld [vmem:[%s3] sm:$0x1]
  %v79 = vld [vmem:[%s4] sm:$0x1]
  %vm80 = vcmask 261120
  %v81 = vsel %vm80, %v76, 0.0
  %82 = vadd.xlane.f32.xlu0 %v81
  %v83 = vpop.xlane.xlu0 %82
  %v84 = vsel %vm80, %v77, 0.0
  %85 = vadd.xlane.f32.xlu0 %v84
  %v86 = vpop.xlane.xlu0 %85
  %v87 = vrcp.pop 32.0
  %v88 = vmul.f32 32.0, %v87
  %v89 = vsub.f32 1.0, %v88
  %v90 = vmul.f32 %v87, %v89
  %v91 = vadd.f32 %v87, %v90
  %vm92 = vweird.f32 %v87
  %v93 = vsel %vm92, %v87, %v91
  %v94 = vmul.f32 %v83, %v93
  %v95 = vmul.f32 %v86, %v93
  %v96 = vsub.f32 %v76, %v94
  %v97 = vsub.f32 %v77, %v95
  %v98 = vmul.f32 %v96, %v96
  %v99 = vmul.f32 %v97, %v97
  %v100 = vsel %vm80, %v98, 0.0
  %101 = vadd.xlane.f32.xlu0 %v100
  %v102 = vpop.xlane.xlu0 %101
  %v103 = vsel %vm80, %v99, 0.0
  %104 = vadd.xlane.f32.xlu0 %v103
  %v105 = vpop.xlane.xlu0 %104
  %v106 = vmul.f32 %v102, %v93
  %v107 = vmul.f32 %v105, %v93
  %v108 = vadd.f32 %v106, 1e-05
  %v109 = vadd.f32 %v107, 1e-05
  %v110 = vrsqrt.pop %v108
  %v111 = vmul.f32 %v110, %v108
  %v112 = vmul.f32 %v111, %v110
  %v113 = vmul.f32 0.5, %v112
  %v114 = vsub.f32 1.5, %v113
  %v115 = vmul.f32 %v110, %v114
  %vm116 = vweird.f32 %v108
  %vm117 = vweird.f32 %v110
  %vm118 = vmor %vm116, %vm117
  %v119 = vsel %vm118, %v110, %v115
  %v120 = vrsqrt.pop %v109
  %v121 = vmul.f32 %v120, %v109
  %v122 = vmul.f32 %v121, %v120
  %v123 = vmul.f32 0.5, %v122
  %v124 = vsub.f32 1.5, %v123
  %v125 = vmul.f32 %v120, %v124
  %vm126 = vweird.f32 %v109
  %vm127 = vweird.f32 %v120
  %vm128 = vmor %vm126, %vm127
  %v129 = vsel %vm128, %v120, %v125
  %v130 = vmul.f32 %v96, %v119
  %v131 = vmul.f32 %v97, %v129
  %v133 = vperm.slane %v78, 0
  %v135 = vmul.f32 %v130, %v133
  %v136 = vmul.f32 %v131, %v133
  %v138 = vperm.slane %v79, 0
  %v140 = vadd.f32 %v135, %v138
  %v141 = vadd.f32 %v136, %v138
  %v142 = vld [vmem:[%s1] sm:$0xff]
  %v143 = vld [vmem:[%s1 + $0x8] sm:$0xff]
  %v144 = vld [vmem:[%s5] sm:$0xff]
  %v145 = vld [vmem:[%s5 + $0x8] sm:$0xff]
  %v146 = vld [vmem:[%s5 + $0x10] sm:$0xff]
  %v147 = vld [vmem:[%s5 + $0x18] sm:$0xff]
  %v148 = vld [vmem:[%s6] sm:$0x1]
  %v150 = vperm.slane %v148, 0
  %v153 = vsel %vm80, %v140, 0
  %v156 = vsel %vm80, %v141, 0
  %158 = vmatpush.msra.mxu0 0.0
  %159 = vmatpush.msra.mxu0 0.0
  %160 = vmatpush.msra.mxu0 0.0
  %161 = vmatpush.msra.mxu0 0.0
  %162 = vmatpush.msra.mxu0 0.0
  %163 = vmatpush.msra.mxu0 0.0
  %164 = vmatpush.msra.mxu0 0.0
  %165 = vmatpush.msra.mxu0 0.0
  %166 = vmatpush.msra.mxu0 0.0
  %167 = vmatpush.msra.mxu0 0.0
  %168 = vmatpush.msra.mxu0 0.0
  %169 = vmatpush.msra.mxu0 0.0
  %170 = vmatpush.msra.mxu0 %v147
  %171 = vmatpush.msra.mxu0 %v146
  %172 = vmatpush.msra.mxu0 %v145
  %173 = vmatpush.msra.mxu0 %v144
  %174 = vmatmul.f32.gmra.mxu0 %v153
  %v175 = vpop.f32.mrf.mxu0
  %v176 = vadd.f32 %v150, %v175
  %177 = vmatmul.f32.gmra.mxu0 %v156
  %v178 = vpop.f32.mrf.mxu0
  %v179 = vadd.f32 %v150, %v178
  %180 = vdwg.mxu0
  %v181 = vld [vmem:[%s7] sm:$0xff]
  %v182 = vld [vmem:[%s7 + $0x8] sm:$0xff]
  %v183 = vld [vmem:[%s7 + $0x10] sm:$0xff]
  %v184 = vld [vmem:[%s7 + $0x18] sm:$0xff]
  %v185 = vld [vmem:[%s8] sm:$0x1]
  %v187 = vperm.slane %v185, 0
  %189 = vmatpush.msra.mxu0 0.0
  %190 = vmatpush.msra.mxu0 0.0
  %191 = vmatpush.msra.mxu0 0.0
  %192 = vmatpush.msra.mxu0 0.0
  %193 = vmatpush.msra.mxu0 0.0
  %194 = vmatpush.msra.mxu0 0.0
  %195 = vmatpush.msra.mxu0 0.0
  %196 = vmatpush.msra.mxu0 0.0
  %197 = vmatpush.msra.mxu0 0.0
  %198 = vmatpush.msra.mxu0 0.0
  %199 = vmatpush.msra.mxu0 0.0
  %200 = vmatpush.msra.mxu0 0.0
  %201 = vmatpush.msra.mxu0 %v184
  %202 = vmatpush.msra.mxu0 %v183
  %203 = vmatpush.msra.mxu0 %v182
  %204 = vmatpush.msra.mxu0 %v181
  %205 = vmatmul.f32.gmra.mxu0 %v153
  %v206 = vpop.f32.mrf.mxu0
  %v207 = vadd.f32 %v187, %v206
  %208 = vmatmul.f32.gmra.mxu0 %v156
  %v209 = vpop.f32.mrf.mxu0
  %v210 = vadd.f32 %v187, %v209
  %211 = vdwg.mxu0
  %v212 = vld [vmem:[%s9] sm:$0xff]
  %v213 = vld [vmem:[%s9 + $0x8] sm:$0xff]
  %v214 = vld [vmem:[%s9 + $0x10] sm:$0xff]
  %v215 = vld [vmem:[%s9 + $0x18] sm:$0xff]
  %v216 = vld [vmem:[%s10] sm:$0x1]
  %v218 = vperm.slane %v216, 0
  %220 = vmatpush.msra.mxu0 0.0
  %221 = vmatpush.msra.mxu0 0.0
  %222 = vmatpush.msra.mxu0 0.0
  %223 = vmatpush.msra.mxu0 0.0
  %224 = vmatpush.msra.mxu0 0.0
  %225 = vmatpush.msra.mxu0 0.0
  %226 = vmatpush.msra.mxu0 0.0
  %227 = vmatpush.msra.mxu0 0.0
  %228 = vmatpush.msra.mxu0 0.0
  %229 = vmatpush.msra.mxu0 0.0
  %230 = vmatpush.msra.mxu0 0.0
  %231 = vmatpush.msra.mxu0 0.0
  %232 = vmatpush.msra.mxu0 %v215
  %233 = vmatpush.msra.mxu0 %v214
  %234 = vmatpush.msra.mxu0 %v213
  %235 = vmatpush.msra.mxu0 %v212
  %236 = vmatmul.f32.gmra.mxu0 %v153
  %v237 = vpop.f32.mrf.mxu0
  %v238 = vadd.f32 %v218, %v237
  %239 = vmatmul.f32.gmra.mxu0 %v156
  %v240 = vpop.f32.mrf.mxu0
  %v241 = vadd.f32 %v218, %v240
  %242 = vdwg.mxu0
  %vm243 = vcmask 64512
  %v245 = vsel %vm243, %v176, 0
  %v248 = vsel %vm243, %v179, 0
  %v251 = vsel %vm243, %v207, 0
  %v254 = vsel %vm243, %v210, 0
  %256 = vmatpush.xpose.msra.mxu0 0.0
  %257 = vmatpush.xpose.msra.mxu0 0.0
  %258 = vmatpush.xpose.msra.mxu0 0.0
  %259 = vmatpush.xpose.msra.mxu0 0.0
  %260 = vmatpush.xpose.msra.mxu0 0.0
  %261 = vmatpush.xpose.msra.mxu0 0.0
  %262 = vmatpush.xpose.msra.mxu0 0.0
  %263 = vmatpush.xpose.msra.mxu0 0.0
  %264 = vmatpush.xpose.msra.mxu0 0.0
  %265 = vmatpush.xpose.msra.mxu0 0.0
  %266 = vmatpush.xpose.msra.mxu0 0.0
  %267 = vmatpush.xpose.msra.mxu0 0.0
  %268 = vmatpush.xpose.msra.mxu0 0.0
  %269 = vmatpush.xpose.msra.mxu0 0.0
  %270 = vmatpush.xpose.msra.mxu0 %v254
  %271 = vmatpush.xpose.msra.mxu0 %v251
  %272 = vmatmul.f32.gmra.mxu0 %v245
  %v273 = vpop.f32.mrf.mxu0
  %v274 = vadd.f32 0.0, %v273
  %275 = vmatmul.f32.gmra.mxu0 %v248
  %v276 = vpop.f32.mrf.mxu0
  %v277 = vadd.f32 0.0, %v276
  %278 = vdwg.mxu0
  %v279 = vmul.f32 %v274, 0.35355338
  %v280 = vmul.f32 %v277, 0.35355338
  %v281 = vadd.f32 %v279, %v142
  %v282 = vadd.f32 %v280, %v143
  %vm283 = vcmask 130048
  %v284 = vsel %vm283, %v281, -inf
  %285 = vmax.xlane.f32.xlu0 %v284
  %v286 = vpop.xlane.xlu0 %285
  %v287 = vsel %vm283, %v282, -inf
  %288 = vmax.xlane.f32.xlu0 %v287
  %v289 = vpop.xlane.xlu0 %288
  %v290 = vsub.f32 %v281, %v286
  %v291 = vsub.f32 %v282, %v289
  %v292 = vmul.f32 %v290, 1.442695
  %v293 = vpow.pop %v292
  %v294 = vmul.f32 %v291, 1.442695
  %v295 = vpow.pop %v294
  %v296 = vsel %vm283, %v293, 0.0
  %297 = vadd.xlane.f32.xlu0 %v296
  %v298 = vpop.xlane.xlu0 %297
  %v299 = vsel %vm283, %v295, 0.0
  %300 = vadd.xlane.f32.xlu0 %v299
  %v301 = vpop.xlane.xlu0 %300
  %v302 = vrcp.pop %v298
  %v303 = vrcp.pop %v301
  %v304 = vmul.f32 %v293, %v302
  %v305 = vmul.f32 %v295, %v303
  %v307 = vsel %vm283, %v304, 0
  %v310 = vsel %vm283, %v305, 0
  %312 = vmatpush.msra.mxu0 0.0
  %313 = vmatpush.msra.mxu0 0.0
  %314 = vmatpush.msra.mxu0 0.0
  %315 = vmatpush.msra.mxu0 0.0
  %316 = vmatpush.msra.mxu0 0.0
  %317 = vmatpush.msra.mxu0 0.0
  %318 = vmatpush.msra.mxu0 0.0
  %319 = vmatpush.msra.mxu0 0.0
  %320 = vmatpush.msra.mxu0 0.0
  %321 = vmatpush.msra.mxu0 0.0
  %322 = vmatpush.msra.mxu0 0.0
  %323 = vmatpush.msra.mxu0 0.0
  %324 = vmatpush.msra.mxu0 0.0
  %325 = vmatpush.msra.mxu0 0.0
  %326 = vmatpush.msra.mxu0 %v241
  %327 = vmatpush.msra.mxu0 %v238
  %328 = vmatmul.f32.gmra.mxu0 %v307
  %v329 = vpop.f32.mrf.mxu0
  %v330 = vadd.f32 0.0, %v329
  %331 = vmatmul.f32.gmra.mxu0 %v310
  %v332 = vpop.f32.mrf.mxu0
  %v333 = vadd.f32 0.0, %v332
  %334 = vdwg.mxu0
  %v335 = vld [vmem:[%s11] sm:$0xff]
  %s336 = scalar_lea.vmem %s5, 32
  %v337 = vld [vmem:[%s336] sm:$0xff]
  %v338 = vld [vmem:[%s336 + $0x8] sm:$0xff]
  %v339 = vld [vmem:[%s336 + $0x10] sm:$0xff]
  %v340 = vld [vmem:[%s336 + $0x18] sm:$0xff]
  %s341 = scalar_lea.vmem %s6, 1
  %v342 = vld [vmem:[%s341] sm:$0x1]
  %v344 = vperm.slane %v342, 0
  %346 = vmatpush.msra.mxu0 0.0
  %347 = vmatpush.msra.mxu0 0.0
  %348 = vmatpush.msra.mxu0 0.0
  %349 = vmatpush.msra.mxu0 0.0
  %350 = vmatpush.msra.mxu0 0.0
  %351 = vmatpush.msra.mxu0 0.0
  %352 = vmatpush.msra.mxu0 0.0
  %353 = vmatpush.msra.mxu0 0.0
  %354 = vmatpush.msra.mxu0 0.0
  %355 = vmatpush.msra.mxu0 0.0
  %356 = vmatpush.msra.mxu0 0.0
  %357 = vmatpush.msra.mxu0 0.0
  %358 = vmatpush.msra.mxu0 %v340
  %359 = vmatpush.msra.mxu0 %v339
  %360 = vmatpush.msra.mxu0 %v338
  %361 = vmatpush.msra.mxu0 %v337
  %362 = vmatmul.f32.gmra.mxu0 %v153
  %v363 = vpop.f32.mrf.mxu0
  %v364 = vadd.f32 %v344, %v363
  %365 = vmatmul.f32.gmra.mxu0 %v156
  %v366 = vpop.f32.mrf.mxu0
  %v367 = vadd.f32 %v344, %v366
  %368 = vdwg.mxu0
  %s369 = scalar_lea.vmem %s7, 32
  %v370 = vld [vmem:[%s369] sm:$0xff]
  %v371 = vld [vmem:[%s369 + $0x8] sm:$0xff]
  %v372 = vld [vmem:[%s369 + $0x10] sm:$0xff]
  %v373 = vld [vmem:[%s369 + $0x18] sm:$0xff]
  %s374 = scalar_lea.vmem %s8, 1
  %v375 = vld [vmem:[%s374] sm:$0x1]
  %v377 = vperm.slane %v375, 0
  %379 = vmatpush.msra.mxu0 0.0
  %380 = vmatpush.msra.mxu0 0.0
  %381 = vmatpush.msra.mxu0 0.0
  %382 = vmatpush.msra.mxu0 0.0
  %383 = vmatpush.msra.mxu0 0.0
  %384 = vmatpush.msra.mxu0 0.0
  %385 = vmatpush.msra.mxu0 0.0
  %386 = vmatpush.msra.mxu0 0.0
  %387 = vmatpush.msra.mxu0 0.0
  %388 = vmatpush.msra.mxu0 0.0
  %389 = vmatpush.msra.mxu0 0.0
  %390 = vmatpush.msra.mxu0 0.0
  %391 = vmatpush.msra.mxu0 %v373
  %392 = vmatpush.msra.mxu0 %v372
  %393 = vmatpush.msra.mxu0 %v371
  %394 = vmatpush.msra.mxu0 %v370
  %395 = vmatmul.f32.gmra.mxu0 %v153
  %v396 = vpop.f32.mrf.mxu0
  %v397 = vadd.f32 %v377, %v396
  %398 = vmatmul.f32.gmra.mxu0 %v156
  %v399 = vpop.f32.mrf.mxu0
  %v400 = vadd.f32 %v377, %v399
  %401 = vdwg.mxu0
  %s402 = scalar_lea.vmem %s9, 32
  %v403 = vld [vmem:[%s402] sm:$0xff]
  %v404 = vld [vmem:[%s402 + $0x8] sm:$0xff]
  %v405 = vld [vmem:[%s402 + $0x10] sm:$0xff]
  %v406 = vld [vmem:[%s402 + $0x18] sm:$0xff]
  %s407 = scalar_lea.vmem %s10, 1
  %v408 = vld [vmem:[%s407] sm:$0x1]
  %v410 = vperm.slane %v408, 0
  %412 = vmatpush.msra.mxu0 0.0
  %413 = vmatpush.msra.mxu0 0.0
  %414 = vmatpush.msra.mxu0 0.0
  %415 = vmatpush.msra.mxu0 0.0
  %416 = vmatpush.msra.mxu0 0.0
  %417 = vmatpush.msra.mxu0 0.0
  %418 = vmatpush.msra.mxu0 0.0
  %419 = vmatpush.msra.mxu0 0.0
  %420 = vmatpush.msra.mxu0 0.0
  %421 = vmatpush.msra.mxu0 0.0
  %422 = vmatpush.msra.mxu0 0.0
  %423 = vmatpush.msra.mxu0 0.0
  %424 = vmatpush.msra.mxu0 %v406
  %425 = vmatpush.msra.mxu0 %v405
  %426 = vmatpush.msra.mxu0 %v404
  %427 = vmatpush.msra.mxu0 %v403
  %428 = vmatmul.f32.gmra.mxu0 %v153
  %v429 = vpop.f32.mrf.mxu0
  %v430 = vadd.f32 %v410, %v429
  %431 = vmatmul.f32.gmra.mxu0 %v156
  %v432 = vpop.f32.mrf.mxu0
  %v433 = vadd.f32 %v410, %v432
  %434 = vdwg.mxu0
  %v436 = vsel %vm243, %v364, 0
  %v439 = vsel %vm243, %v367, 0
  %v442 = vsel %vm243, %v397, 0
  %v445 = vsel %vm243, %v400, 0
  %447 = vmatpush.xpose.msra.mxu0 0.0
  %448 = vmatpush.xpose.msra.mxu0 0.0
  %449 = vmatpush.xpose.msra.mxu0 0.0
  %450 = vmatpush.xpose.msra.mxu0 0.0
  %451 = vmatpush.xpose.msra.mxu0 0.0
  %452 = vmatpush.xpose.msra.mxu0 0.0
  %453 = vmatpush.xpose.msra.mxu0 0.0
  %454 = vmatpush.xpose.msra.mxu0 0.0
  %455 = vmatpush.xpose.msra.mxu0 0.0
  %456 = vmatpush.xpose.msra.mxu0 0.0
  %457 = vmatpush.xpose.msra.mxu0 0.0
  %458 = vmatpush.xpose.msra.mxu0 0.0
  %459 = vmatpush.xpose.msra.mxu0 0.0
  %460 = vmatpush.xpose.msra.mxu0 0.0
  %461 = vmatpush.xpose.msra.mxu0 %v445
  %462 = vmatpush.xpose.msra.mxu0 %v442
  %463 = vmatmul.f32.gmra.mxu0 %v436
  %v464 = vpop.f32.mrf.mxu0
  %v465 = vadd.f32 0.0, %v464
  %466 = vmatmul.f32.gmra.mxu0 %v439
  %v467 = vpop.f32.mrf.mxu0
  %v468 = vadd.f32 0.0, %v467
  %469 = vdwg.mxu0
  %v470 = vmul.f32 %v465, 0.35355338
  %v471 = vmul.f32 %v468, 0.35355338
  %v472 = vadd.f32 %v470, %v142
  %v473 = vadd.f32 %v471, %v143
  %v474 = vsel %vm283, %v472, -inf
  %475 = vmax.xlane.f32.xlu0 %v474
  %v476 = vpop.xlane.xlu0 %475
  %v477 = vsel %vm283, %v473, -inf
  %478 = vmax.xlane.f32.xlu0 %v477
  %v479 = vpop.xlane.xlu0 %478
  %v480 = vsub.f32 %v472, %v476
  %v481 = vsub.f32 %v473, %v479
  %v482 = vmul.f32 %v480, 1.442695
  %v483 = vpow.pop %v482
  %v484 = vmul.f32 %v481, 1.442695
  %v485 = vpow.pop %v484
  %v486 = vsel %vm283, %v483, 0.0
  %487 = vadd.xlane.f32.xlu0 %v486
  %v488 = vpop.xlane.xlu0 %487
  %v489 = vsel %vm283, %v485, 0.0
  %490 = vadd.xlane.f32.xlu0 %v489
  %v491 = vpop.xlane.xlu0 %490
  %v492 = vrcp.pop %v488
  %v493 = vrcp.pop %v491
  %v494 = vmul.f32 %v483, %v492
  %v495 = vmul.f32 %v485, %v493
  %v497 = vsel %vm283, %v494, 0
  %v500 = vsel %vm283, %v495, 0
  %502 = vmatpush.msra.mxu0 0.0
  %503 = vmatpush.msra.mxu0 0.0
  %504 = vmatpush.msra.mxu0 0.0
  %505 = vmatpush.msra.mxu0 0.0
  %506 = vmatpush.msra.mxu0 0.0
  %507 = vmatpush.msra.mxu0 0.0
  %508 = vmatpush.msra.mxu0 0.0
  %509 = vmatpush.msra.mxu0 0.0
  %510 = vmatpush.msra.mxu0 0.0
  %511 = vmatpush.msra.mxu0 0.0
  %512 = vmatpush.msra.mxu0 0.0
  %513 = vmatpush.msra.mxu0 0.0
  %514 = vmatpush.msra.mxu0 0.0
  %515 = vmatpush.msra.mxu0 0.0
  %516 = vmatpush.msra.mxu0 %v433
  %517 = vmatpush.msra.mxu0 %v430
  %518 = vmatmul.f32.gmra.mxu0 %v497
  %v519 = vpop.f32.mrf.mxu0
  %v520 = vadd.f32 0.0, %v519
  %521 = vmatmul.f32.gmra.mxu0 %v500
  %v522 = vpop.f32.mrf.mxu0
  %v523 = vadd.f32 0.0, %v522
  %524 = vdwg.mxu0
  %s525 = scalar_lea.vmem %s11, 8
  %v526 = vld [vmem:[%s525] sm:$0xff]
  %v528 = vsel %vm243, %v520, 0
  %v531 = vsel %vm243, %v523, 0
  %533 = vmatpush.msra.mxu0 0.0
  %534 = vmatpush.msra.mxu0 0.0
  %535 = vmatpush.msra.mxu0 0.0
  %536 = vmatpush.msra.mxu0 0.0
  %537 = vmatpush.msra.mxu0 0.0
  %538 = vmatpush.msra.mxu0 0.0
  %539 = vmatpush.msra.mxu0 0.0
  %540 = vmatpush.msra.mxu0 0.0
  %541 = vmatpush.msra.mxu0 0.0
  %542 = vmatpush.msra.mxu0 0.0
  %543 = vmatpush.msra.mxu0 0.0
  %544 = vmatpush.msra.mxu0 0.0
  %545 = vmatpush.msra.mxu0 0.0
  %546 = vmatpush.msra.mxu0 0.0
  %547 = vmatpush.msra.mxu0 0.0
  %548 = vmatpush.msra.mxu0 %v526
  %549 = vmatmul.f32.gmra.mxu0 %v528
  %v550 = vpop.f32.mrf.mxu0
  %v551 = vadd.f32 0.0, %v550
  %552 = vmatmul.f32.gmra.mxu0 %v531
  %v553 = vpop.f32.mrf.mxu0
  %v554 = vadd.f32 0.0, %v553
  %555 = vdwg.mxu0
  %v557 = vsel %vm243, %v330, 0
  %v560 = vsel %vm243, %v333, 0
  %562 = vmatpush.msra.mxu0 0.0
  %563 = vmatpush.msra.mxu0 0.0
  %564 = vmatpush.msra.mxu0 0.0
  %565 = vmatpush.msra.mxu0 0.0
  %566 = vmatpush.msra.mxu0 0.0
  %567 = vmatpush.msra.mxu0 0.0
  %568 = vmatpush.msra.mxu0 0.0
  %569 = vmatpush.msra.mxu0 0.0
  %570 = vmatpush.msra.mxu0 0.0
  %571 = vmatpush.msra.mxu0 0.0
  %572 = vmatpush.msra.mxu0 0.0
  %573 = vmatpush.msra.mxu0 0.0
  %574 = vmatpush.msra.mxu0 0.0
  %575 = vmatpush.msra.mxu0 0.0
  %576 = vmatpush.msra.mxu0 0.0
  %577 = vmatpush.msra.mxu0 %v335
  %578 = vmatmul.f32.gmra.mxu0 %v557
  %v579 = vpop.f32.mrf.mxu0
  %v580 = vadd.f32 %v551, %v579
  %581 = vmatmul.f32.gmra.mxu0 %v560
  %v582 = vpop.f32.mrf.mxu0
  %v583 = vadd.f32 %v554, %v582
  %584 = vdwg.mxu0
  %s585 = scalar_lea.vmem %s5, 64
  %v586 = vld [vmem:[%s585] sm:$0xff]
  %v587 = vld [vmem:[%s585 + $0x8] sm:$0xff]
  %v588 = vld [vmem:[%s585 + $0x10] sm:$0xff]
  %v589 = vld [vmem:[%s585 + $0x18] sm:$0xff]
  %s590 = scalar_lea.vmem %s6, 2
  %v591 = vld [vmem:[%s590] sm:$0x1]
  %v593 = vperm.slane %v591, 0
  %595 = vmatpush.msra.mxu0 0.0
  %596 = vmatpush.msra.mxu0 0.0
  %597 = vmatpush.msra.mxu0 0.0
  %598 = vmatpush.msra.mxu0 0.0
  %599 = vmatpush.msra.mxu0 0.0
  %600 = vmatpush.msra.mxu0 0.0
  %601 = vmatpush.msra.mxu0 0.0
  %602 = vmatpush.msra.mxu0 0.0
  %603 = vmatpush.msra.mxu0 0.0
  %604 = vmatpush.msra.mxu0 0.0
  %605 = vmatpush.msra.mxu0 0.0
  %606 = vmatpush.msra.mxu0 0.0
  %607 = vmatpush.msra.mxu0 %v589
  %608 = vmatpush.msra.mxu0 %v588
  %609 = vmatpush.msra.mxu0 %v587
  %610 = vmatpush.msra.mxu0 %v586
  %611 = vmatmul.f32.gmra.mxu0 %v153
  %v612 = vpop.f32.mrf.mxu0
  %v613 = vadd.f32 %v593, %v612
  %614 = vmatmul.f32.gmra.mxu0 %v156
  %v615 = vpop.f32.mrf.mxu0
  %v616 = vadd.f32 %v593, %v615
  %617 = vdwg.mxu0
  %s618 = scalar_lea.vmem %s7, 64
  %v619 = vld [vmem:[%s618] sm:$0xff]
  %v620 = vld [vmem:[%s618 + $0x8] sm:$0xff]
  %v621 = vld [vmem:[%s618 + $0x10] sm:$0xff]
  %v622 = vld [vmem:[%s618 + $0x18] sm:$0xff]
  %s623 = scalar_lea.vmem %s8, 2
  %v624 = vld [vmem:[%s623] sm:$0x1]
  %v626 = vperm.slane %v624, 0
  %628 = vmatpush.msra.mxu0 0.0
  %629 = vmatpush.msra.mxu0 0.0
  %630 = vmatpush.msra.mxu0 0.0
  %631 = vmatpush.msra.mxu0 0.0
  %632 = vmatpush.msra.mxu0 0.0
  %633 = vmatpush.msra.mxu0 0.0
  %634 = vmatpush.msra.mxu0 0.0
  %635 = vmatpush.msra.mxu0 0.0
  %636 = vmatpush.msra.mxu0 0.0
  %637 = vmatpush.msra.mxu0 0.0
  %638 = vmatpush.msra.mxu0 0.0
  %639 = vmatpush.msra.mxu0 0.0
  %640 = vmatpush.msra.mxu0 %v622
  %641 = vmatpush.msra.mxu0 %v621
  %642 = vmatpush.msra.mxu0 %v620
  %643 = vmatpush.msra.mxu0 %v619
  %644 = vmatmul.f32.gmra.mxu0 %v153
  %v645 = vpop.f32.mrf.mxu0
  %v646 = vadd.f32 %v626, %v645
  %647 = vmatmul.f32.gmra.mxu0 %v156
  %v648 = vpop.f32.mrf.mxu0
  %v649 = vadd.f32 %v626, %v648
  %650 = vdwg.mxu0
  %s651 = scalar_lea.vmem %s9, 64
  %v652 = vld [vmem:[%s651] sm:$0xff]
  %v653 = vld [vmem:[%s651 + $0x8] sm:$0xff]
  %v654 = vld [vmem:[%s651 + $0x10] sm:$0xff]
  %v655 = vld [vmem:[%s651 + $0x18] sm:$0xff]
  %s656 = scalar_lea.vmem %s10, 2
  %v657 = vld [vmem:[%s656] sm:$0x1]
  %v659 = vperm.slane %v657, 0
  %661 = vmatpush.msra.mxu0 0.0
  %662 = vmatpush.msra.mxu0 0.0
  %663 = vmatpush.msra.mxu0 0.0
  %664 = vmatpush.msra.mxu0 0.0
  %665 = vmatpush.msra.mxu0 0.0
  %666 = vmatpush.msra.mxu0 0.0
  %667 = vmatpush.msra.mxu0 0.0
  %668 = vmatpush.msra.mxu0 0.0
  %669 = vmatpush.msra.mxu0 0.0
  %670 = vmatpush.msra.mxu0 0.0
  %671 = vmatpush.msra.mxu0 0.0
  %672 = vmatpush.msra.mxu0 0.0
  %673 = vmatpush.msra.mxu0 %v655
  %674 = vmatpush.msra.mxu0 %v654
  %675 = vmatpush.msra.mxu0 %v653
  %676 = vmatpush.msra.mxu0 %v652
  %677 = vmatmul.f32.gmra.mxu0 %v153
  %v678 = vpop.f32.mrf.mxu0
  %v679 = vadd.f32 %v659, %v678
  %680 = vmatmul.f32.gmra.mxu0 %v156
  %v681 = vpop.f32.mrf.mxu0
  %v682 = vadd.f32 %v659, %v681
  %683 = vdwg.mxu0
  %v685 = vsel %vm243, %v613, 0
  %v688 = vsel %vm243, %v616, 0
  %v691 = vsel %vm243, %v646, 0
  %v694 = vsel %vm243, %v649, 0
  %696 = vmatpush.xpose.msra.mxu0 0.0
  %697 = vmatpush.xpose.msra.mxu0 0.0
  %698 = vmatpush.xpose.msra.mxu0 0.0
  %699 = vmatpush.xpose.msra.mxu0 0.0
  %700 = vmatpush.xpose.msra.mxu0 0.0
  %701 = vmatpush.xpose.msra.mxu0 0.0
  %702 = vmatpush.xpose.msra.mxu0 0.0
  %703 = vmatpush.xpose.msra.mxu0 0.0
  %704 = vmatpush.xpose.msra.mxu0 0.0
  %705 = vmatpush.xpose.msra.mxu0 0.0
  %706 = vmatpush.xpose.msra.mxu0 0.0
  %707 = vmatpush.xpose.msra.mxu0 0.0
  %708 = vmatpush.xpose.msra.mxu0 0.0
  %709 = vmatpush.xpose.msra.mxu0 0.0
  %710 = vmatpush.xpose.msra.mxu0 %v694
  %711 = vmatpush.xpose.msra.mxu0 %v691
  %712 = vmatmul.f32.gmra.mxu0 %v685
  %v713 = vpop.f32.mrf.mxu0
  %v714 = vadd.f32 0.0, %v713
  %715 = vmatmul.f32.gmra.mxu0 %v688
  %v716 = vpop.f32.mrf.mxu0
  %v717 = vadd.f32 0.0, %v716
  %718 = vdwg.mxu0
  %v719 = vmul.f32 %v714, 0.35355338
  %v720 = vmul.f32 %v717, 0.35355338
  %v721 = vadd.f32 %v719, %v142
  %v722 = vadd.f32 %v720, %v143
  %v723 = vsel %vm283, %v721, -inf
  %724 = vmax.xlane.f32.xlu0 %v723
  %v725 = vpop.xlane.xlu0 %724
  %v726 = vsel %vm283, %v722, -inf
  %727 = vmax.xlane.f32.xlu0 %v726
  %v728 = vpop.xlane.xlu0 %727
  %v729 = vsub.f32 %v721, %v725
  %v730 = vsub.f32 %v722, %v728
  %v731 = vmul.f32 %v729, 1.442695
  %v732 = vpow.pop %v731
  %v733 = vmul.f32 %v730, 1.442695
  %v734 = vpow.pop %v733
  %v735 = vsel %vm283, %v732, 0.0
  %736 = vadd.xlane.f32.xlu0 %v735
  %v737 = vpop.xlane.xlu0 %736
  %v738 = vsel %vm283, %v734, 0.0
  %739 = vadd.xlane.f32.xlu0 %v738
  %v740 = vpop.xlane.xlu0 %739
  %v741 = vrcp.pop %v737
  %v742 = vrcp.pop %v740
  %v743 = vmul.f32 %v732, %v741
  %v744 = vmul.f32 %v734, %v742
  %v746 = vsel %vm283, %v743, 0
  %v749 = vsel %vm283, %v744, 0
  %751 = vmatpush.msra.mxu0 0.0
  %752 = vmatpush.msra.mxu0 0.0
  %753 = vmatpush.msra.mxu0 0.0
  %754 = vmatpush.msra.mxu0 0.0
  %755 = vmatpush.msra.mxu0 0.0
  %756 = vmatpush.msra.mxu0 0.0
  %757 = vmatpush.msra.mxu0 0.0
  %758 = vmatpush.msra.mxu0 0.0
  %759 = vmatpush.msra.mxu0 0.0
  %760 = vmatpush.msra.mxu0 0.0
  %761 = vmatpush.msra.mxu0 0.0
  %762 = vmatpush.msra.mxu0 0.0
  %763 = vmatpush.msra.mxu0 0.0
  %764 = vmatpush.msra.mxu0 0.0
  %765 = vmatpush.msra.mxu0 %v682
  %766 = vmatpush.msra.mxu0 %v679
  %767 = vmatmul.f32.gmra.mxu0 %v746
  %v768 = vpop.f32.mrf.mxu0
  %v769 = vadd.f32 0.0, %v768
  %770 = vmatmul.f32.gmra.mxu0 %v749
  %v771 = vpop.f32.mrf.mxu0
  %v772 = vadd.f32 0.0, %v771
  %773 = vdwg.mxu0
  %s774 = scalar_lea.vmem %s11, 16
  %v775 = vld [vmem:[%s774] sm:$0xff]
  %v777 = vsel %vm243, %v769, 0
  %v780 = vsel %vm243, %v772, 0
  %782 = vmatpush.msra.mxu0 0.0
  %783 = vmatpush.msra.mxu0 0.0
  %784 = vmatpush.msra.mxu0 0.0
  %785 = vmatpush.msra.mxu0 0.0
  %786 = vmatpush.msra.mxu0 0.0
  %787 = vmatpush.msra.mxu0 0.0
  %788 = vmatpush.msra.mxu0 0.0
  %789 = vmatpush.msra.mxu0 0.0
  %790 = vmatpush.msra.mxu0 0.0
  %791 = vmatpush.msra.mxu0 0.0
  %792 = vmatpush.msra.mxu0 0.0
  %793 = vmatpush.msra.mxu0 0.0
  %794 = vmatpush.msra.mxu0 0.0
  %795 = vmatpush.msra.mxu0 0.0
  %796 = vmatpush.msra.mxu0 0.0
  %797 = vmatpush.msra.mxu0 %v775
  %798 = vmatmul.f32.gmra.mxu0 %v777
  %v799 = vpop.f32.mrf.mxu0
  %v800 = vadd.f32 0.0, %v799
  %801 = vmatmul.f32.gmra.mxu0 %v780
  %v802 = vpop.f32.mrf.mxu0
  %v803 = vadd.f32 0.0, %v802
  %804 = vdwg.mxu0
  %v805 = vadd.f32 %v580, %v800
  %v806 = vadd.f32 %v583, %v803
  %s807 = scalar_lea.vmem %s5, 96
  %v808 = vld [vmem:[%s807] sm:$0xff]
  %v809 = vld [vmem:[%s807 + $0x8] sm:$0xff]
  %v810 = vld [vmem:[%s807 + $0x10] sm:$0xff]
  %v811 = vld [vmem:[%s807 + $0x18] sm:$0xff]
  %s812 = scalar_lea.vmem %s6, 3
  %v813 = vld [vmem:[%s812] sm:$0x1]
  %v815 = vperm.slane %v813, 0
  %817 = vmatpush.msra.mxu0 0.0
  %818 = vmatpush.msra.mxu0 0.0
  %819 = vmatpush.msra.mxu0 0.0
  %820 = vmatpush.msra.mxu0 0.0
  %821 = vmatpush.msra.mxu0 0.0
  %822 = vmatpush.msra.mxu0 0.0
  %823 = vmatpush.msra.mxu0 0.0
  %824 = vmatpush.msra.mxu0 0.0
  %825 = vmatpush.msra.mxu0 0.0
  %826 = vmatpush.msra.mxu0 0.0
  %827 = vmatpush.msra.mxu0 0.0
  %828 = vmatpush.msra.mxu0 0.0
  %829 = vmatpush.msra.mxu0 %v811
  %830 = vmatpush.msra.mxu0 %v810
  %831 = vmatpush.msra.mxu0 %v809
  %832 = vmatpush.msra.mxu0 %v808
  %833 = vmatmul.f32.gmra.mxu0 %v153
  %v834 = vpop.f32.mrf.mxu0
  %v835 = vadd.f32 %v815, %v834
  %836 = vmatmul.f32.gmra.mxu0 %v156
  %v837 = vpop.f32.mrf.mxu0
  %v838 = vadd.f32 %v815, %v837
  %839 = vdwg.mxu0
  %s840 = scalar_lea.vmem %s7, 96
  %v841 = vld [vmem:[%s840] sm:$0xff]
  %v842 = vld [vmem:[%s840 + $0x8] sm:$0xff]
  %v843 = vld [vmem:[%s840 + $0x10] sm:$0xff]
  %v844 = vld [vmem:[%s840 + $0x18] sm:$0xff]
  %s845 = scalar_lea.vmem %s8, 3
  %v846 = vld [vmem:[%s845] sm:$0x1]
  %v848 = vperm.slane %v846, 0
  %850 = vmatpush.msra.mxu0 0.0
  %851 = vmatpush.msra.mxu0 0.0
  %852 = vmatpush.msra.mxu0 0.0
  %853 = vmatpush.msra.mxu0 0.0
  %854 = vmatpush.msra.mxu0 0.0
  %855 = vmatpush.msra.mxu0 0.0
  %856 = vmatpush.msra.mxu0 0.0
  %857 = vmatpush.msra.mxu0 0.0
  %858 = vmatpush.msra.mxu0 0.0
  %859 = vmatpush.msra.mxu0 0.0
  %860 = vmatpush.msra.mxu0 0.0
  %861 = vmatpush.msra.mxu0 0.0
  %862 = vmatpush.msra.mxu0 %v844
  %863 = vmatpush.msra.mxu0 %v843
  %864 = vmatpush.msra.mxu0 %v842
  %865 = vmatpush.msra.mxu0 %v841
  %866 = vmatmul.f32.gmra.mxu0 %v153
  %v867 = vpop.f32.mrf.mxu0
  %v868 = vadd.f32 %v848, %v867
  %869 = vmatmul.f32.gmra.mxu0 %v156
  %v870 = vpop.f32.mrf.mxu0
  %v871 = vadd.f32 %v848, %v870
  %872 = vdwg.mxu0
  %s873 = scalar_lea.vmem %s9, 96
  %v874 = vld [vmem:[%s873] sm:$0xff]
  %v875 = vld [vmem:[%s873 + $0x8] sm:$0xff]
  %v876 = vld [vmem:[%s873 + $0x10] sm:$0xff]
  %v877 = vld [vmem:[%s873 + $0x18] sm:$0xff]
  %s878 = scalar_lea.vmem %s10, 3
  %v879 = vld [vmem:[%s878] sm:$0x1]
  %v881 = vperm.slane %v879, 0
  %883 = vmatpush.msra.mxu0 0.0
  %884 = vmatpush.msra.mxu0 0.0
  %885 = vmatpush.msra.mxu0 0.0
  %886 = vmatpush.msra.mxu0 0.0
  %887 = vmatpush.msra.mxu0 0.0
  %888 = vmatpush.msra.mxu0 0.0
  %889 = vmatpush.msra.mxu0 0.0
  %890 = vmatpush.msra.mxu0 0.0
  %891 = vmatpush.msra.mxu0 0.0
  %892 = vmatpush.msra.mxu0 0.0
  %893 = vmatpush.msra.mxu0 0.0
  %894 = vmatpush.msra.mxu0 0.0
  %895 = vmatpush.msra.mxu0 %v877
  %896 = vmatpush.msra.mxu0 %v876
  %897 = vmatpush.msra.mxu0 %v875
  %898 = vmatpush.msra.mxu0 %v874
  %899 = vmatmul.f32.gmra.mxu0 %v153
  %v900 = vpop.f32.mrf.mxu0
  %v901 = vadd.f32 %v881, %v900
  %902 = vmatmul.f32.gmra.mxu0 %v156
  %v903 = vpop.f32.mrf.mxu0
  %v904 = vadd.f32 %v881, %v903
  %905 = vdwg.mxu0
  %v907 = vsel %vm243, %v835, 0
  %v910 = vsel %vm243, %v838, 0
  %v913 = vsel %vm243, %v868, 0
  %v916 = vsel %vm243, %v871, 0
  %918 = vmatpush.xpose.msra.mxu0 0.0
  %919 = vmatpush.xpose.msra.mxu0 0.0
  %920 = vmatpush.xpose.msra.mxu0 0.0
  %921 = vmatpush.xpose.msra.mxu0 0.0
  %922 = vmatpush.xpose.msra.mxu0 0.0
  %923 = vmatpush.xpose.msra.mxu0 0.0
  %924 = vmatpush.xpose.msra.mxu0 0.0
  %925 = vmatpush.xpose.msra.mxu0 0.0
  %926 = vmatpush.xpose.msra.mxu0 0.0
  %927 = vmatpush.xpose.msra.mxu0 0.0
  %928 = vmatpush.xpose.msra.mxu0 0.0
  %929 = vmatpush.xpose.msra.mxu0 0.0
  %930 = vmatpush.xpose.msra.mxu0 0.0
  %931 = vmatpush.xpose.msra.mxu0 0.0
  %932 = vmatpush.xpose.msra.mxu0 %v916
  %933 = vmatpush.xpose.msra.mxu0 %v913
  %934 = vmatmul.f32.gmra.mxu0 %v907
  %v935 = vpop.f32.mrf.mxu0
  %v936 = vadd.f32 0.0, %v935
  %937 = vmatmul.f32.gmra.mxu0 %v910
  %v938 = vpop.f32.mrf.mxu0
  %v939 = vadd.f32 0.0, %v938
  %940 = vdwg.mxu0
  %v941 = vmul.f32 %v936, 0.35355338
  %v942 = vmul.f32 %v939, 0.35355338
  %v943 = vadd.f32 %v941, %v142
  %v944 = vadd.f32 %v942, %v143
  %v945 = vsel %vm283, %v943, -inf
  %946 = vmax.xlane.f32.xlu0 %v945
  %v947 = vpop.xlane.xlu0 %946
  %v948 = vsel %vm283, %v944, -inf
  %949 = vmax.xlane.f32.xlu0 %v948
  %v950 = vpop.xlane.xlu0 %949
  %v951 = vsub.f32 %v943, %v947
  %v952 = vsub.f32 %v944, %v950
  %v953 = vmul.f32 %v951, 1.442695
  %v954 = vpow.pop %v953
  %v955 = vmul.f32 %v952, 1.442695
  %v956 = vpow.pop %v955
  %v957 = vsel %vm283, %v954, 0.0
  %958 = vadd.xlane.f32.xlu0 %v957
  %v959 = vpop.xlane.xlu0 %958
  %v960 = vsel %vm283, %v956, 0.0
  %961 = vadd.xlane.f32.xlu0 %v960
  %v962 = vpop.xlane.xlu0 %961
  %v963 = vrcp.pop %v959
  %v964 = vrcp.pop %v962
  %v965 = vmul.f32 %v954, %v963
  %v966 = vmul.f32 %v956, %v964
  %v968 = vsel %vm283, %v965, 0
  %v971 = vsel %vm283, %v966, 0
  %973 = vmatpush.msra.mxu0 0.0
  %974 = vmatpush.msra.mxu0 0.0
  %975 = vmatpush.msra.mxu0 0.0
  %976 = vmatpush.msra.mxu0 0.0
  %977 = vmatpush.msra.mxu0 0.0
  %978 = vmatpush.msra.mxu0 0.0
  %979 = vmatpush.msra.mxu0 0.0
  %980 = vmatpush.msra.mxu0 0.0
  %981 = vmatpush.msra.mxu0 0.0
  %982 = vmatpush.msra.mxu0 0.0
  %983 = vmatpush.msra.mxu0 0.0
  %984 = vmatpush.msra.mxu0 0.0
  %985 = vmatpush.msra.mxu0 0.0
  %986 = vmatpush.msra.mxu0 0.0
  %987 = vmatpush.msra.mxu0 %v904
  %988 = vmatpush.msra.mxu0 %v901
  %989 = vmatmul.f32.gmra.mxu0 %v968
  %v990 = vpop.f32.mrf.mxu0
  %v991 = vadd.f32 0.0, %v990
  %992 = vmatmul.f32.gmra.mxu0 %v971
  %v993 = vpop.f32.mrf.mxu0
  %v994 = vadd.f32 0.0, %v993
  %995 = vdwg.mxu0
  %s996 = scalar_lea.vmem %s11, 24
  %v997 = vld [vmem:[%s996] sm:$0xff]
  %v999 = vsel %vm243, %v991, 0
  %v1002 = vsel %vm243, %v994, 0
  %1004 = vmatpush.msra.mxu0 0.0
  %1005 = vmatpush.msra.mxu0 0.0
  %1006 = vmatpush.msra.mxu0 0.0
  %1007 = vmatpush.msra.mxu0 0.0
  %1008 = vmatpush.msra.mxu0 0.0
  %1009 = vmatpush.msra.mxu0 0.0
  %1010 = vmatpush.msra.mxu0 0.0
  %1011 = vmatpush.msra.mxu0 0.0
  %1012 = vmatpush.msra.mxu0 0.0
  %1013 = vmatpush.msra.mxu0 0.0
  %1014 = vmatpush.msra.mxu0 0.0
  %1015 = vmatpush.msra.mxu0 0.0
  %1016 = vmatpush.msra.mxu0 0.0
  %1017 = vmatpush.msra.mxu0 0.0
  %1018 = vmatpush.msra.mxu0 0.0
  %1019 = vmatpush.msra.mxu0 %v997
  %1020 = vmatmul.f32.gmra.mxu0 %v999
  %v1021 = vpop.f32.mrf.mxu0
  %v1022 = vadd.f32 0.0, %v1021
  %1023 = vmatmul.f32.gmra.mxu0 %v1002
  %v1024 = vpop.f32.mrf.mxu0
  %v1025 = vadd.f32 0.0, %v1024
  %1026 = vdwg.mxu0
  %v1027 = vadd.f32 %v805, %v1022
  %v1028 = vadd.f32 %v806, %v1025
  %v1029 = vld [vmem:[%s12] sm:$0x1]
  %v1031 = vperm.slane %v1029, 0
  %v1033 = vadd.f32 %v1027, %v1031
  %v1034 = vadd.f32 %v1028, %v1031
  %v1035 = vadd.f32 %v1033, %v140
  %v1036 = vadd.f32 %v1034, %v141
  %v1037 = vld [vmem:[%s13] sm:$0x1]
  %v1038 = vld [vmem:[%s14] sm:$0x1]
  %v1039 = vsel %vm80, %v1035, 0.0
  %1040 = vadd.xlane.f32.xlu0 %v1039
  %v1041 = vpop.xlane.xlu0 %1040
  %v1042 = vsel %vm80, %v1036, 0.0
  %1043 = vadd.xlane.f32.xlu0 %v1042
  %v1044 = vpop.xlane.xlu0 %1043
  %v1045 = vmul.f32 %v1041, %v93
  %v1046 = vmul.f32 %v1044, %v93
  %v1047 = vsub.f32 %v1035, %v1045
  %v1048 = vsub.f32 %v1036, %v1046
  %v1049 = vmul.f32 %v1047, %v1047
  %v1050 = vmul.f32 %v1048, %v1048
  %v1051 = vsel %vm80, %v1049, 0.0
  %1052 = vadd.xlane.f32.xlu0 %v1051
  %v1053 = vpop.xlane.xlu0 %1052
  %v1054 = vsel %vm80, %v1050, 0.0
  %1055 = vadd.xlane.f32.xlu0 %v1054
  %v1056 = vpop.xlane.xlu0 %1055
  %v1057 = vmul.f32 %v1053, %v93
  %v1058 = vmul.f32 %v1056, %v93
  %v1059 = vadd.f32 %v1057, 1e-05
  %v1060 = vadd.f32 %v1058, 1e-05
  %v1061 = vrsqrt.pop %v1059
  %v1062 = vmul.f32 %v1061, %v1059
  %v1063 = vmul.f32 %v1062, %v1061
  %v1064 = vmul.f32 0.5, %v1063
  %v1065 = vsub.f32 1.5, %v1064
  %v1066 = vmul.f32 %v1061, %v1065
  %vm1067 = vweird.f32 %v1059
  %vm1068 = vweird.f32 %v1061
  %vm1069 = vmor %vm1067, %vm1068
  %v1070 = vsel %vm1069, %v1061, %v1066
  %v1071 = vrsqrt.pop %v1060
  %v1072 = vmul.f32 %v1071, %v1060
  %v1073 = vmul.f32 %v1072, %v1071
  %v1074 = vmul.f32 0.5, %v1073
  %v1075 = vsub.f32 1.5, %v1074
  %v1076 = vmul.f32 %v1071, %v1075
  %vm1077 = vweird.f32 %v1060
  %vm1078 = vweird.f32 %v1071
  %vm1079 = vmor %vm1077, %vm1078
  %v1080 = vsel %vm1079, %v1071, %v1076
  %v1081 = vmul.f32 %v1047, %v1070
  %v1082 = vmul.f32 %v1048, %v1080
  %v1084 = vperm.slane %v1037, 0
  %v1086 = vmul.f32 %v1081, %v1084
  %v1087 = vmul.f32 %v1082, %v1084
  %v1089 = vperm.slane %v1038, 0
  %v1091 = vadd.f32 %v1086, %v1089
  %v1092 = vadd.f32 %v1087, %v1089
  %v1093 = vld [vmem:[%s15] sm:$0xff]
  %v1094 = vld [vmem:[%s15 + $0x8] sm:$0xff]
  %v1095 = vld [vmem:[%s15 + $0x10] sm:$0xff]
  %v1096 = vld [vmem:[%s15 + $0x18] sm:$0xff]
  %v1097 = vld [vmem:[%s16] sm:$0x1]
  %v1099 = vperm.slane %v1097, 0
  %v1102 = vsel %vm80, %v1091, 0
  %v1105 = vsel %vm80, %v1092, 0
  %1107 = vmatpush.msra.mxu0 0.0
  %1108 = vmatpush.msra.mxu0 0.0
  %1109 = vmatpush.msra.mxu0 0.0
  %1110 = vmatpush.msra.mxu0 0.0
  %1111 = vmatpush.msra.mxu0 0.0
  %1112 = vmatpush.msra.mxu0 0.0
  %1113 = vmatpush.msra.mxu0 0.0
  %1114 = vmatpush.msra.mxu0 0.0
  %1115 = vmatpush.msra.mxu0 0.0
  %1116 = vmatpush.msra.mxu0 0.0
  %1117 = vmatpush.msra.mxu0 0.0
  %1118 = vmatpush.msra.mxu0 0.0
  %1119 = vmatpush.msra.mxu0 %v1096
  %1120 = vmatpush.msra.mxu0 %v1095
  %1121 = vmatpush.msra.mxu0 %v1094
  %1122 = vmatpush.msra.mxu0 %v1093
  %1123 = vmatmul.f32.gmra.mxu0 %v1102
  %v1124 = vpop.f32.mrf.mxu0
  %v1125 = vadd.f32 %v1099, %v1124
  %1126 = vmatmul.f32.gmra.mxu0 %v1105
  %v1127 = vpop.f32.mrf.mxu0
  %v1128 = vadd.f32 %v1099, %v1127
  %1129 = vdwg.mxu0
  %v1130 = vmul.f32 %v1125, %v1125
  %v1131 = vmul.f32 %v1128, %v1128
  %v1132 = vmul.f32 %v1125, %v1130
  %v1133 = vmul.f32 %v1128, %v1131
  %v1134 = vmul.f32 %v1132, 0.044715
  %v1135 = vmul.f32 %v1133, 0.044715
  %v1136 = vadd.f32 %v1125, %v1134
  %v1137 = vadd.f32 %v1128, %v1135
  %v1138 = vmul.f32 %v1136, 0.7978846
  %v1139 = vmul.f32 %v1137, 0.7978846
  %v1140 = vtanh.pop %v1138
  %v1141 = vtanh.pop %v1139
  %v1142 = vadd.f32 %v1140, 1.0
  %v1143 = vadd.f32 %v1141, 1.0
  %v1144 = vmul.f32 %v1142, 0.5
  %v1145 = vmul.f32 %v1143, 0.5
  %v1146 = vmul.f32 %v1125, %v1144
  %v1147 = vmul.f32 %v1128, %v1145
  %v1148 = vld [vmem:[%s17] sm:$0xff]
  %v1149 = vld [vmem:[%s17 + $0x8] sm:$0xff]
  %v1150 = vld [vmem:[%s17 + $0x10] sm:$0xff]
  %v1151 = vld [vmem:[%s17 + $0x18] sm:$0xff]
  %v1152 = vld [vmem:[%s17 + $0x20] sm:$0xff]
  %v1153 = vld [vmem:[%s17 + $0x28] sm:$0xff]
  %v1154 = vld [vmem:[%s17 + $0x30] sm:$0xff]
  %v1155 = vld [vmem:[%s17 + $0x38] sm:$0xff]
  %v1156 = vld [vmem:[%s18] sm:$0x1]
  %v1158 = vperm.slane %v1156, 0
  %vm1160 = vcmask 523264
  %v1162 = vsel %vm1160, %v1146, 0
  %v1165 = vsel %vm1160, %v1147, 0
  %1167 = vmatpush.msra.mxu0 0.0
  %1168 = vmatpush.msra.mxu0 0.0
  %1169 = vmatpush.msra.mxu0 0.0
  %1170 = vmatpush.msra.mxu0 0.0
  %1171 = vmatpush.msra.mxu0 0.0
  %1172 = vmatpush.msra.mxu0 0.0
  %1173 = vmatpush.msra.mxu0 0.0
  %1174 = vmatpush.msra.mxu0 0.0
  %1175 = vmatpush.msra.mxu0 %v1155
  %1176 = vmatpush.msra.mxu0 %v1154
  %1177 = vmatpush.msra.mxu0 %v1153
  %1178 = vmatpush.msra.mxu0 %v1152
  %1179 = vmatpush.msra.mxu0 %v1151
  %1180 = vmatpush.msra.mxu0 %v1150
  %1181 = vmatpush.msra.mxu0 %v1149
  %1182 = vmatpush.msra.mxu0 %v1148
  %1183 = vmatmul.f32.gmra.mxu0 %v1162
  %v1184 = vpop.f32.mrf.mxu0
  %v1185 = vadd.f32 %v1158, %v1184
  %1186 = vmatmul.f32.gmra.mxu0 %v1165
  %v1187 = vpop.f32.mrf.mxu0
  %v1188 = vadd.f32 %v1158, %v1187
  %1189 = vdwg.mxu0
  %v1190 = vadd.f32 %v1185, %v1091
  %v1191 = vadd.f32 %v1188, %v1092
  %v1192 = vld [vmem:[%s19] sm:$0x1]
  %v1193 = vld [vmem:[%s20] sm:$0x1]
  %v1194 = vsel %vm80, %v1190, 0.0
  %1195 = vadd.xlane.f32.xlu0 %v1194
  %v1196 = vpop.xlane.xlu0 %1195
  %v1197 = vsel %vm80, %v1191, 0.0
  %1198 = vadd.xlane.f32.xlu0 %v1197
  %v1199 = vpop.xlane.xlu0 %1198
  %v1200 = vmul.f32 %v1196, %v93
  %v1201 = vmul.f32 %v1199, %v93
  %v1202 = vsub.f32 %v1190, %v1200
  %v1203 = vsub.f32 %v1191, %v1201
  %v1204 = vmul.f32 %v1202, %v1202
  %v1205 = vmul.f32 %v1203, %v1203
  %v1206 = vsel %vm80, %v1204, 0.0
  %1207 = vadd.xlane.f32.xlu0 %v1206
  %v1208 = vpop.xlane.xlu0 %1207
  %v1209 = vsel %vm80, %v1205, 0.0
  %1210 = vadd.xlane.f32.xlu0 %v1209
  %v1211 = vpop.xlane.xlu0 %1210
  %v1212 = vmul.f32 %v1208, %v93
  %v1213 = vmul.f32 %v1211, %v93
  %v1214 = vadd.f32 %v1212, 1e-05
  %v1215 = vadd.f32 %v1213, 1e-05
  %v1216 = vrsqrt.pop %v1214
  %v1217 = vmul.f32 %v1216, %v1214
  %v1218 = vmul.f32 %v1217, %v1216
  %v1219 = vmul.f32 0.5, %v1218
  %v1220 = vsub.f32 1.5, %v1219
  %v1221 = vmul.f32 %v1216, %v1220
  %vm1222 = vweird.f32 %v1214
  %vm1223 = vweird.f32 %v1216
  %vm1224 = vmor %vm1222, %vm1223
  %v1225 = vsel %vm1224, %v1216, %v1221
  %v1226 = vrsqrt.pop %v1215
  %v1227 = vmul.f32 %v1226, %v1215
  %v1228 = vmul.f32 %v1227, %v1226
  %v1229 = vmul.f32 0.5, %v1228
  %v1230 = vsub.f32 1.5, %v1229
  %v1231 = vmul.f32 %v1226, %v1230
  %vm1232 = vweird.f32 %v1215
  %vm1233 = vweird.f32 %v1226
  %vm1234 = vmor %vm1232, %vm1233
  %v1235 = vsel %vm1234, %v1226, %v1231
  %v1236 = vmul.f32 %v1202, %v1225
  %v1237 = vmul.f32 %v1203, %v1235
  %v1239 = vperm.slane %v1192, 0
  %v1241 = vmul.f32 %v1236, %v1239
  %v1242 = vmul.f32 %v1237, %v1239
  %v1244 = vperm.slane %v1193, 0
  %v1246 = vadd.f32 %v1241, %v1244
  %v1247 = vadd.f32 %v1242, %v1244
  %s1248 = scalar_lea.vmem %s5, 128
  %v1249 = vld [vmem:[%s1248] sm:$0xff]
  %v1250 = vld [vmem:[%s1248 + $0x8] sm:$0xff]
  %v1251 = vld [vmem:[%s1248 + $0x10] sm:$0xff]
  %v1252 = vld [vmem:[%s1248 + $0x18] sm:$0xff]
  %s1253 = scalar_lea.vmem %s6, 4
  %v1254 = vld [vmem:[%s1253] sm:$0x1]
  %v1256 = vperm.slane %v1254, 0
  %v1259 = vsel %vm80, %v1246, 0
  %v1262 = vsel %vm80, %v1247, 0
  %1264 = vmatpush.msra.mxu0 0.0
  %1265 = vmatpush.msra.mxu0 0.0
  %1266 = vmatpush.msra.mxu0 0.0
  %1267 = vmatpush.msra.mxu0 0.0
  %1268 = vmatpush.msra.mxu0 0.0
  %1269 = vmatpush.msra.mxu0 0.0
  %1270 = vmatpush.msra.mxu0 0.0
  %1271 = vmatpush.msra.mxu0 0.0
  %1272 = vmatpush.msra.mxu0 0.0
  %1273 = vmatpush.msra.mxu0 0.0
  %1274 = vmatpush.msra.mxu0 0.0
  %1275 = vmatpush.msra.mxu0 0.0
  %1276 = vmatpush.msra.mxu0 %v1252
  %1277 = vmatpush.msra.mxu0 %v1251
  %1278 = vmatpush.msra.mxu0 %v1250
  %1279 = vmatpush.msra.mxu0 %v1249
  %1280 = vmatmul.f32.gmra.mxu0 %v1259
  %v1281 = vpop.f32.mrf.mxu0
  %v1282 = vadd.f32 %v1256, %v1281
  %1283 = vmatmul.f32.gmra.mxu0 %v1262
  %v1284 = vpop.f32.mrf.mxu0
  %v1285 = vadd.f32 %v1256, %v1284
  %1286 = vdwg.mxu0
  %s1287 = scalar_lea.vmem %s7, 128
  %v1288 = vld [vmem:[%s1287] sm:$0xff]
  %v1289 = vld [vmem:[%s1287 + $0x8] sm:$0xff]
  %v1290 = vld [vmem:[%s1287 + $0x10] sm:$0xff]
  %v1291 = vld [vmem:[%s1287 + $0x18] sm:$0xff]
  %s1292 = scalar_lea.vmem %s8, 4
  %v1293 = vld [vmem:[%s1292] sm:$0x1]
  %v1295 = vperm.slane %v1293, 0
  %1297 = vmatpush.msra.mxu0 0.0
  %1298 = vmatpush.msra.mxu0 0.0
  %1299 = vmatpush.msra.mxu0 0.0
  %1300 = vmatpush.msra.mxu0 0.0
  %1301 = vmatpush.msra.mxu0 0.0
  %1302 = vmatpush.msra.mxu0 0.0
  %1303 = vmatpush.msra.mxu0 0.0
  %1304 = vmatpush.msra.mxu0 0.0
  %1305 = vmatpush.msra.mxu0 0.0
  %1306 = vmatpush.msra.mxu0 0.0
  %1307 = vmatpush.msra.mxu0 0.0
  %1308 = vmatpush.msra.mxu0 0.0
  %1309 = vmatpush.msra.mxu0 %v1291
  %1310 = vmatpush.msra.mxu0 %v1290
  %1311 = vmatpush.msra.mxu0 %v1289
  %1312 = vmatpush.msra.mxu0 %v1288
  %1313 = vmatmul.f32.gmra.mxu0 %v1259
  %v1314 = vpop.f32.mrf.mxu0
  %v1315 = vadd.f32 %v1295, %v1314
  %1316 = vmatmul.f32.gmra.mxu0 %v1262
  %v1317 = vpop.f32.mrf.mxu0
  %v1318 = vadd.f32 %v1295, %v1317
  %1319 = vdwg.mxu0
  %s1320 = scalar_lea.vmem %s9, 128
  %v1321 = vld [vmem:[%s1320] sm:$0xff]
  %v1322 = vld [vmem:[%s1320 + $0x8] sm:$0xff]
  %v1323 = vld [vmem:[%s1320 + $0x10] sm:$0xff]
  %v1324 = vld [vmem:[%s1320 + $0x18] sm:$0xff]
  %s1325 = scalar_lea.vmem %s10, 4
  %v1326 = vld [vmem:[%s1325] sm:$0x1]
  %v1328 = vperm.slane %v1326, 0
  %1330 = vmatpush.msra.mxu0 0.0
  %1331 = vmatpush.msra.mxu0 0.0
  %1332 = vmatpush.msra.mxu0 0.0
  %1333 = vmatpush.msra.mxu0 0.0
  %1334 = vmatpush.msra.mxu0 0.0
  %1335 = vmatpush.msra.mxu0 0.0
  %1336 = vmatpush.msra.mxu0 0.0
  %1337 = vmatpush.msra.mxu0 0.0
  %1338 = vmatpush.msra.mxu0 0.0
  %1339 = vmatpush.msra.mxu0 0.0
  %1340 = vmatpush.msra.mxu0 0.0
  %1341 = vmatpush.msra.mxu0 0.0
  %1342 = vmatpush.msra.mxu0 %v1324
  %1343 = vmatpush.msra.mxu0 %v1323
  %1344 = vmatpush.msra.mxu0 %v1322
  %1345 = vmatpush.msra.mxu0 %v1321
  %1346 = vmatmul.f32.gmra.mxu0 %v1259
  %v1347 = vpop.f32.mrf.mxu0
  %v1348 = vadd.f32 %v1328, %v1347
  %1349 = vmatmul.f32.gmra.mxu0 %v1262
  %v1350 = vpop.f32.mrf.mxu0
  %v1351 = vadd.f32 %v1328, %v1350
  %1352 = vdwg.mxu0
  %v1354 = vsel %vm243, %v1282, 0
  %v1357 = vsel %vm243, %v1285, 0
  %v1360 = vsel %vm243, %v1315, 0
  %v1363 = vsel %vm243, %v1318, 0
  %1365 = vmatpush.xpose.msra.mxu0 0.0
  %1366 = vmatpush.xpose.msra.mxu0 0.0
  %1367 = vmatpush.xpose.msra.mxu0 0.0
  %1368 = vmatpush.xpose.msra.mxu0 0.0
  %1369 = vmatpush.xpose.msra.mxu0 0.0
  %1370 = vmatpush.xpose.msra.mxu0 0.0
  %1371 = vmatpush.xpose.msra.mxu0 0.0
  %1372 = vmatpush.xpose.msra.mxu0 0.0
  %1373 = vmatpush.xpose.msra.mxu0 0.0
  %1374 = vmatpush.xpose.msra.mxu0 0.0
  %1375 = vmatpush.xpose.msra.mxu0 0.0
  %1376 = vmatpush.xpose.msra.mxu0 0.0
  %1377 = vmatpush.xpose.msra.mxu0 0.0
  %1378 = vmatpush.xpose.msra.mxu0 0.0
  %1379 = vmatpush.xpose.msra.mxu0 %v1363
  %1380 = vmatpush.xpose.msra.mxu0 %v1360
  %1381 = vmatmul.f32.gmra.mxu0 %v1354
  %v1382 = vpop.f32.mrf.mxu0
  %v1383 = vadd.f32 0.0, %v1382
  %1384 = vmatmul.f32.gmra.mxu0 %v1357
  %v1385 = vpop.f32.mrf.mxu0
  %v1386 = vadd.f32 0.0, %v1385
  %1387 = vdwg.mxu0
  %v1388 = vmul.f32 %v1383, 0.35355338
  %v1389 = vmul.f32 %v1386, 0.35355338
  %v1390 = vadd.f32 %v1388, %v142
  %v1391 = vadd.f32 %v1389, %v143
  %v1392 = vsel %vm283, %v1390, -inf
  %1393 = vmax.xlane.f32.xlu0 %v1392
  %v1394 = vpop.xlane.xlu0 %1393
  %v1395 = vsel %vm283, %v1391, -inf
  %1396 = vmax.xlane.f32.xlu0 %v1395
  %v1397 = vpop.xlane.xlu0 %1396
  %v1398 = vsub.f32 %v1390, %v1394
  %v1399 = vsub.f32 %v1391, %v1397
  %v1400 = vmul.f32 %v1398, 1.442695
  %v1401 = vpow.pop %v1400
  %v1402 = vmul.f32 %v1399, 1.442695
  %v1403 = vpow.pop %v1402
  %v1404 = vsel %vm283, %v1401, 0.0
  %1405 = vadd.xlane.f32.xlu0 %v1404
  %v1406 = vpop.xlane.xlu0 %1405
  %v1407 = vsel %vm283, %v1403, 0.0
  %1408 = vadd.xlane.f32.xlu0 %v1407
  %v1409 = vpop.xlane.xlu0 %1408
  %v1410 = vrcp.pop %v1406
  %v1411 = vrcp.pop %v1409
  %v1412 = vmul.f32 %v1401, %v1410
  %v1413 = vmul.f32 %v1403, %v1411
  %v1415 = vsel %vm283, %v1412, 0
  %v1418 = vsel %vm283, %v1413, 0
  %1420 = vmatpush.msra.mxu0 0.0
  %1421 = vmatpush.msra.mxu0 0.0
  %1422 = vmatpush.msra.mxu0 0.0
  %1423 = vmatpush.msra.mxu0 0.0
  %1424 = vmatpush.msra.mxu0 0.0
  %1425 = vmatpush.msra.mxu0 0.0
  %1426 = vmatpush.msra.mxu0 0.0
  %1427 = vmatpush.msra.mxu0 0.0
  %1428 = vmatpush.msra.mxu0 0.0
  %1429 = vmatpush.msra.mxu0 0.0
  %1430 = vmatpush.msra.mxu0 0.0
  %1431 = vmatpush.msra.mxu0 0.0
  %1432 = vmatpush.msra.mxu0 0.0
  %1433 = vmatpush.msra.mxu0 0.0
  %1434 = vmatpush.msra.mxu0 %v1351
  %1435 = vmatpush.msra.mxu0 %v1348
  %1436 = vmatmul.f32.gmra.mxu0 %v1415
  %v1437 = vpop.f32.mrf.mxu0
  %v1438 = vadd.f32 0.0, %v1437
  %1439 = vmatmul.f32.gmra.mxu0 %v1418
  %v1440 = vpop.f32.mrf.mxu0
  %v1441 = vadd.f32 0.0, %v1440
  %1442 = vdwg.mxu0
  %s1443 = scalar_lea.vmem %s11, 32
  %v1444 = vld [vmem:[%s1443] sm:$0xff]
  %s1445 = scalar_lea.vmem %s5, 160
  %v1446 = vld [vmem:[%s1445] sm:$0xff]
  %v1447 = vld [vmem:[%s1445 + $0x8] sm:$0xff]
  %v1448 = vld [vmem:[%s1445 + $0x10] sm:$0xff]
  %v1449 = vld [vmem:[%s1445 + $0x18] sm:$0xff]
  %s1450 = scalar_lea.vmem %s6, 5
  %v1451 = vld [vmem:[%s1450] sm:$0x1]
  %v1453 = vperm.slane %v1451, 0
  %1455 = vmatpush.msra.mxu0 0.0
  %1456 = vmatpush.msra.mxu0 0.0
  %1457 = vmatpush.msra.mxu0 0.0
  %1458 = vmatpush.msra.mxu0 0.0
  %1459 = vmatpush.msra.mxu0 0.0
  %1460 = vmatpush.msra.mxu0 0.0
  %1461 = vmatpush.msra.mxu0 0.0
  %1462 = vmatpush.msra.mxu0 0.0
  %1463 = vmatpush.msra.mxu0 0.0
  %1464 = vmatpush.msra.mxu0 0.0
  %1465 = vmatpush.msra.mxu0 0.0
  %1466 = vmatpush.msra.mxu0 0.0
  %1467 = vmatpush.msra.mxu0 %v1449
  %1468 = vmatpush.msra.mxu0 %v1448
  %1469 = vmatpush.msra.mxu0 %v1447
  %1470 = vmatpush.msra.mxu0 %v1446
  %1471 = vmatmul.f32.gmra.mxu0 %v1259
  %v1472 = vpop.f32.mrf.mxu0
  %v1473 = vadd.f32 %v1453, %v1472
  %1474 = vmatmul.f32.gmra.mxu0 %v1262
  %v1475 = vpop.f32.mrf.mxu0
  %v1476 = vadd.f32 %v1453, %v1475
  %1477 = vdwg.mxu0
  %s1478 = scalar_lea.vmem %s7, 160
  %v1479 = vld [vmem:[%s1478] sm:$0xff]
  %v1480 = vld [vmem:[%s1478 + $0x8] sm:$0xff]
  %v1481 = vld [vmem:[%s1478 + $0x10] sm:$0xff]
  %v1482 = vld [vmem:[%s1478 + $0x18] sm:$0xff]
  %s1483 = scalar_lea.vmem %s8, 5
  %v1484 = vld [vmem:[%s1483] sm:$0x1]
  %v1486 = vperm.slane %v1484, 0
  %1488 = vmatpush.msra.mxu0 0.0
  %1489 = vmatpush.msra.mxu0 0.0
  %1490 = vmatpush.msra.mxu0 0.0
  %1491 = vmatpush.msra.mxu0 0.0
  %1492 = vmatpush.msra.mxu0 0.0
  %1493 = vmatpush.msra.mxu0 0.0
  %1494 = vmatpush.msra.mxu0 0.0
  %1495 = vmatpush.msra.mxu0 0.0
  %1496 = vmatpush.msra.mxu0 0.0
  %1497 = vmatpush.msra.mxu0 0.0
  %1498 = vmatpush.msra.mxu0 0.0
  %1499 = vmatpush.msra.mxu0 0.0
  %1500 = vmatpush.msra.mxu0 %v1482
  %1501 = vmatpush.msra.mxu0 %v1481
  %1502 = vmatpush.msra.mxu0 %v1480
  %1503 = vmatpush.msra.mxu0 %v1479
  %1504 = vmatmul.f32.gmra.mxu0 %v1259
  %v1505 = vpop.f32.mrf.mxu0
  %v1506 = vadd.f32 %v1486, %v1505
  %1507 = vmatmul.f32.gmra.mxu0 %v1262
  %v1508 = vpop.f32.mrf.mxu0
  %v1509 = vadd.f32 %v1486, %v1508
  %1510 = vdwg.mxu0
  %s1511 = scalar_lea.vmem %s9, 160
  %v1512 = vld [vmem:[%s1511] sm:$0xff]
  %v1513 = vld [vmem:[%s1511 + $0x8] sm:$0xff]
  %v1514 = vld [vmem:[%s1511 + $0x10] sm:$0xff]
  %v1515 = vld [vmem:[%s1511 + $0x18] sm:$0xff]
  %s1516 = scalar_lea.vmem %s10, 5
  %v1517 = vld [vmem:[%s1516] sm:$0x1]
  %v1519 = vperm.slane %v1517, 0
  %1521 = vmatpush.msra.mxu0 0.0
  %1522 = vmatpush.msra.mxu0 0.0
  %1523 = vmatpush.msra.mxu0 0.0
  %1524 = vmatpush.msra.mxu0 0.0
  %1525 = vmatpush.msra.mxu0 0.0
  %1526 = vmatpush.msra.mxu0 0.0
  %1527 = vmatpush.msra.mxu0 0.0
  %1528 = vmatpush.msra.mxu0 0.0
  %1529 = vmatpush.msra.mxu0 0.0
  %1530 = vmatpush.msra.mxu0 0.0
  %1531 = vmatpush.msra.mxu0 0.0
  %1532 = vmatpush.msra.mxu0 0.0
  %1533 = vmatpush.msra.mxu0 %v1515
  %1534 = vmatpush.msra.mxu0 %v1514
  %1535 = vmatpush.msra.mxu0 %v1513
  %1536 = vmatpush.msra.mxu0 %v1512
  %1537 = vmatmul.f32.gmra.mxu0 %v1259
  %v1538 = vpop.f32.mrf.mxu0
  %v1539 = vadd.f32 %v1519, %v1538
  %1540 = vmatmul.f32.gmra.mxu0 %v1262
  %v1541 = vpop.f32.mrf.mxu0
  %v1542 = vadd.f32 %v1519, %v1541
  %1543 = vdwg.mxu0
  %v1545 = vsel %vm243, %v1473, 0
  %v1548 = vsel %vm243, %v1476, 0
  %v1551 = vsel %vm243, %v1506, 0
  %v1554 = vsel %vm243, %v1509, 0
  %1556 = vmatpush.xpose.msra.mxu0 0.0
  %1557 = vmatpush.xpose.msra.mxu0 0.0
  %1558 = vmatpush.xpose.msra.mxu0 0.0
  %1559 = vmatpush.xpose.msra.mxu0 0.0
  %1560 = vmatpush.xpose.msra.mxu0 0.0
  %1561 = vmatpush.xpose.msra.mxu0 0.0
  %1562 = vmatpush.xpose.msra.mxu0 0.0
  %1563 = vmatpush.xpose.msra.mxu0 0.0
  %1564 = vmatpush.xpose.msra.mxu0 0.0
  %1565 = vmatpush.xpose.msra.mxu0 0.0
  %1566 = vmatpush.xpose.msra.mxu0 0.0
  %1567 = vmatpush.xpose.msra.mxu0 0.0
  %1568 = vmatpush.xpose.msra.mxu0 0.0
  %1569 = vmatpush.xpose.msra.mxu0 0.0
  %1570 = vmatpush.xpose.msra.mxu0 %v1554
  %1571 = vmatpush.xpose.msra.mxu0 %v1551
  %1572 = vmatmul.f32.gmra.mxu0 %v1545
  %v1573 = vpop.f32.mrf.mxu0
  %v1574 = vadd.f32 0.0, %v1573
  %1575 = vmatmul.f32.gmra.mxu0 %v1548
  %v1576 = vpop.f32.mrf.mxu0
  %v1577 = vadd.f32 0.0, %v1576
  %1578 = vdwg.mxu0
  %v1579 = vmul.f32 %v1574, 0.35355338
  %v1580 = vmul.f32 %v1577, 0.35355338
  %v1581 = vadd.f32 %v1579, %v142
  %v1582 = vadd.f32 %v1580, %v143
  %v1583 = vsel %vm283, %v1581, -inf
  %1584 = vmax.xlane.f32.xlu0 %v1583
  %v1585 = vpop.xlane.xlu0 %1584
  %v1586 = vsel %vm283, %v1582, -inf
  %1587 = vmax.xlane.f32.xlu0 %v1586
  %v1588 = vpop.xlane.xlu0 %1587
  %v1589 = vsub.f32 %v1581, %v1585
  %v1590 = vsub.f32 %v1582, %v1588
  %v1591 = vmul.f32 %v1589, 1.442695
  %v1592 = vpow.pop %v1591
  %v1593 = vmul.f32 %v1590, 1.442695
  %v1594 = vpow.pop %v1593
  %v1595 = vsel %vm283, %v1592, 0.0
  %1596 = vadd.xlane.f32.xlu0 %v1595
  %v1597 = vpop.xlane.xlu0 %1596
  %v1598 = vsel %vm283, %v1594, 0.0
  %1599 = vadd.xlane.f32.xlu0 %v1598
  %v1600 = vpop.xlane.xlu0 %1599
  %v1601 = vrcp.pop %v1597
  %v1602 = vrcp.pop %v1600
  %v1603 = vmul.f32 %v1592, %v1601
  %v1604 = vmul.f32 %v1594, %v1602
  %v1606 = vsel %vm283, %v1603, 0
  %v1609 = vsel %vm283, %v1604, 0
  %1611 = vmatpush.msra.mxu0 0.0
  %1612 = vmatpush.msra.mxu0 0.0
  %1613 = vmatpush.msra.mxu0 0.0
  %1614 = vmatpush.msra.mxu0 0.0
  %1615 = vmatpush.msra.mxu0 0.0
  %1616 = vmatpush.msra.mxu0 0.0
  %1617 = vmatpush.msra.mxu0 0.0
  %1618 = vmatpush.msra.mxu0 0.0
  %1619 = vmatpush.msra.mxu0 0.0
  %1620 = vmatpush.msra.mxu0 0.0
  %1621 = vmatpush.msra.mxu0 0.0
  %1622 = vmatpush.msra.mxu0 0.0
  %1623 = vmatpush.msra.mxu0 0.0
  %1624 = vmatpush.msra.mxu0 0.0
  %1625 = vmatpush.msra.mxu0 %v1542
  %1626 = vmatpush.msra.mxu0 %v1539
  %1627 = vmatmul.f32.gmra.mxu0 %v1606
  %v1628 = vpop.f32.mrf.mxu0
  %v1629 = vadd.f32 0.0, %v1628
  %1630 = vmatmul.f32.gmra.mxu0 %v1609
  %v1631 = vpop.f32.mrf.mxu0
  %v1632 = vadd.f32 0.0, %v1631
  %1633 = vdwg.mxu0
  %s1634 = scalar_lea.vmem %s11, 40
  %v1635 = vld [vmem:[%s1634] sm:$0xff]
  %v1637 = vsel %vm243, %v1629, 0
  %v1640 = vsel %vm243, %v1632, 0
  %1642 = vmatpush.msra.mxu0 0.0
  %1643 = vmatpush.msra.mxu0 0.0
  %1644 = vmatpush.msra.mxu0 0.0
  %1645 = vmatpush.msra.mxu0 0.0
  %1646 = vmatpush.msra.mxu0 0.0
  %1647 = vmatpush.msra.mxu0 0.0
  %1648 = vmatpush.msra.mxu0 0.0
  %1649 = vmatpush.msra.mxu0 0.0
  %1650 = vmatpush.msra.mxu0 0.0
  %1651 = vmatpush.msra.mxu0 0.0
  %1652 = vmatpush.msra.mxu0 0.0
  %1653 = vmatpush.msra.mxu0 0.0
  %1654 = vmatpush.msra.mxu0 0.0
  %1655 = vmatpush.msra.mxu0 0.0
  %1656 = vmatpush.msra.mxu0 0.0
  %1657 = vmatpush.msra.mxu0 %v1635
  %1658 = vmatmul.f32.gmra.mxu0 %v1637
  %v1659 = vpop.f32.mrf.mxu0
  %v1660 = vadd.f32 0.0, %v1659
  %1661 = vmatmul.f32.gmra.mxu0 %v1640
  %v1662 = vpop.f32.mrf.mxu0
  %v1663 = vadd.f32 0.0, %v1662
  %1664 = vdwg.mxu0
  %v1666 = vsel %vm243, %v1438, 0
  %v1669 = vsel %vm243, %v1441, 0
  %1671 = vmatpush.msra.mxu0 0.0
  %1672 = vmatpush.msra.mxu0 0.0
  %1673 = vmatpush.msra.mxu0 0.0
  %1674 = vmatpush.msra.mxu0 0.0
  %1675 = vmatpush.msra.mxu0 0.0
  %1676 = vmatpush.msra.mxu0 0.0
  %1677 = vmatpush.msra.mxu0 0.0
  %1678 = vmatpush.msra.mxu0 0.0
  %1679 = vmatpush.msra.mxu0 0.0
  %1680 = vmatpush.msra.mxu0 0.0
  %1681 = vmatpush.msra.mxu0 0.0
  %1682 = vmatpush.msra.mxu0 0.0
  %1683 = vmatpush.msra.mxu0 0.0
  %1684 = vmatpush.msra.mxu0 0.0
  %1685 = vmatpush.msra.mxu0 0.0
  %1686 = vmatpush.msra.mxu0 %v1444
  %1687 = vmatmul.f32.gmra.mxu0 %v1666
  %v1688 = vpop.f32.mrf.mxu0
  %v1689 = vadd.f32 %v1660, %v1688
  %1690 = vmatmul.f32.gmra.mxu0 %v1669
  %v1691 = vpop.f32.mrf.mxu0
  %v1692 = vadd.f32 %v1663, %v1691
  %1693 = vdwg.mxu0
  %s1694 = scalar_lea.vmem %s5, 192
  %v1695 = vld [vmem:[%s1694] sm:$0xff]
  %v1696 = vld [vmem:[%s1694 + $0x8] sm:$0xff]
  %v1697 = vld [vmem:[%s1694 + $0x10] sm:$0xff]
  %v1698 = vld [vmem:[%s1694 + $0x18] sm:$0xff]
  %s1699 = scalar_lea.vmem %s6, 6
  %v1700 = vld [vmem:[%s1699] sm:$0x1]
  %v1702 = vperm.slane %v1700, 0
  %1704 = vmatpush.msra.mxu0 0.0
  %1705 = vmatpush.msra.mxu0 0.0
  %1706 = vmatpush.msra.mxu0 0.0
  %1707 = vmatpush.msra.mxu0 0.0
  %1708 = vmatpush.msra.mxu0 0.0
  %1709 = vmatpush.msra.mxu0 0.0
  %1710 = vmatpush.msra.mxu0 0.0
  %1711 = vmatpush.msra.mxu0 0.0
  %1712 = vmatpush.msra.mxu0 0.0
  %1713 = vmatpush.msra.mxu0 0.0
  %1714 = vmatpush.msra.mxu0 0.0
  %1715 = vmatpush.msra.mxu0 0.0
  %1716 = vmatpush.msra.mxu0 %v1698
  %1717 = vmatpush.msra.mxu0 %v1697
  %1718 = vmatpush.msra.mxu0 %v1696
  %1719 = vmatpush.msra.mxu0 %v1695
  %1720 = vmatmul.f32.gmra.mxu0 %v1259
  %v1721 = vpop.f32.mrf.mxu0
  %v1722 = vadd.f32 %v1702, %v1721
  %1723 = vmatmul.f32.gmra.mxu0 %v1262
  %v1724 = vpop.f32.mrf.mxu0
  %v1725 = vadd.f32 %v1702, %v1724
  %1726 = vdwg.mxu0
  %s1727 = scalar_lea.vmem %s7, 192
  %v1728 = vld [vmem:[%s1727] sm:$0xff]
  %v1729 = vld [vmem:[%s1727 + $0x8] sm:$0xff]
  %v1730 = vld [vmem:[%s1727 + $0x10] sm:$0xff]
  %v1731 = vld [vmem:[%s1727 + $0x18] sm:$0xff]
  %s1732 = scalar_lea.vmem %s8, 6
  %v1733 = vld [vmem:[%s1732] sm:$0x1]
  %v1735 = vperm.slane %v1733, 0
  %1737 = vmatpush.msra.mxu0 0.0
  %1738 = vmatpush.msra.mxu0 0.0
  %1739 = vmatpush.msra.mxu0 0.0
  %1740 = vmatpush.msra.mxu0 0.0
  %1741 = vmatpush.msra.mxu0 0.0
  %1742 = vmatpush.msra.mxu0 0.0
  %1743 = vmatpush.msra.mxu0 0.0
  %1744 = vmatpush.msra.mxu0 0.0
  %1745 = vmatpush.msra.mxu0 0.0
  %1746 = vmatpush.msra.mxu0 0.0
  %1747 = vmatpush.msra.mxu0 0.0
  %1748 = vmatpush.msra.mxu0 0.0
  %1749 = vmatpush.msra.mxu0 %v1731
  %1750 = vmatpush.msra.mxu0 %v1730
  %1751 = vmatpush.msra.mxu0 %v1729
  %1752 = vmatpush.msra.mxu0 %v1728
  %1753 = vmatmul.f32.gmra.mxu0 %v1259
  %v1754 = vpop.f32.mrf.mxu0
  %v1755 = vadd.f32 %v1735, %v1754
  %1756 = vmatmul.f32.gmra.mxu0 %v1262
  %v1757 = vpop.f32.mrf.mxu0
  %v1758 = vadd.f32 %v1735, %v1757
  %1759 = vdwg.mxu0
  %s1760 = scalar_lea.vmem %s9, 192
  %v1761 = vld [vmem:[%s1760] sm:$0xff]
  %v1762 = vld [vmem:[%s1760 + $0x8] sm:$0xff]
  %v1763 = vld [vmem:[%s1760 + $0x10] sm:$0xff]
  %v1764 = vld [vmem:[%s1760 + $0x18] sm:$0xff]
  %s1765 = scalar_lea.vmem %s10, 6
  %v1766 = vld [vmem:[%s1765] sm:$0x1]
  %v1768 = vperm.slane %v1766, 0
  %1770 = vmatpush.msra.mxu0 0.0
  %1771 = vmatpush.msra.mxu0 0.0
  %1772 = vmatpush.msra.mxu0 0.0
  %1773 = vmatpush.msra.mxu0 0.0
  %1774 = vmatpush.msra.mxu0 0.0
  %1775 = vmatpush.msra.mxu0 0.0
  %1776 = vmatpush.msra.mxu0 0.0
  %1777 = vmatpush.msra.mxu0 0.0
  %1778 = vmatpush.msra.mxu0 0.0
  %1779 = vmatpush.msra.mxu0 0.0
  %1780 = vmatpush.msra.mxu0 0.0
  %1781 = vmatpush.msra.mxu0 0.0
  %1782 = vmatpush.msra.mxu0 %v1764
  %1783 = vmatpush.msra.mxu0 %v1763
  %1784 = vmatpush.msra.mxu0 %v1762
  %1785 = vmatpush.msra.mxu0 %v1761
  %1786 = vmatmul.f32.gmra.mxu0 %v1259
  %v1787 = vpop.f32.mrf.mxu0
  %v1788 = vadd.f32 %v1768, %v1787
  %1789 = vmatmul.f32.gmra.mxu0 %v1262
  %v1790 = vpop.f32.mrf.mxu0
  %v1791 = vadd.f32 %v1768, %v1790
  %1792 = vdwg.mxu0
  %v1794 = vsel %vm243, %v1722, 0
  %v1797 = vsel %vm243, %v1725, 0
  %v1800 = vsel %vm243, %v1755, 0
  %v1803 = vsel %vm243, %v1758, 0
  %1805 = vmatpush.xpose.msra.mxu0 0.0
  %1806 = vmatpush.xpose.msra.mxu0 0.0
  %1807 = vmatpush.xpose.msra.mxu0 0.0
  %1808 = vmatpush.xpose.msra.mxu0 0.0
  %1809 = vmatpush.xpose.msra.mxu0 0.0
  %1810 = vmatpush.xpose.msra.mxu0 0.0
  %1811 = vmatpush.xpose.msra.mxu0 0.0
  %1812 = vmatpush.xpose.msra.mxu0 0.0
  %1813 = vmatpush.xpose.msra.mxu0 0.0
  %1814 = vmatpush.xpose.msra.mxu0 0.0
  %1815 = vmatpush.xpose.msra.mxu0 0.0
  %1816 = vmatpush.xpose.msra.mxu0 0.0
  %1817 = vmatpush.xpose.msra.mxu0 0.0
  %1818 = vmatpush.xpose.msra.mxu0 0.0
  %1819 = vmatpush.xpose.msra.mxu0 %v1803
  %1820 = vmatpush.xpose.msra.mxu0 %v1800
  %1821 = vmatmul.f32.gmra.mxu0 %v1794
  %v1822 = vpop.f32.mrf.mxu0
  %v1823 = vadd.f32 0.0, %v1822
  %1824 = vmatmul.f32.gmra.mxu0 %v1797
  %v1825 = vpop.f32.mrf.mxu0
  %v1826 = vadd.f32 0.0, %v1825
  %1827 = vdwg.mxu0
  %v1828 = vmul.f32 %v1823, 0.35355338
  %v1829 = vmul.f32 %v1826, 0.35355338
  %v1830 = vadd.f32 %v1828, %v142
  %v1831 = vadd.f32 %v1829, %v143
  %v1832 = vsel %vm283, %v1830, -inf
  %1833 = vmax.xlane.f32.xlu0 %v1832
  %v1834 = vpop.xlane.xlu0 %1833
  %v1835 = vsel %vm283, %v1831, -inf
  %1836 = vmax.xlane.f32.xlu0 %v1835
  %v1837 = vpop.xlane.xlu0 %1836
  %v1838 = vsub.f32 %v1830, %v1834
  %v1839 = vsub.f32 %v1831, %v1837
  %v1840 = vmul.f32 %v1838, 1.442695
  %v1841 = vpow.pop %v1840
  %v1842 = vmul.f32 %v1839, 1.442695
  %v1843 = vpow.pop %v1842
  %v1844 = vsel %vm283, %v1841, 0.0
  %1845 = vadd.xlane.f32.xlu0 %v1844
  %v1846 = vpop.xlane.xlu0 %1845
  %v1847 = vsel %vm283, %v1843, 0.0
  %1848 = vadd.xlane.f32.xlu0 %v1847
  %v1849 = vpop.xlane.xlu0 %1848
  %v1850 = vrcp.pop %v1846
  %v1851 = vrcp.pop %v1849
  %v1852 = vmul.f32 %v1841, %v1850
  %v1853 = vmul.f32 %v1843, %v1851
  %v1855 = vsel %vm283, %v1852, 0
  %v1858 = vsel %vm283, %v1853, 0
  %1860 = vmatpush.msra.mxu0 0.0
  %1861 = vmatpush.msra.mxu0 0.0
  %1862 = vmatpush.msra.mxu0 0.0
  %1863 = vmatpush.msra.mxu0 0.0
  %1864 = vmatpush.msra.mxu0 0.0
  %1865 = vmatpush.msra.mxu0 0.0
  %1866 = vmatpush.msra.mxu0 0.0
  %1867 = vmatpush.msra.mxu0 0.0
  %1868 = vmatpush.msra.mxu0 0.0
  %1869 = vmatpush.msra.mxu0 0.0
  %1870 = vmatpush.msra.mxu0 0.0
  %1871 = vmatpush.msra.mxu0 0.0
  %1872 = vmatpush.msra.mxu0 0.0
  %1873 = vmatpush.msra.mxu0 0.0
  %1874 = vmatpush.msra.mxu0 %v1791
  %1875 = vmatpush.msra.mxu0 %v1788
  %1876 = vmatmul.f32.gmra.mxu0 %v1855
  %v1877 = vpop.f32.mrf.mxu0
  %v1878 = vadd.f32 0.0, %v1877
  %1879 = vmatmul.f32.gmra.mxu0 %v1858
  %v1880 = vpop.f32.mrf.mxu0
  %v1881 = vadd.f32 0.0, %v1880
  %1882 = vdwg.mxu0
  %s1883 = scalar_lea.vmem %s11, 48
  %v1884 = vld [vmem:[%s1883] sm:$0xff]
  %v1886 = vsel %vm243, %v1878, 0
  %v1889 = vsel %vm243, %v1881, 0
  %1891 = vmatpush.msra.mxu0 0.0
  %1892 = vmatpush.msra.mxu0 0.0
  %1893 = vmatpush.msra.mxu0 0.0
  %1894 = vmatpush.msra.mxu0 0.0
  %1895 = vmatpush.msra.mxu0 0.0
  %1896 = vmatpush.msra.mxu0 0.0
  %1897 = vmatpush.msra.mxu0 0.0
  %1898 = vmatpush.msra.mxu0 0.0
  %1899 = vmatpush.msra.mxu0 0.0
  %1900 = vmatpush.msra.mxu0 0.0
  %1901 = vmatpush.msra.mxu0 0.0
  %1902 = vmatpush.msra.mxu0 0.0
  %1903 = vmatpush.msra.mxu0 0.0
  %1904 = vmatpush.msra.mxu0 0.0
  %1905 = vmatpush.msra.mxu0 0.0
  %1906 = vmatpush.msra.mxu0 %v1884
  %1907 = vmatmul.f32.gmra.mxu0 %v1886
  %v1908 = vpop.f32.mrf.mxu0
  %v1909 = vadd.f32 0.0, %v1908
  %1910 = vmatmul.f32.gmra.mxu0 %v1889
  %v1911 = vpop.f32.mrf.mxu0
  %v1912 = vadd.f32 0.0, %v1911
  %1913 = vdwg.mxu0
  %v1914 = vadd.f32 %v1689, %v1909
  %v1915 = vadd.f32 %v1692, %v1912
  %s1916 = scalar_lea.vmem %s5, 224
  %v1917 = vld [vmem:[%s1916] sm:$0xff]
  %v1918 = vld [vmem:[%s1916 + $0x8] sm:$0xff]
  %v1919 = vld [vmem:[%s1916 + $0x10] sm:$0xff]
  %v1920 = vld [vmem:[%s1916 + $0x18] sm:$0xff]
  %s1921 = scalar_lea.vmem %s6, 7
  %v1922 = vld [vmem:[%s1921] sm:$0x1]
  %v1924 = vperm.slane %v1922, 0
  %1926 = vmatpush.msra.mxu0 0.0
  %1927 = vmatpush.msra.mxu0 0.0
  %1928 = vmatpush.msra.mxu0 0.0
  %1929 = vmatpush.msra.mxu0 0.0
  %1930 = vmatpush.msra.mxu0 0.0
  %1931 = vmatpush.msra.mxu0 0.0
  %1932 = vmatpush.msra.mxu0 0.0
  %1933 = vmatpush.msra.mxu0 0.0
  %1934 = vmatpush.msra.mxu0 0.0
  %1935 = vmatpush.msra.mxu0 0.0
  %1936 = vmatpush.msra.mxu0 0.0
  %1937 = vmatpush.msra.mxu0 0.0
  %1938 = vmatpush.msra.mxu0 %v1920
  %1939 = vmatpush.msra.mxu0 %v1919
  %1940 = vmatpush.msra.mxu0 %v1918
  %1941 = vmatpush.msra.mxu0 %v1917
  %1942 = vmatmul.f32.gmra.mxu0 %v1259
  %v1943 = vpop.f32.mrf.mxu0
  %v1944 = vadd.f32 %v1924, %v1943
  %1945 = vmatmul.f32.gmra.mxu0 %v1262
  %v1946 = vpop.f32.mrf.mxu0
  %v1947 = vadd.f32 %v1924, %v1946
  %1948 = vdwg.mxu0
  %s1949 = scalar_lea.vmem %s7, 224
  %v1950 = vld [vmem:[%s1949] sm:$0xff]
  %v1951 = vld [vmem:[%s1949 + $0x8] sm:$0xff]
  %v1952 = vld [vmem:[%s1949 + $0x10] sm:$0xff]
  %v1953 = vld [vmem:[%s1949 + $0x18] sm:$0xff]
  %s1954 = scalar_lea.vmem %s8, 7
  %v1955 = vld [vmem:[%s1954] sm:$0x1]
  %v1957 = vperm.slane %v1955, 0
  %1959 = vmatpush.msra.mxu0 0.0
  %1960 = vmatpush.msra.mxu0 0.0
  %1961 = vmatpush.msra.mxu0 0.0
  %1962 = vmatpush.msra.mxu0 0.0
  %1963 = vmatpush.msra.mxu0 0.0
  %1964 = vmatpush.msra.mxu0 0.0
  %1965 = vmatpush.msra.mxu0 0.0
  %1966 = vmatpush.msra.mxu0 0.0
  %1967 = vmatpush.msra.mxu0 0.0
  %1968 = vmatpush.msra.mxu0 0.0
  %1969 = vmatpush.msra.mxu0 0.0
  %1970 = vmatpush.msra.mxu0 0.0
  %1971 = vmatpush.msra.mxu0 %v1953
  %1972 = vmatpush.msra.mxu0 %v1952
  %1973 = vmatpush.msra.mxu0 %v1951
  %1974 = vmatpush.msra.mxu0 %v1950
  %1975 = vmatmul.f32.gmra.mxu0 %v1259
  %v1976 = vpop.f32.mrf.mxu0
  %v1977 = vadd.f32 %v1957, %v1976
  %1978 = vmatmul.f32.gmra.mxu0 %v1262
  %v1979 = vpop.f32.mrf.mxu0
  %v1980 = vadd.f32 %v1957, %v1979
  %1981 = vdwg.mxu0
  %s1982 = scalar_lea.vmem %s9, 224
  %v1983 = vld [vmem:[%s1982] sm:$0xff]
  %v1984 = vld [vmem:[%s1982 + $0x8] sm:$0xff]
  %v1985 = vld [vmem:[%s1982 + $0x10] sm:$0xff]
  %v1986 = vld [vmem:[%s1982 + $0x18] sm:$0xff]
  %s1987 = scalar_lea.vmem %s10, 7
  %v1988 = vld [vmem:[%s1987] sm:$0x1]
  %v1990 = vperm.slane %v1988, 0
  %1992 = vmatpush.msra.mxu0 0.0
  %1993 = vmatpush.msra.mxu0 0.0
  %1994 = vmatpush.msra.mxu0 0.0
  %1995 = vmatpush.msra.mxu0 0.0
  %1996 = vmatpush.msra.mxu0 0.0
  %1997 = vmatpush.msra.mxu0 0.0
  %1998 = vmatpush.msra.mxu0 0.0
  %1999 = vmatpush.msra.mxu0 0.0
  %2000 = vmatpush.msra.mxu0 0.0
  %2001 = vmatpush.msra.mxu0 0.0
  %2002 = vmatpush.msra.mxu0 0.0
  %2003 = vmatpush.msra.mxu0 0.0
  %2004 = vmatpush.msra.mxu0 %v1986
  %2005 = vmatpush.msra.mxu0 %v1985
  %2006 = vmatpush.msra.mxu0 %v1984
  %2007 = vmatpush.msra.mxu0 %v1983
  %2008 = vmatmul.f32.gmra.mxu0 %v1259
  %v2009 = vpop.f32.mrf.mxu0
  %v2010 = vadd.f32 %v1990, %v2009
  %2011 = vmatmul.f32.gmra.mxu0 %v1262
  %v2012 = vpop.f32.mrf.mxu0
  %v2013 = vadd.f32 %v1990, %v2012
  %2014 = vdwg.mxu0
  %v2016 = vsel %vm243, %v1944, 0
  %v2019 = vsel %vm243, %v1947, 0
  %v2022 = vsel %vm243, %v1977, 0
  %v2025 = vsel %vm243, %v1980, 0
  %2027 = vmatpush.xpose.msra.mxu0 0.0
  %2028 = vmatpush.xpose.msra.mxu0 0.0
  %2029 = vmatpush.xpose.msra.mxu0 0.0
  %2030 = vmatpush.xpose.msra.mxu0 0.0
  %2031 = vmatpush.xpose.msra.mxu0 0.0
  %2032 = vmatpush.xpose.msra.mxu0 0.0
  %2033 = vmatpush.xpose.msra.mxu0 0.0
  %2034 = vmatpush.xpose.msra.mxu0 0.0
  %2035 = vmatpush.xpose.msra.mxu0 0.0
  %2036 = vmatpush.xpose.msra.mxu0 0.0
  %2037 = vmatpush.xpose.msra.mxu0 0.0
  %2038 = vmatpush.xpose.msra.mxu0 0.0
  %2039 = vmatpush.xpose.msra.mxu0 0.0
  %2040 = vmatpush.xpose.msra.mxu0 0.0
  %2041 = vmatpush.xpose.msra.mxu0 %v2025
  %2042 = vmatpush.xpose.msra.mxu0 %v2022
  %2043 = vmatmul.f32.gmra.mxu0 %v2016
  %v2044 = vpop.f32.mrf.mxu0
  %v2045 = vadd.f32 0.0, %v2044
  %2046 = vmatmul.f32.gmra.mxu0 %v2019
  %v2047 = vpop.f32.mrf.mxu0
  %v2048 = vadd.f32 0.0, %v2047
  %2049 = vdwg.mxu0
  %v2050 = vmul.f32 %v2045, 0.35355338
  %v2051 = vmul.f32 %v2048, 0.35355338
  %v2052 = vadd.f32 %v2050, %v142
  %v2053 = vadd.f32 %v2051, %v143
  %v2054 = vsel %vm283, %v2052, -inf
  %2055 = vmax.xlane.f32.xlu0 %v2054
  %v2056 = vpop.xlane.xlu0 %2055
  %v2057 = vsel %vm283, %v2053, -inf
  %2058 = vmax.xlane.f32.xlu0 %v2057
  %v2059 = vpop.xlane.xlu0 %2058
  %v2060 = vsub.f32 %v2052, %v2056
  %v2061 = vsub.f32 %v2053, %v2059
  %v2062 = vmul.f32 %v2060, 1.442695
  %v2063 = vpow.pop %v2062
  %v2064 = vmul.f32 %v2061, 1.442695
  %v2065 = vpow.pop %v2064
  %v2066 = vsel %vm283, %v2063, 0.0
  %2067 = vadd.xlane.f32.xlu0 %v2066
  %v2068 = vpop.xlane.xlu0 %2067
  %v2069 = vsel %vm283, %v2065, 0.0
  %2070 = vadd.xlane.f32.xlu0 %v2069
  %v2071 = vpop.xlane.xlu0 %2070
  %v2072 = vrcp.pop %v2068
  %v2073 = vrcp.pop %v2071
  %v2074 = vmul.f32 %v2063, %v2072
  %v2075 = vmul.f32 %v2065, %v2073
  %v2077 = vsel %vm283, %v2074, 0
  %v2080 = vsel %vm283, %v2075, 0
  %2082 = vmatpush.msra.mxu0 0.0
  %2083 = vmatpush.msra.mxu0 0.0
  %2084 = vmatpush.msra.mxu0 0.0
  %2085 = vmatpush.msra.mxu0 0.0
  %2086 = vmatpush.msra.mxu0 0.0
  %2087 = vmatpush.msra.mxu0 0.0
  %2088 = vmatpush.msra.mxu0 0.0
  %2089 = vmatpush.msra.mxu0 0.0
  %2090 = vmatpush.msra.mxu0 0.0
  %2091 = vmatpush.msra.mxu0 0.0
  %2092 = vmatpush.msra.mxu0 0.0
  %2093 = vmatpush.msra.mxu0 0.0
  %2094 = vmatpush.msra.mxu0 0.0
  %2095 = vmatpush.msra.mxu0 0.0
  %2096 = vmatpush.msra.mxu0 %v2013
  %2097 = vmatpush.msra.mxu0 %v2010
  %2098 = vmatmul.f32.gmra.mxu0 %v2077
  %v2099 = vpop.f32.mrf.mxu0
  %v2100 = vadd.f32 0.0, %v2099
  %2101 = vmatmul.f32.gmra.mxu0 %v2080
  %v2102 = vpop.f32.mrf.mxu0
  %v2103 = vadd.f32 0.0, %v2102
  %2104 = vdwg.mxu0
  %s2105 = scalar_lea.vmem %s11, 56
  %v2106 = vld [vmem:[%s2105] sm:$0xff]
  %v2108 = vsel %vm243, %v2100, 0
  %v2111 = vsel %vm243, %v2103, 0
  %2113 = vmatpush.msra.mxu0 0.0
  %2114 = vmatpush.msra.mxu0 0.0
  %2115 = vmatpush.msra.mxu0 0.0
  %2116 = vmatpush.msra.mxu0 0.0
  %2117 = vmatpush.msra.mxu0 0.0
  %2118 = vmatpush.msra.mxu0 0.0
  %2119 = vmatpush.msra.mxu0 0.0
  %2120 = vmatpush.msra.mxu0 0.0
  %2121 = vmatpush.msra.mxu0 0.0
  %2122 = vmatpush.msra.mxu0 0.0
  %2123 = vmatpush.msra.mxu0 0.0
  %2124 = vmatpush.msra.mxu0 0.0
  %2125 = vmatpush.msra.mxu0 0.0
  %2126 = vmatpush.msra.mxu0 0.0
  %2127 = vmatpush.msra.mxu0 0.0
  %2128 = vmatpush.msra.mxu0 %v2106
  %2129 = vmatmul.f32.gmra.mxu0 %v2108
  %v2130 = vpop.f32.mrf.mxu0
  %v2131 = vadd.f32 0.0, %v2130
  %2132 = vmatmul.f32.gmra.mxu0 %v2111
  %v2133 = vpop.f32.mrf.mxu0
  %v2134 = vadd.f32 0.0, %v2133
  %2135 = vdwg.mxu0
  %v2136 = vadd.f32 %v1914, %v2131
  %v2137 = vadd.f32 %v1915, %v2134
  %s2138 = scalar_lea.vmem %s12, 1
  %v2139 = vld [vmem:[%s2138] sm:$0x1]
  %v2141 = vperm.slane %v2139, 0
  %v2143 = vadd.f32 %v2136, %v2141
  %v2144 = vadd.f32 %v2137, %v2141
  %v2145 = vadd.f32 %v2143, %v1246
  %v2146 = vadd.f32 %v2144, %v1247
  %s2147 = scalar_lea.vmem %s13, 1
  %v2148 = vld [vmem:[%s2147] sm:$0x1]
  %s2149 = scalar_lea.vmem %s14, 1
  %v2150 = vld [vmem:[%s2149] sm:$0x1]
  %v2151 = vsel %vm80, %v2145, 0.0
  %2152 = vadd.xlane.f32.xlu0 %v2151
  %v2153 = vpop.xlane.xlu0 %2152
  %v2154 = vsel %vm80, %v2146, 0.0
  %2155 = vadd.xlane.f32.xlu0 %v2154
  %v2156 = vpop.xlane.xlu0 %2155
  %v2157 = vmul.f32 %v2153, %v93
  %v2158 = vmul.f32 %v2156, %v93
  %v2159 = vsub.f32 %v2145, %v2157
  %v2160 = vsub.f32 %v2146, %v2158
  %v2161 = vmul.f32 %v2159, %v2159
  %v2162 = vmul.f32 %v2160, %v2160
  %v2163 = vsel %vm80, %v2161, 0.0
  %2164 = vadd.xlane.f32.xlu0 %v2163
  %v2165 = vpop.xlane.xlu0 %2164
  %v2166 = vsel %vm80, %v2162, 0.0
  %2167 = vadd.xlane.f32.xlu0 %v2166
  %v2168 = vpop.xlane.xlu0 %2167
  %v2169 = vmul.f32 %v2165, %v93
  %v2170 = vmul.f32 %v2168, %v93
  %v2171 = vadd.f32 %v2169, 1e-05
  %v2172 = vadd.f32 %v2170, 1e-05
  %v2173 = vrsqrt.pop %v2171
  %v2174 = vmul.f32 %v2173, %v2171
  %v2175 = vmul.f32 %v2174, %v2173
  %v2176 = vmul.f32 0.5, %v2175
  %v2177 = vsub.f32 1.5, %v2176
  %v2178 = vmul.f32 %v2173, %v2177
  %vm2179 = vweird.f32 %v2171
  %vm2180 = vweird.f32 %v2173
  %vm2181 = vmor %vm2179, %vm2180
  %v2182 = vsel %vm2181, %v2173, %v2178
  %v2183 = vrsqrt.pop %v2172
  %v2184 = vmul.f32 %v2183, %v2172
  %v2185 = vmul.f32 %v2184, %v2183
  %v2186 = vmul.f32 0.5, %v2185
  %v2187 = vsub.f32 1.5, %v2186
  %v2188 = vmul.f32 %v2183, %v2187
  %vm2189 = vweird.f32 %v2172
  %vm2190 = vweird.f32 %v2183
  %vm2191 = vmor %vm2189, %vm2190
  %v2192 = vsel %vm2191, %v2183, %v2188
  %v2193 = vmul.f32 %v2159, %v2182
  %v2194 = vmul.f32 %v2160, %v2192
  %v2196 = vperm.slane %v2148, 0
  %v2198 = vmul.f32 %v2193, %v2196
  %v2199 = vmul.f32 %v2194, %v2196
  %v2201 = vperm.slane %v2150, 0
  %v2203 = vadd.f32 %v2198, %v2201
  %v2204 = vadd.f32 %v2199, %v2201
  %s2205 = scalar_lea.vmem %s15, 32
  %v2206 = vld [vmem:[%s2205] sm:$0xff]
  %v2207 = vld [vmem:[%s2205 + $0x8] sm:$0xff]
  %v2208 = vld [vmem:[%s2205 + $0x10] sm:$0xff]
  %v2209 = vld [vmem:[%s2205 + $0x18] sm:$0xff]
  %s2210 = scalar_lea.vmem %s16, 1
  %v2211 = vld [vmem:[%s2210] sm:$0x1]
  %v2213 = vperm.slane %v2211, 0
  %v2216 = vsel %vm80, %v2203, 0
  %v2219 = vsel %vm80, %v2204, 0
  %2221 = vmatpush.msra.mxu0 0.0
  %2222 = vmatpush.msra.mxu0 0.0
  %2223 = vmatpush.msra.mxu0 0.0
  %2224 = vmatpush.msra.mxu0 0.0
  %2225 = vmatpush.msra.mxu0 0.0
  %2226 = vmatpush.msra.mxu0 0.0
  %2227 = vmatpush.msra.mxu0 0.0
  %2228 = vmatpush.msra.mxu0 0.0
  %2229 = vmatpush.msra.mxu0 0.0
  %2230 = vmatpush.msra.mxu0 0.0
  %2231 = vmatpush.msra.mxu0 0.0
  %2232 = vmatpush.msra.mxu0 0.0
  %2233 = vmatpush.msra.mxu0 %v2209
  %2234 = vmatpush.msra.mxu0 %v2208
  %2235 = vmatpush.msra.mxu0 %v2207
  %2236 = vmatpush.msra.mxu0 %v2206
  %2237 = vmatmul.f32.gmra.mxu0 %v2216
  %v2238 = vpop.f32.mrf.mxu0
  %v2239 = vadd.f32 %v2213, %v2238
  %2240 = vmatmul.f32.gmra.mxu0 %v2219
  %v2241 = vpop.f32.mrf.mxu0
  %v2242 = vadd.f32 %v2213, %v2241
  %2243 = vdwg.mxu0
  %v2244 = vmul.f32 %v2239, %v2239
  %v2245 = vmul.f32 %v2242, %v2242
  %v2246 = vmul.f32 %v2239, %v2244
  %v2247 = vmul.f32 %v2242, %v2245
  %v2248 = vmul.f32 %v2246, 0.044715
  %v2249 = vmul.f32 %v2247, 0.044715
  %v2250 = vadd.f32 %v2239, %v2248
  %v2251 = vadd.f32 %v2242, %v2249
  %v2252 = vmul.f32 %v2250, 0.7978846
  %v2253 = vmul.f32 %v2251, 0.7978846
  %v2254 = vtanh.pop %v2252
  %v2255 = vtanh.pop %v2253
  %v2256 = vadd.f32 %v2254, 1.0
  %v2257 = vadd.f32 %v2255, 1.0
  %v2258 = vmul.f32 %v2256, 0.5
  %v2259 = vmul.f32 %v2257, 0.5
  %v2260 = vmul.f32 %v2239, %v2258
  %v2261 = vmul.f32 %v2242, %v2259
  %s2262 = scalar_lea.vmem %s17, 64
  %v2263 = vld [vmem:[%s2262] sm:$0xff]
  %v2264 = vld [vmem:[%s2262 + $0x8] sm:$0xff]
  %v2265 = vld [vmem:[%s2262 + $0x10] sm:$0xff]
  %v2266 = vld [vmem:[%s2262 + $0x18] sm:$0xff]
  %v2267 = vld [vmem:[%s2262 + $0x20] sm:$0xff]
  %v2268 = vld [vmem:[%s2262 + $0x28] sm:$0xff]
  %v2269 = vld [vmem:[%s2262 + $0x30] sm:$0xff]
  %v2270 = vld [vmem:[%s2262 + $0x38] sm:$0xff]
  %s2271 = scalar_lea.vmem %s18, 1
  %v2272 = vld [vmem:[%s2271] sm:$0x1]
  %v2274 = vperm.slane %v2272, 0
  %v2277 = vsel %vm1160, %v2260, 0
  %v2280 = vsel %vm1160, %v2261, 0
  %2282 = vmatpush.msra.mxu0 0.0
  %2283 = vmatpush.msra.mxu0 0.0
  %2284 = vmatpush.msra.mxu0 0.0
  %2285 = vmatpush.msra.mxu0 0.0
  %2286 = vmatpush.msra.mxu0 0.0
  %2287 = vmatpush.msra.mxu0 0.0
  %2288 = vmatpush.msra.mxu0 0.0
  %2289 = vmatpush.msra.mxu0 0.0
  %2290 = vmatpush.msra.mxu0 %v2270
  %2291 = vmatpush.msra.mxu0 %v2269
  %2292 = vmatpush.msra.mxu0 %v2268
  %2293 = vmatpush.msra.mxu0 %v2267
  %2294 = vmatpush.msra.mxu0 %v2266
  %2295 = vmatpush.msra.mxu0 %v2265
  %2296 = vmatpush.msra.mxu0 %v2264
  %2297 = vmatpush.msra.mxu0 %v2263
  %2298 = vmatmul.f32.gmra.mxu0 %v2277
  %v2299 = vpop.f32.mrf.mxu0
  %v2300 = vadd.f32 %v2274, %v2299
  %2301 = vmatmul.f32.gmra.mxu0 %v2280
  %v2302 = vpop.f32.mrf.mxu0
  %v2303 = vadd.f32 %v2274, %v2302
  %2304 = vdwg.mxu0
  %v2305 = vadd.f32 %v2300, %v2203
  %v2306 = vadd.f32 %v2303, %v2204
  %s2307 = scalar_lea.vmem %s19, 1
  %v2308 = vld [vmem:[%s2307] sm:$0x1]
  %s2309 = scalar_lea.vmem %s20, 1
  %v2310 = vld [vmem:[%s2309] sm:$0x1]
  %v2311 = vsel %vm80, %v2305, 0.0
  %2312 = vadd.xlane.f32.xlu0 %v2311
  %v2313 = vpop.xlane.xlu0 %2312
  %v2314 = vsel %vm80, %v2306, 0.0
  %2315 = vadd.xlane.f32.xlu0 %v2314
  %v2316 = vpop.xlane.xlu0 %2315
  %v2317 = vmul.f32 %v2313, %v93
  %v2318 = vmul.f32 %v2316, %v93
  %v2319 = vsub.f32 %v2305, %v2317
  %v2320 = vsub.f32 %v2306, %v2318
  %v2321 = vmul.f32 %v2319, %v2319
  %v2322 = vmul.f32 %v2320, %v2320
  %v2323 = vsel %vm80, %v2321, 0.0
  %2324 = vadd.xlane.f32.xlu0 %v2323
  %v2325 = vpop.xlane.xlu0 %2324
  %v2326 = vsel %vm80, %v2322, 0.0
  %2327 = vadd.xlane.f32.xlu0 %v2326
  %v2328 = vpop.xlane.xlu0 %2327
  %v2329 = vmul.f32 %v2325, %v93
  %v2330 = vmul.f32 %v2328, %v93
  %v2331 = vadd.f32 %v2329, 1e-05
  %v2332 = vadd.f32 %v2330, 1e-05
  %v2333 = vrsqrt.pop %v2331
  %v2334 = vmul.f32 %v2333, %v2331
  %v2335 = vmul.f32 %v2334, %v2333
  %v2336 = vmul.f32 0.5, %v2335
  %v2337 = vsub.f32 1.5, %v2336
  %v2338 = vmul.f32 %v2333, %v2337
  %vm2339 = vweird.f32 %v2331
  %vm2340 = vweird.f32 %v2333
  %vm2341 = vmor %vm2339, %vm2340
  %v2342 = vsel %vm2341, %v2333, %v2338
  %v2343 = vrsqrt.pop %v2332
  %v2344 = vmul.f32 %v2343, %v2332
  %v2345 = vmul.f32 %v2344, %v2343
  %v2346 = vmul.f32 0.5, %v2345
  %v2347 = vsub.f32 1.5, %v2346
  %v2348 = vmul.f32 %v2343, %v2347
  %vm2349 = vweird.f32 %v2332
  %vm2350 = vweird.f32 %v2343
  %vm2351 = vmor %vm2349, %vm2350
  %v2352 = vsel %vm2351, %v2343, %v2348
  %v2353 = vmul.f32 %v2319, %v2342
  %v2354 = vmul.f32 %v2320, %v2352
  %v2356 = vperm.slane %v2308, 0
  %v2358 = vmul.f32 %v2353, %v2356
  %v2359 = vmul.f32 %v2354, %v2356
  %v2361 = vperm.slane %v2310, 0
  %v2363 = vadd.f32 %v2358, %v2361
  %v2364 = vadd.f32 %v2359, %v2361
  %v2365 = vld [vmem:[%s2] sm:$0x3]
  %v2367 = vsel %vm283, %v2365, 0
  %2369 = vmatpush.msra.mxu0 0.0
  %2370 = vmatpush.msra.mxu0 0.0
  %2371 = vmatpush.msra.mxu0 0.0
  %2372 = vmatpush.msra.mxu0 0.0
  %2373 = vmatpush.msra.mxu0 0.0
  %2374 = vmatpush.msra.mxu0 0.0
  %2375 = vmatpush.msra.mxu0 0.0
  %2376 = vmatpush.msra.mxu0 0.0
  %2377 = vmatpush.msra.mxu0 0.0
  %2378 = vmatpush.msra.mxu0 0.0
  %2379 = vmatpush.msra.mxu0 0.0
  %2380 = vmatpush.msra.mxu0 0.0
  %2381 = vmatpush.msra.mxu0 0.0
  %2382 = vmatpush.msra.mxu0 0.0
  %2383 = vmatpush.msra.mxu0 %v2364
  %2384 = vmatpush.msra.mxu0 %v2363
  %2385 = vmatmul.f32.gmra.mxu0 %v2367
  %v2386 = vpop.f32.mrf.mxu0
  %v2387 = vadd.f32 0.0, %v2386
  %2388 = vdwg.mxu0
  %v2389 = vld [vmem:[%s21] sm:$0xff]
  %v2390 = vld [vmem:[%s21 + $0x8] sm:$0xff]
  %v2391 = vld [vmem:[%s21 + $0x10] sm:$0xff]
  %v2392 = vld [vmem:[%s21 + $0x18] sm:$0xff]
  %v2393 = vld [vmem:[#allocation2] sm:$0x1]
  %v2395 = vperm.slane %v2393, 0
  %v2398 = vsel %vm80, %v2387, 0
  %2400 = vmatpush.msra.mxu0 0.0
  %2401 = vmatpush.msra.mxu0 0.0
  %2402 = vmatpush.msra.mxu0 0.0
  %2403 = vmatpush.msra.mxu0 0.0
  %2404 = vmatpush.msra.mxu0 0.0
  %2405 = vmatpush.msra.mxu0 0.0
  %2406 = vmatpush.msra.mxu0 0.0
  %2407 = vmatpush.msra.mxu0 0.0
  %2408 = vmatpush.msra.mxu0 0.0
  %2409 = vmatpush.msra.mxu0 0.0
  %2410 = vmatpush.msra.mxu0 0.0
  %2411 = vmatpush.msra.mxu0 0.0
  %2412 = vmatpush.msra.mxu0 %v2392
  %2413 = vmatpush.msra.mxu0 %v2391
  %2414 = vmatpush.msra.mxu0 %v2390
  %2415 = vmatpush.msra.mxu0 %v2389
  %2416 = vmatmul.f32.gmra.mxu0 %v2398
  %v2417 = vpop.f32.mrf.mxu0
  %v2418 = vadd.f32 %v2395, %v2417
  %2419 = vdwg.mxu0
  %vm2420 = vcmask 1024
  %2421 = vst.msk [vmem:[%s23] sm:$0x3] %vm2420, %v2418
  // Predicated region
  $region94: #{roberta_forward.1} parent=0 // pred_check
    _
  $region95: #{roberta_forward.1} parent=0 // pred_check_branch
    %2423 = sbr.rel (0) target = $region97
  $region96: #{roberta_forward.1} parent=0 // pred_region
    _
  $region97: #{roberta_forward.1} parent=0 // pred_fallthru
    _
  // Predicated region
  $region98: #{roberta_forward.1} parent=0 // pred_check
    _
  $region99: #{roberta_forward.1} parent=0 // pred_check_branch
    %2425 = sbr.rel (0) target = $region101
  $region100: #{roberta_forward.1} parent=0 // pred_region
    _
  $region101: #{roberta_forward.1} parent=0 // pred_fallthru
    _

</llo_original>
